<compile_context>
chip_gen: v7x
topology: tpu7x:2x2x1
jax: 0.10.0
libtpu: 0.0.40
codegen_flags: <defaults>
</compile_context>

<pallas_src>
import functools

import jax
import jax.numpy as jnp
from jax import lax
from jax.experimental import pallas as pl
from jax.experimental.pallas import tpu as pltpu

EPS = 1e-5
LANE = 128
VMEM_LIMIT = 32 * 1024 * 1024  # above v5e's 16 MiB default scoped limit, <= physical on all chips


def _round_up(n, m):
    return ((n + m - 1) // m) * m


# --------------------------------------------------------------------------------------
# Kernel A: stand-in backbone (3x3 conv pad=1 -> ReLU -> global average pool)
# grid = (num_sample_tiles,) over the 2B stacked view-samples, "parallel".
# --------------------------------------------------------------------------------------
def _backbone_kernel(x_ref, convw_ref, feat_ref, *, H, W, chunk_h):
    # x_ref:    (tile_n, H+2, W+2, C)  bf16  padded NHWC image tile
    # convw_ref:(9, C, prev_pad)       bf16  conv weight, k = kh*3 + kw
    # feat_ref: (tile_n, 1, prev_pad)  f32   pooled features
    tile_n = x_ref.shape[0]
    C = x_ref.shape[3]
    prev_pad = convw_ref.shape[2]
    n_chunks = H // chunk_h

    convw = convw_ref[...]  # hoist: tiny, loaded once

    def row_chunk(c, feat_sum):
        h0 = c * chunk_h
        acc = jnp.zeros((tile_n * chunk_h * W, prev_pad), jnp.float32)
        # 3x3 conv as 9 accumulated (M, C) x (C, prev_pad) matmuls over shifted views.
        for k in range(9):
            di, dj = k // 3, k % 3
            sl = x_ref[:, pl.ds(h0 + di, chunk_h), pl.ds(dj, W), :]     # (tile_n, chunk_h, W, C)
            acc = acc + jnp.dot(sl.reshape(tile_n * chunk_h * W, C),
                                convw[k],
                                preferred_element_type=jnp.float32)
        acts = jnp.maximum(acc, 0.0).reshape(tile_n, chunk_h * W, prev_pad)
        return feat_sum + jnp.sum(acts, axis=1)

    feat_sum = lax.fori_loop(0, n_chunks, row_chunk,
                             jnp.zeros((tile_n, prev_pad), jnp.float32))
    feat_ref[...] = (feat_sum * (1.0 / (H * W)))[:, None, :].astype(feat_ref.dtype)


# --------------------------------------------------------------------------------------
# Kernel B: projection MLP (encoder.fc) + predictor, grid = (2,) over views ("parallel").
# Full per-view batch is resident so BN uses exact per-view batch statistics.
# --------------------------------------------------------------------------------------
def _head_kernel(feat_ref,
                 w1_ref, g1_ref, b1_ref,
                 w2_ref, g2_ref, b2_ref,
                 w3_ref, b3_ref,
                 wp1_ref, gp1_ref, bp1_ref,
                 wp2_ref, bp2_ref,
                 p_ref, z_ref):

    def bn_train(x, gamma, beta):
        # one-pass batch stats: var = E[x^2] - mu^2 (biased, matches torch training mode)
        mu = jnp.mean(x, axis=0, keepdims=True)
        var = jnp.maximum(jnp.mean(x * x, axis=0, keepdims=True) - mu * mu, 0.0)
        return (x - mu) * lax.rsqrt(var + EPS) * gamma + beta

    def bn_train_noaffine(x):
        mu = jnp.mean(x, axis=0, keepdims=True)
        var = jnp.maximum(jnp.mean(x * x, axis=0, keepdims=True) - mu * mu, 0.0)
        return (x - mu) * lax.rsqrt(var + EPS)

    feat = feat_ref[0]  # (B, prev_pad) f32

    # ---- encoder.fc projection head ----
    h = jnp.dot(feat, w1_ref[...], preferred_element_type=jnp.float32)
    h = jnp.maximum(bn_train(h, g1_ref[...], b1_ref[...]), 0.0)
    h = jnp.dot(h, w2_ref[...], preferred_element_type=jnp.float32)
    h = jnp.maximum(bn_train(h, g2_ref[...], b2_ref[...]), 0.0)
    z = jnp.dot(h, w3_ref[...], preferred_element_type=jnp.float32) + b3_ref[...]
    z = bn_train_noaffine(z)                                   # (B, dim_pad)

    # ---- predictor ----
    hp = jnp.dot(z, wp1_ref[...], preferred_element_type=jnp.float32)
    hp = jnp.maximum(bn_train(hp, gp1_ref[...], bp1_ref[...]), 0.0)
    p = jnp.dot(hp, wp2_ref[...], preferred_element_type=jnp.float32) + bp2_ref[...]

    p_ref[0] = p.astype(p_ref.dtype)
    z_ref[0] = z.astype(z_ref.dtype)


# --------------------------------------------------------------------------------------
# Wrappers
# --------------------------------------------------------------------------------------
def _pad_image_nhwc(x):
    """(B, C, H, W) f32 NCHW -> (B, H+2, W+2, C) bf16 zero-padded NHWC (bf16 halves HBM traffic)."""
    x = jnp.transpose(x, (0, 2, 3, 1))
    x = jnp.pad(x, ((0, 0), (1, 1), (1, 1), (0, 0)))
    return x.astype(jnp.bfloat16)


def _backbone(x_pad_all, conv_w, *, H, W, tile_n=1, chunk_h=None):
    """x_pad_all: (2B, H+2, W+2, C) bf16 -> feat (2B, prev_pad) f32."""
    N, _, _, C = x_pad_all.shape
    prev_pad = conv_w.shape[2]
    chunk_h = chunk_h if chunk_h is not None else min(H, 8)
    assert H % chunk_h == 0 and N % tile_n == 0

    kernel = functools.partial(_backbone_kernel, H=H, W=W, chunk_h=chunk_h)
    flops = 2 * N * H * W * 9 * C * prev_pad
    bytes_accessed = int(x_pad_all.size * 2 + conv_w.size * 2 + N * prev_pad * 4)

    feat = pl.pallas_call(
        kernel,
        out_shape=jax.ShapeDtypeStruct((N, 1, prev_pad), jnp.float32),
        grid_spec=pltpu.PrefetchScalarGridSpec(
            num_scalar_prefetch=0,
            grid=(N // tile_n,),
            in_specs=[
                pl.BlockSpec((tile_n, H + 2, W + 2, C), lambda n: (n, 0, 0, 0)),
                pl.BlockSpec((9, C, prev_pad), lambda n: (0, 0, 0)),   # resident across steps
            ],
            out_specs=pl.BlockSpec((tile_n, 1, prev_pad), lambda n: (n, 0, 0)),
        ),
        compiler_params=pltpu.CompilerParams(
            dimension_semantics=("parallel",),
            vmem_limit_bytes=VMEM_LIMIT,   # TODO(synk): re-derive tile_n/chunk_h vs 64 MiB on v7x for big images
        ),
        cost_estimate=pl.CostEstimate(flops=flops, transcendentals=0,
                                      bytes_accessed=bytes_accessed),
    )(x_pad_all, conv_w)
    return feat.reshape(N, prev_pad)


def _heads(feat_views, params, B):
    """feat_views: (2, B, prev_pad) f32 -> (p, z) each (2, B, dim_pad) f32."""
    prev_pad = feat_views.shape[2]
    dim_pad = params["w3"].shape[1]
    pred_pad = params["wp1"].shape[1]

    def resident(shape):
        return pl.BlockSpec(shape, lambda v, _s=shape: (0,) * len(_s))

    in_specs = [
        pl.BlockSpec((1, B, prev_pad), lambda v: (v, 0, 0)),
        resident((prev_pad, prev_pad)), resident((1, prev_pad)), resident((1, prev_pad)),
        resident((prev_pad, prev_pad)), resident((1, prev_pad)), resident((1, prev_pad)),
        resident((prev_pad, dim_pad)), resident((1, dim_pad)),
        resident((dim_pad, pred_pad)), resident((1, pred_pad)), resident((1, pred_pad)),
        resident((pred_pad, dim_pad)), resident((1, dim_pad)),
    ]
    args = (feat_views,
            params["w1"], params["g1"], params["b1"],
            params["w2"], params["g2"], params["b2"],
            params["w3"], params["b3"],
            params["wp1"], params["gp1"], params["bp1"],
            params["wp2"], params["bp2"])

    flops = 2 * 2 * B * (prev_pad * prev_pad * 2 + prev_pad * dim_pad
                         + dim_pad * pred_pad + pred_pad * dim_pad)
    bytes_accessed = int(sum(a.size * 4 for a in args[1:]) + feat_views.size * 4
                         + 2 * 2 * B * dim_pad * 4)
    transcendentals = 2 * (3 * prev_pad + dim_pad + pred_pad)   # rsqrt per BN feature per view

    p, z = pl.pallas_call(
        _head_kernel,
        out_shape=(jax.ShapeDtypeStruct((2, B, dim_pad), jnp.float32),
                   jax.ShapeDtypeStruct((2, B, dim_pad), jnp.float32)),
        grid_spec=pltpu.PrefetchScalarGridSpec(
            num_scalar_prefetch=0,
            grid=(2,),
            in_specs=in_specs,
            out_specs=(pl.BlockSpec((1, B, dim_pad), lambda v: (v, 0, 0)),
                       pl.BlockSpec((1, B, dim_pad), lambda v: (v, 0, 0))),
        ),
        compiler_params=pltpu.CompilerParams(
            dimension_semantics=("parallel",),
            vmem_limit_bytes=VMEM_LIMIT,
        ),
        cost_estimate=pl.CostEstimate(flops=flops, transcendentals=transcendentals,
                                      bytes_accessed=bytes_accessed),
    )(*args)
    return p, z


@functools.partial(jax.jit, static_argnames=("dim",))
def simsiam_forward(x1, x2, params, dim):
    """Returns (p1, p2, z1, z2) exactly as SimSiam.forward(x1, x2) default branch."""
    B, _, H, W = x1.shape
    # Stack the two views along the sample axis for the (per-sample) backbone.
    x_pad = jnp.concatenate([_pad_image_nhwc(x1), _pad_image_nhwc(x2)], axis=0)   # (2B, H+2, W+2, C)
    feat = _backbone(x_pad, params["conv_w"], H=H, W=W)                           # (2B, prev_pad)
    feat_views = feat.reshape(2, B, -1)

    p, z = _heads(feat_views, params, B)            # (2, B, dim_pad) each
    # Slice off the zero-padded lanes (padded weight rows/cols are exactly zero -> values unchanged).
    p1, p2 = p[0, :, :dim], p[1, :, :dim]
    z1, z2 = z[0, :, :dim], z[1, :, :dim]
    # z1/z2 correspond to z1.detach(), z2.detach()
    return p1, p2, lax.stop_gradient(z1), lax.stop_gradient(z2)


def init_params(key, c_in, prev_dim, dim, pred_dim):
    """All weights zero-padded to 128-lane multiples; padding never changes the math."""
    prev_p = _round_up(prev_dim, LANE)
    dim_p = _round_up(dim, LANE)
    pred_p = _round_up(pred_dim, LANE)

    ks = jax.random.split(key, 8)
    f32 = jnp.float32

    def pad2(w, r, c):
        return jnp.pad(w, ((0, r - w.shape[0]), (0, c - w.shape[1])))

    # conv weight: torch layout (prev_dim, C, 3, 3) -> (9, C, prev_pad) with k = kh*3 + kw,
    # matching the 9 shifted-slice matmuls in the kernel.
    conv_w_t = jax.random.normal(ks[0], (prev_dim, c_in, 3, 3), f32) * 0.1
    conv_w = jnp.transpose(conv_w_t, (2, 3, 1, 0)).reshape(9, c_in, prev_dim)
    conv_w = jnp.pad(conv_w, ((0, 0), (0, 0), (0, prev_p - prev_dim))).astype(jnp.bfloat16)

    def lin(k, n_in, n_out, p_in, p_out, scale=0.05):
        return pad2(jax.random.normal(k, (n_in, n_out), f32) * scale, p_in, p_out)

    ones = lambda n, p: jnp.pad(jnp.ones((1, n), f32), ((0, 0), (0, p - n)))
    zeros = lambda p: jnp.zeros((1, p), f32)

    return {
        "conv_w": conv_w,
        # encoder.fc
        "w1": lin(ks[1], prev_dim, prev_dim, prev_p, prev_p), "g1": ones(prev_dim, prev_p), "b1": zeros(prev_p),
        "w2": lin(ks[2], prev_dim, prev_dim, prev_p, prev_p), "g2": ones(prev_dim, prev_p), "b2": zeros(prev_p),
        "w3": lin(ks[3], prev_dim, dim, prev_p, dim_p),
        "b3": pad2(jax.random.normal(ks[4], (1, dim), f32) * 0.01, 1, dim_p),
        # predictor
        "wp1": lin(ks[5], dim, pred_dim, dim_p, pred_p), "gp1": ones(pred_dim, pred_p), "bp1": zeros(pred_p),
        "wp2": lin(ks[6], pred_dim, dim, pred_p, dim_p),
        "bp2": pad2(jax.random.normal(ks[7], (1, dim), f32) * 0.01, 1, dim_p),
    }


if __name__ == "__main__":
    B, C, H, W = 2, 3, 16, 16            # small image views
    PREV_DIM, DIM, PRED_DIM = 64, 128, 32

    key = jax.random.PRNGKey(0)
    k_x1, k_x2, k_p = jax.random.split(key, 3)
    x1 = jax.random.normal(k_x1, (B, C, H, W), jnp.float32)
    x2 = jax.random.normal(k_x2, (B, C, H, W), jnp.float32)
    params = init_params(k_p, C, PREV_DIM, DIM, PRED_DIM)

    p1, p2, z1, z2 = simsiam_forward(x1, x2, params, DIM)
    jax.block_until_ready((p1, p2, z1, z2))

    assert p1.shape == (B, DIM) and p2.shape == (B, DIM)
    assert z1.shape == (B, DIM) and z2.shape == (B, DIM)
    assert all(bool(jnp.all(jnp.isfinite(t))) for t in (p1, p2, z1, z2))
    print("KERNEL_OK")
</pallas_src>

<mosaic_0001>
module attributes {stable_mosaic.version = 11 : i64} {
  func.func @_backbone_kernel(%arg0: i32, %arg1: memref<1x18x18x3xbf16, #tpu.memory_space<vmem>>, %arg2: memref<9x3x128xbf16, #tpu.memory_space<vmem>>, %arg3: memref<1x1x128xf32, #tpu.memory_space<vmem>>) attributes {dimension_semantics = [#tpu.dimension_semantics<parallel>], iteration_bounds = array<i64: 4>, scalar_prefetch = 0 : i64, scratch_operands = 0 : i64, tpu.core_type = #tpu.core_type<tc>, window_params = [{transform_indices = @transform_0, window_bounds = array<i64: 1, 18, 18, 3>}, {pipeline_mode = #tpu.pipeline_mode<synchronous>, transform_indices = @transform_1, window_bounds = array<i64: 9, 3, 128>}, {transform_indices = @transform_2, window_bounds = array<i64: 1, 1, 128>}]} {
    %c0 = arith.constant 0 : index
    %c0_0 = arith.constant 0 : index
    %c0_1 = arith.constant 0 : index
    %0 = vector.load %arg2[%c0, %c0_0, %c0_1] : memref<9x3x128xbf16, #tpu.memory_space<vmem>>, vector<9x3x128xbf16>
    %cst = arith.constant 0.000000e+00 : f32
    %1 = vector.broadcast %cst : f32 to vector<1x128xf32>
    %c0_i32 = arith.constant 0 : i32
    %c2_i32 = arith.constant 2 : i32
    %2 = arith.addi %c0_i32, %c2_i32 : i32
    %c1_i32 = arith.constant 1 : i32
    %3 = scf.for %arg4 = %c0_i32 to %2 step %c1_i32 iter_args(%arg5 = %1) -> (vector<1x128xf32>)  : i32 {
      %c8_i32 = arith.constant 8 : i32
      %8 = arith.muli %arg4, %c8_i32 : i32
      %cst_7 = arith.constant 0.000000e+00 : f32
      %9 = vector.broadcast %cst_7 : f32 to vector<128x128xf32>
      %c0_i32_8 = arith.constant 0 : i32
      %10 = arith.addi %8, %c0_i32_8 : i32
      %c0_9 = arith.constant 0 : index
      %11 = arith.index_cast %10 : i32 to index
      %c0_10 = arith.constant 0 : index
      %c0_11 = arith.constant 0 : index
      %12 = vector.load %arg1[%c0_9, %11, %c0_10, %c0_11] : memref<1x18x18x3xbf16, #tpu.memory_space<vmem>>, vector<1x8x16x3xbf16>
      %13 = vector.shape_cast %12 : vector<1x8x16x3xbf16> to vector<128x3xbf16>
      %14 = vector.extract_strided_slice %0 {offsets = [0, 0, 0], sizes = [1, 3, 128], strides = [1, 1, 1]} : vector<9x3x128xbf16> to vector<1x3x128xbf16>
      %15 = vector.shape_cast %14 : vector<1x3x128xbf16> to vector<3x128xbf16>
      %cst_12 = arith.constant dense<0.000000e+00> : vector<128x128xf32>
      %16 = tpu.matmul %13, %15, %cst_12 {dimension_numbers = #tpu.dot_dimension_numbers<[1], [0], [0], [1], [0, 0, 1, 1], [], []>} : vector<128x3xbf16>, vector<3x128xbf16>, vector<128x128xf32> -> vector<128x128xf32>
      %17 = arith.addf %9, %16 : vector<128x128xf32>
      %c0_i32_13 = arith.constant 0 : i32
      %18 = arith.addi %8, %c0_i32_13 : i32
      %c0_14 = arith.constant 0 : index
      %19 = arith.index_cast %18 : i32 to index
      %c1 = arith.constant 1 : index
      %c0_15 = arith.constant 0 : index
      %20 = vector.load %arg1[%c0_14, %19, %c1, %c0_15] : memref<1x18x18x3xbf16, #tpu.memory_space<vmem>>, vector<1x8x16x3xbf16>
      %21 = vector.shape_cast %20 : vector<1x8x16x3xbf16> to vector<128x3xbf16>
      %22 = vector.extract_strided_slice %0 {offsets = [1, 0, 0], sizes = [1, 3, 128], strides = [1, 1, 1]} : vector<9x3x128xbf16> to vector<1x3x128xbf16>
      %23 = vector.shape_cast %22 : vector<1x3x128xbf16> to vector<3x128xbf16>
      %cst_16 = arith.constant dense<0.000000e+00> : vector<128x128xf32>
      %24 = tpu.matmul %21, %23, %cst_16 {dimension_numbers = #tpu.dot_dimension_numbers<[1], [0], [0], [1], [0, 0, 1, 1], [], []>} : vector<128x3xbf16>, vector<3x128xbf16>, vector<128x128xf32> -> vector<128x128xf32>
      %25 = arith.addf %17, %24 : vector<128x128xf32>
      %c0_i32_17 = arith.constant 0 : i32
      %26 = arith.addi %8, %c0_i32_17 : i32
      %c0_18 = arith.constant 0 : index
      %27 = arith.index_cast %26 : i32 to index
      %c2 = arith.constant 2 : index
      %c0_19 = arith.constant 0 : index
      %28 = vector.load %arg1[%c0_18, %27, %c2, %c0_19] : memref<1x18x18x3xbf16, #tpu.memory_space<vmem>>, vector<1x8x16x3xbf16>
      %29 = vector.shape_cast %28 : vector<1x8x16x3xbf16> to vector<128x3xbf16>
      %30 = vector.extract_strided_slice %0 {offsets = [2, 0, 0], sizes = [1, 3, 128], strides = [1, 1, 1]} : vector<9x3x128xbf16> to vector<1x3x128xbf16>
      %31 = vector.shape_cast %30 : vector<1x3x128xbf16> to vector<3x128xbf16>
      %cst_20 = arith.constant dense<0.000000e+00> : vector<128x128xf32>
      %32 = tpu.matmul %29, %31, %cst_20 {dimension_numbers = #tpu.dot_dimension_numbers<[1], [0], [0], [1], [0, 0, 1, 1], [], []>} : vector<128x3xbf16>, vector<3x128xbf16>, vector<128x128xf32> -> vector<128x128xf32>
      %33 = arith.addf %25, %32 : vector<128x128xf32>
      %c1_i32_21 = arith.constant 1 : i32
      %34 = arith.addi %8, %c1_i32_21 : i32
      %c0_22 = arith.constant 0 : index
      %35 = arith.index_cast %34 : i32 to index
      %c0_23 = arith.constant 0 : index
      %c0_24 = arith.constant 0 : index
      %36 = vector.load %arg1[%c0_22, %35, %c0_23, %c0_24] : memref<1x18x18x3xbf16, #tpu.memory_space<vmem>>, vector<1x8x16x3xbf16>
      %37 = vector.shape_cast %36 : vector<1x8x16x3xbf16> to vector<128x3xbf16>
      %38 = vector.extract_strided_slice %0 {offsets = [3, 0, 0], sizes = [1, 3, 128], strides = [1, 1, 1]} : vector<9x3x128xbf16> to vector<1x3x128xbf16>
      %39 = vector.shape_cast %38 : vector<1x3x128xbf16> to vector<3x128xbf16>
      %cst_25 = arith.constant dense<0.000000e+00> : vector<128x128xf32>
      %40 = tpu.matmul %37, %39, %cst_25 {dimension_numbers = #tpu.dot_dimension_numbers<[1], [0], [0], [1], [0, 0, 1, 1], [], []>} : vector<128x3xbf16>, vector<3x128xbf16>, vector<128x128xf32> -> vector<128x128xf32>
      %41 = arith.addf %33, %40 : vector<128x128xf32>
      %c1_i32_26 = arith.constant 1 : i32
      %42 = arith.addi %8, %c1_i32_26 : i32
      %c0_27 = arith.constant 0 : index
      %43 = arith.index_cast %42 : i32 to index
      %c1_28 = arith.constant 1 : index
      %c0_29 = arith.constant 0 : index
      %44 = vector.load %arg1[%c0_27, %43, %c1_28, %c0_29] : memref<1x18x18x3xbf16, #tpu.memory_space<vmem>>, vector<1x8x16x3xbf16>
      %45 = vector.shape_cast %44 : vector<1x8x16x3xbf16> to vector<128x3xbf16>
      %46 = vector.extract_strided_slice %0 {offsets = [4, 0, 0], sizes = [1, 3, 128], strides = [1, 1, 1]} : vector<9x3x128xbf16> to vector<1x3x128xbf16>
      %47 = vector.shape_cast %46 : vector<1x3x128xbf16> to vector<3x128xbf16>
      %cst_30 = arith.constant dense<0.000000e+00> : vector<128x128xf32>
      %48 = tpu.matmul %45, %47, %cst_30 {dimension_numbers = #tpu.dot_dimension_numbers<[1], [0], [0], [1], [0, 0, 1, 1], [], []>} : vector<128x3xbf16>, vector<3x128xbf16>, vector<128x128xf32> -> vector<128x128xf32>
      %49 = arith.addf %41, %48 : vector<128x128xf32>
      %c1_i32_31 = arith.constant 1 : i32
      %50 = arith.addi %8, %c1_i32_31 : i32
      %c0_32 = arith.constant 0 : index
      %51 = arith.index_cast %50 : i32 to index
      %c2_33 = arith.constant 2 : index
      %c0_34 = arith.constant 0 : index
      %52 = vector.load %arg1[%c0_32, %51, %c2_33, %c0_34] : memref<1x18x18x3xbf16, #tpu.memory_space<vmem>>, vector<1x8x16x3xbf16>
      %53 = vector.shape_cast %52 : vector<1x8x16x3xbf16> to vector<128x3xbf16>
      %54 = vector.extract_strided_slice %0 {offsets = [5, 0, 0], sizes = [1, 3, 128], strides = [1, 1, 1]} : vector<9x3x128xbf16> to vector<1x3x128xbf16>
      %55 = vector.shape_cast %54 : vector<1x3x128xbf16> to vector<3x128xbf16>
      %cst_35 = arith.constant dense<0.000000e+00> : vector<128x128xf32>
      %56 = tpu.matmul %53, %55, %cst_35 {dimension_numbers = #tpu.dot_dimension_numbers<[1], [0], [0], [1], [0, 0, 1, 1], [], []>} : vector<128x3xbf16>, vector<3x128xbf16>, vector<128x128xf32> -> vector<128x128xf32>
      %57 = arith.addf %49, %56 : vector<128x128xf32>
      %c2_i32_36 = arith.constant 2 : i32
      %58 = arith.addi %8, %c2_i32_36 : i32
      %c0_37 = arith.constant 0 : index
      %59 = arith.index_cast %58 : i32 to index
      %c0_38 = arith.constant 0 : index
      %c0_39 = arith.constant 0 : index
      %60 = vector.load %arg1[%c0_37, %59, %c0_38, %c0_39] : memref<1x18x18x3xbf16, #tpu.memory_space<vmem>>, vector<1x8x16x3xbf16>
      %61 = vector.shape_cast %60 : vector<1x8x16x3xbf16> to vector<128x3xbf16>
      %62 = vector.extract_strided_slice %0 {offsets = [6, 0, 0], sizes = [1, 3, 128], strides = [1, 1, 1]} : vector<9x3x128xbf16> to vector<1x3x128xbf16>
      %63 = vector.shape_cast %62 : vector<1x3x128xbf16> to vector<3x128xbf16>
      %cst_40 = arith.constant dense<0.000000e+00> : vector<128x128xf32>
      %64 = tpu.matmul %61, %63, %cst_40 {dimension_numbers = #tpu.dot_dimension_numbers<[1], [0], [0], [1], [0, 0, 1, 1], [], []>} : vector<128x3xbf16>, vector<3x128xbf16>, vector<128x128xf32> -> vector<128x128xf32>
      %65 = arith.addf %57, %64 : vector<128x128xf32>
      %c2_i32_41 = arith.constant 2 : i32
      %66 = arith.addi %8, %c2_i32_41 : i32
      %c0_42 = arith.constant 0 : index
      %67 = arith.index_cast %66 : i32 to index
      %c1_43 = arith.constant 1 : index
      %c0_44 = arith.constant 0 : index
      %68 = vector.load %arg1[%c0_42, %67, %c1_43, %c0_44] : memref<1x18x18x3xbf16, #tpu.memory_space<vmem>>, vector<1x8x16x3xbf16>
      %69 = vector.shape_cast %68 : vector<1x8x16x3xbf16> to vector<128x3xbf16>
      %70 = vector.extract_strided_slice %0 {offsets = [7, 0, 0], sizes = [1, 3, 128], strides = [1, 1, 1]} : vector<9x3x128xbf16> to vector<1x3x128xbf16>
      %71 = vector.shape_cast %70 : vector<1x3x128xbf16> to vector<3x128xbf16>
      %cst_45 = arith.constant dense<0.000000e+00> : vector<128x128xf32>
      %72 = tpu.matmul %69, %71, %cst_45 {dimension_numbers = #tpu.dot_dimension_numbers<[1], [0], [0], [1], [0, 0, 1, 1], [], []>} : vector<128x3xbf16>, vector<3x128xbf16>, vector<128x128xf32> -> vector<128x128xf32>
      %73 = arith.addf %65, %72 : vector<128x128xf32>
      %c2_i32_46 = arith.constant 2 : i32
      %74 = arith.addi %8, %c2_i32_46 : i32
      %c0_47 = arith.constant 0 : index
      %75 = arith.index_cast %74 : i32 to index
      %c2_48 = arith.constant 2 : index
      %c0_49 = arith.constant 0 : index
      %76 = vector.load %arg1[%c0_47, %75, %c2_48, %c0_49] : memref<1x18x18x3xbf16, #tpu.memory_space<vmem>>, vector<1x8x16x3xbf16>
      %77 = vector.shape_cast %76 : vector<1x8x16x3xbf16> to vector<128x3xbf16>
      %78 = vector.extract_strided_slice %0 {offsets = [8, 0, 0], sizes = [1, 3, 128], strides = [1, 1, 1]} : vector<9x3x128xbf16> to vector<1x3x128xbf16>
      %79 = vector.shape_cast %78 : vector<1x3x128xbf16> to vector<3x128xbf16>
      %cst_50 = arith.constant dense<0.000000e+00> : vector<128x128xf32>
      %80 = tpu.matmul %77, %79, %cst_50 {dimension_numbers = #tpu.dot_dimension_numbers<[1], [0], [0], [1], [0, 0, 1, 1], [], []>} : vector<128x3xbf16>, vector<3x128xbf16>, vector<128x128xf32> -> vector<128x128xf32>
      %81 = arith.addf %73, %80 : vector<128x128xf32>
      %cst_51 = arith.constant 0.000000e+00 : f32
      %82 = vector.broadcast %cst_51 : f32 to vector<128x128xf32>
      %83 = arith.maximumf %81, %82 : vector<128x128xf32>
      %84 = vector.shape_cast %83 : vector<128x128xf32> to vector<1x128x128xf32>
      %cst_52 = arith.constant dense<0.000000e+00> : vector<1x128xf32>
      %85 = vector.multi_reduction <add>, %84, %cst_52 [1] : vector<1x128x128xf32> to vector<1x128xf32>
      %86 = arith.addf %arg5, %85 : vector<1x128xf32>
      scf.yield %86 : vector<1x128xf32>
    }
    %c2_i32_2 = arith.constant 2 : i32
    %cst_3 = arith.constant 3.906250e-03 : f32
    %4 = vector.broadcast %cst_3 : f32 to vector<1x128xf32>
    %5 = arith.mulf %3, %4 : vector<1x128xf32>
    %6 = vector.shape_cast %5 : vector<1x128xf32> to vector<1x1x128xf32>
    %c0_4 = arith.constant 0 : index
    %c0_5 = arith.constant 0 : index
    %c0_6 = arith.constant 0 : index
    %7 = vector.load %arg3[%c0_4, %c0_5, %c0_6] : memref<1x1x128xf32, #tpu.memory_space<vmem>>, vector<1x1x128xf32>
    tpu.vector_store %arg3[%c0_4, %c0_5, %c0_6], %6 {strides = array<i32>} : memref<1x1x128xf32, #tpu.memory_space<vmem>>, vector<1x1x128xf32>,
    return
  }
  func.func @transform_0(%arg0: i32) -> (i32, i32, i32, i32) {
    %c0_i32 = arith.constant 0 : i32
    %c0_i32_0 = arith.constant 0 : i32
    %c0_i32_1 = arith.constant 0 : i32
    %c0_i32_2 = arith.constant 0 : i32
    return %arg0, %c0_i32, %c0_i32_0, %c0_i32_1 : i32, i32, i32, i32
  }
  func.func @transform_1(%arg0: i32) -> (i32, i32, i32) {
    %c0_i32 = arith.constant 0 : i32
    %c0_i32_0 = arith.constant 0 : i32
    %c0_i32_1 = arith.constant 0 : i32
    %c0_i32_2 = arith.constant 0 : i32
    return %c0_i32, %c0_i32_0, %c0_i32_1 : i32, i32, i32
  }
  func.func @transform_2(%arg0: i32) -> (i32, i32, i32) {
    %c0_i32 = arith.constant 0 : i32
    %c0_i32_0 = arith.constant 0 : i32
    %c0_i32_1 = arith.constant 0 : i32
    return %arg0, %c0_i32, %c0_i32_0 : i32, i32, i32
  }
}

module attributes {stable_mosaic.version = 11 : i64} {
  func.func @_head_kernel(%arg0: i32, %arg1: memref<1x2x128xf32, #tpu.memory_space<vmem>>, %arg2: memref<128x128xf32, #tpu.memory_space<vmem>>, %arg3: memref<1x128xf32, #tpu.memory_space<vmem>>, %arg4: memref<1x128xf32, #tpu.memory_space<vmem>>, %arg5: memref<128x128xf32, #tpu.memory_space<vmem>>, %arg6: memref<1x128xf32, #tpu.memory_space<vmem>>, %arg7: memref<1x128xf32, #tpu.memory_space<vmem>>, %arg8: memref<128x128xf32, #tpu.memory_space<vmem>>, %arg9: memref<1x128xf32, #tpu.memory_space<vmem>>, %arg10: memref<128x128xf32, #tpu.memory_space<vmem>>, %arg11: memref<1x128xf32, #tpu.memory_space<vmem>>, %arg12: memref<1x128xf32, #tpu.memory_space<vmem>>, %arg13: memref<128x128xf32, #tpu.memory_space<vmem>>, %arg14: memref<1x128xf32, #tpu.memory_space<vmem>>, %arg15: memref<1x2x128xf32, #tpu.memory_space<vmem>>, %arg16: memref<1x2x128xf32, #tpu.memory_space<vmem>>) attributes {dimension_semantics = [#tpu.dimension_semantics<parallel>], iteration_bounds = array<i64: 2>, scalar_prefetch = 0 : i64, scratch_operands = 0 : i64, tpu.core_type = #tpu.core_type<tc>, window_params = [{transform_indices = @transform_0, window_bounds = array<i64: 1, 2, 128>}, {pipeline_mode = #tpu.pipeline_mode<synchronous>, transform_indices = @transform_1, window_bounds = array<i64: 128, 128>}, {pipeline_mode = #tpu.pipeline_mode<synchronous>, transform_indices = @transform_2, window_bounds = array<i64: 1, 128>}, {pipeline_mode = #tpu.pipeline_mode<synchronous>, transform_indices = @transform_3, window_bounds = array<i64: 1, 128>}, {pipeline_mode = #tpu.pipeline_mode<synchronous>, transform_indices = @transform_4, window_bounds = array<i64: 128, 128>}, {pipeline_mode = #tpu.pipeline_mode<synchronous>, transform_indices = @transform_5, window_bounds = array<i64: 1, 128>}, {pipeline_mode = #tpu.pipeline_mode<synchronous>, transform_indices = @transform_6, window_bounds = array<i64: 1, 128>}, {pipeline_mode = #tpu.pipeline_mode<synchronous>, transform_indices = @transform_7, window_bounds = array<i64: 128, 128>}, {pipeline_mode = #tpu.pipeline_mode<synchronous>, transform_indices = @transform_8, window_bounds = array<i64: 1, 128>}, {pipeline_mode = #tpu.pipeline_mode<synchronous>, transform_indices = @transform_9, window_bounds = array<i64: 128, 128>}, {pipeline_mode = #tpu.pipeline_mode<synchronous>, transform_indices = @transform_10, window_bounds = array<i64: 1, 128>}, {pipeline_mode = #tpu.pipeline_mode<synchronous>, transform_indices = @transform_11, window_bounds = array<i64: 1, 128>}, {pipeline_mode = #tpu.pipeline_mode<synchronous>, transform_indices = @transform_12, window_bounds = array<i64: 128, 128>}, {pipeline_mode = #tpu.pipeline_mode<synchronous>, transform_indices = @transform_13, window_bounds = array<i64: 1, 128>}, {transform_indices = @transform_14, window_bounds = array<i64: 1, 2, 128>}, {transform_indices = @transform_15, window_bounds = array<i64: 1, 2, 128>}]} {
    %c0 = arith.constant 0 : index
    %c0_0 = arith.constant 0 : index
    %c0_1 = arith.constant 0 : index
    %0 = vector.load %arg1[%c0, %c0_0, %c0_1] : memref<1x2x128xf32, #tpu.memory_space<vmem>>, vector<1x2x128xf32>
    %1 = vector.shape_cast %0 : vector<1x2x128xf32> to vector<2x128xf32>
    %c0_2 = arith.constant 0 : index
    %c0_3 = arith.constant 0 : index
    %2 = vector.load %arg2[%c0_2, %c0_3] : memref<128x128xf32, #tpu.memory_space<vmem>>, vector<128x128xf32>
    %cst = arith.constant dense<0.000000e+00> : vector<2x128xf32>
    %3 = tpu.matmul %1, %2, %cst {dimension_numbers = #tpu.dot_dimension_numbers<[1], [0], [0], [1], [0, 0, 1, 1], [], []>} : vector<2x128xf32>, vector<128x128xf32>, vector<2x128xf32> -> vector<2x128xf32>
    %c0_4 = arith.constant 0 : index
    %c0_5 = arith.constant 0 : index
    %4 = vector.load %arg3[%c0_4, %c0_5] : memref<1x128xf32, #tpu.memory_space<vmem>>, vector<1x128xf32>
    %c0_6 = arith.constant 0 : index
    %c0_7 = arith.constant 0 : index
    %5 = vector.load %arg4[%c0_6, %c0_7] : memref<1x128xf32, #tpu.memory_space<vmem>>, vector<1x128xf32>
    %cst_8 = arith.constant dense<0.000000e+00> : vector<128xf32>
    %6 = vector.multi_reduction <add>, %3, %cst_8 [0] : vector<2x128xf32> to vector<128xf32>
    %7 = vector.shape_cast %6 : vector<128xf32> to vector<1x128xf32>
    %cst_9 = arith.constant 2.000000e+00 : f32
    %8 = vector.broadcast %cst_9 : f32 to vector<1x128xf32>
    %9 = arith.divf %7, %8 : vector<1x128xf32>
    %10 = arith.mulf %3, %3 : vector<2x128xf32>
    %cst_10 = arith.constant dense<0.000000e+00> : vector<128xf32>
    %11 = vector.multi_reduction <add>, %10, %cst_10 [0] : vector<2x128xf32> to vector<128xf32>
    %12 = vector.shape_cast %11 : vector<128xf32> to vector<1x128xf32>
    %cst_11 = arith.constant 2.000000e+00 : f32
    %13 = vector.broadcast %cst_11 : f32 to vector<1x128xf32>
    %14 = arith.divf %12, %13 : vector<1x128xf32>
    %15 = arith.mulf %9, %9 : vector<1x128xf32>
    %16 = arith.subf %14, %15 : vector<1x128xf32>
    %cst_12 = arith.constant 0.000000e+00 : f32
    %17 = vector.broadcast %cst_12 : f32 to vector<1x128xf32>
    %18 = arith.maximumf %16, %17 : vector<1x128xf32>
    %19 = vector.broadcast %9 : vector<1x128xf32> to vector<2x128xf32>
    %20 = arith.subf %3, %19 : vector<2x128xf32>
    %cst_13 = arith.constant 9.99999974E-6 : f32
    %21 = vector.broadcast %cst_13 : f32 to vector<1x128xf32>
    %22 = arith.addf %18, %21 : vector<1x128xf32>
    %23 = math.rsqrt %22 : vector<1x128xf32>
    %24 = vector.broadcast %23 : vector<1x128xf32> to vector<2x128xf32>
    %25 = arith.mulf %20, %24 : vector<2x128xf32>
    %26 = vector.broadcast %4 : vector<1x128xf32> to vector<2x128xf32>
    %27 = arith.mulf %25, %26 : vector<2x128xf32>
    %28 = vector.broadcast %5 : vector<1x128xf32> to vector<2x128xf32>
    %29 = arith.addf %27, %28 : vector<2x128xf32>
    %cst_14 = arith.constant 0.000000e+00 : f32
    %30 = vector.broadcast %cst_14 : f32 to vector<2x128xf32>
    %31 = arith.maximumf %29, %30 : vector<2x128xf32>
    %c0_15 = arith.constant 0 : index
    %c0_16 = arith.constant 0 : index
    %32 = vector.load %arg5[%c0_15, %c0_16] : memref<128x128xf32, #tpu.memory_space<vmem>>, vector<128x128xf32>
    %cst_17 = arith.constant dense<0.000000e+00> : vector<2x128xf32>
    %33 = tpu.matmul %31, %32, %cst_17 {dimension_numbers = #tpu.dot_dimension_numbers<[1], [0], [0], [1], [0, 0, 1, 1], [], []>} : vector<2x128xf32>, vector<128x128xf32>, vector<2x128xf32> -> vector<2x128xf32>
    %c0_18 = arith.constant 0 : index
    %c0_19 = arith.constant 0 : index
    %34 = vector.load %arg6[%c0_18, %c0_19] : memref<1x128xf32, #tpu.memory_space<vmem>>, vector<1x128xf32>
    %c0_20 = arith.constant 0 : index
    %c0_21 = arith.constant 0 : index
    %35 = vector.load %arg7[%c0_20, %c0_21] : memref<1x128xf32, #tpu.memory_space<vmem>>, vector<1x128xf32>
    %cst_22 = arith.constant dense<0.000000e+00> : vector<128xf32>
    %36 = vector.multi_reduction <add>, %33, %cst_22 [0] : vector<2x128xf32> to vector<128xf32>
    %37 = vector.shape_cast %36 : vector<128xf32> to vector<1x128xf32>
    %cst_23 = arith.constant 2.000000e+00 : f32
    %38 = vector.broadcast %cst_23 : f32 to vector<1x128xf32>
    %39 = arith.divf %37, %38 : vector<1x128xf32>
    %40 = arith.mulf %33, %33 : vector<2x128xf32>
    %cst_24 = arith.constant dense<0.000000e+00> : vector<128xf32>
    %41 = vector.multi_reduction <add>, %40, %cst_24 [0] : vector<2x128xf32> to vector<128xf32>
    %42 = vector.shape_cast %41 : vector<128xf32> to vector<1x128xf32>
    %cst_25 = arith.constant 2.000000e+00 : f32
    %43 = vector.broadcast %cst_25 : f32 to vector<1x128xf32>
    %44 = arith.divf %42, %43 : vector<1x128xf32>
    %45 = arith.mulf %39, %39 : vector<1x128xf32>
    %46 = arith.subf %44, %45 : vector<1x128xf32>
    %cst_26 = arith.constant 0.000000e+00 : f32
    %47 = vector.broadcast %cst_26 : f32 to vector<1x128xf32>
    %48 = arith.maximumf %46, %47 : vector<1x128xf32>
    %49 = vector.broadcast %39 : vector<1x128xf32> to vector<2x128xf32>
    %50 = arith.subf %33, %49 : vector<2x128xf32>
    %cst_27 = arith.constant 9.99999974E-6 : f32
    %51 = vector.broadcast %cst_27 : f32 to vector<1x128xf32>
    %52 = arith.addf %48, %51 : vector<1x128xf32>
    %53 = math.rsqrt %52 : vector<1x128xf32>
    %54 = vector.broadcast %53 : vector<1x128xf32> to vector<2x128xf32>
    %55 = arith.mulf %50, %54 : vector<2x128xf32>
    %56 = vector.broadcast %34 : vector<1x128xf32> to vector<2x128xf32>
    %57 = arith.mulf %55, %56 : vector<2x128xf32>
    %58 = vector.broadcast %35 : vector<1x128xf32> to vector<2x128xf32>
    %59 = arith.addf %57, %58 : vector<2x128xf32>
    %cst_28 = arith.constant 0.000000e+00 : f32
    %60 = vector.broadcast %cst_28 : f32 to vector<2x128xf32>
    %61 = arith.maximumf %59, %60 : vector<2x128xf32>
    %c0_29 = arith.constant 0 : index
    %c0_30 = arith.constant 0 : index
    %62 = vector.load %arg8[%c0_29, %c0_30] : memref<128x128xf32, #tpu.memory_space<vmem>>, vector<128x128xf32>
    %cst_31 = arith.constant dense<0.000000e+00> : vector<2x128xf32>
    %63 = tpu.matmul %61, %62, %cst_31 {dimension_numbers = #tpu.dot_dimension_numbers<[1], [0], [0], [1], [0, 0, 1, 1], [], []>} : vector<2x128xf32>, vector<128x128xf32>, vector<2x128xf32> -> vector<2x128xf32>
    %c0_32 = arith.constant 0 : index
    %c0_33 = arith.constant 0 : index
    %64 = vector.load %arg9[%c0_32, %c0_33] : memref<1x128xf32, #tpu.memory_space<vmem>>, vector<1x128xf32>
    %65 = vector.broadcast %64 : vector<1x128xf32> to vector<2x128xf32>
    %66 = arith.addf %63, %65 : vector<2x128xf32>
    %cst_34 = arith.constant dense<0.000000e+00> : vector<128xf32>
    %67 = vector.multi_reduction <add>, %66, %cst_34 [0] : vector<2x128xf32> to vector<128xf32>
    %68 = vector.shape_cast %67 : vector<128xf32> to vector<1x128xf32>
    %cst_35 = arith.constant 2.000000e+00 : f32
    %69 = vector.broadcast %cst_35 : f32 to vector<1x128xf32>
    %70 = arith.divf %68, %69 : vector<1x128xf32>
    %71 = arith.mulf %66, %66 : vector<2x128xf32>
    %cst_36 = arith.constant dense<0.000000e+00> : vector<128xf32>
    %72 = vector.multi_reduction <add>, %71, %cst_36 [0] : vector<2x128xf32> to vector<128xf32>
    %73 = vector.shape_cast %72 : vector<128xf32> to vector<1x128xf32>
    %cst_37 = arith.constant 2.000000e+00 : f32
    %74 = vector.broadcast %cst_37 : f32 to vector<1x128xf32>
    %75 = arith.divf %73, %74 : vector<1x128xf32>
    %76 = arith.mulf %70, %70 : vector<1x128xf32>
    %77 = arith.subf %75, %76 : vector<1x128xf32>
    %cst_38 = arith.constant 0.000000e+00 : f32
    %78 = vector.broadcast %cst_38 : f32 to vector<1x128xf32>
    %79 = arith.maximumf %77, %78 : vector<1x128xf32>
    %80 = vector.broadcast %70 : vector<1x128xf32> to vector<2x128xf32>
    %81 = arith.subf %66, %80 : vector<2x128xf32>
    %cst_39 = arith.constant 9.99999974E-6 : f32
    %82 = vector.broadcast %cst_39 : f32 to vector<1x128xf32>
    %83 = arith.addf %79, %82 : vector<1x128xf32>
    %84 = math.rsqrt %83 : vector<1x128xf32>
    %85 = vector.broadcast %84 : vector<1x128xf32> to vector<2x128xf32>
    %86 = arith.mulf %81, %85 : vector<2x128xf32>
    %c0_40 = arith.constant 0 : index
    %c0_41 = arith.constant 0 : index
    %87 = vector.load %arg10[%c0_40, %c0_41] : memref<128x128xf32, #tpu.memory_space<vmem>>, vector<128x128xf32>
    %cst_42 = arith.constant dense<0.000000e+00> : vector<2x128xf32>
    %88 = tpu.matmul %86, %87, %cst_42 {dimension_numbers = #tpu.dot_dimension_numbers<[1], [0], [0], [1], [0, 0, 1, 1], [], []>} : vector<2x128xf32>, vector<128x128xf32>, vector<2x128xf32> -> vector<2x128xf32>
    %c0_43 = arith.constant 0 : index
    %c0_44 = arith.constant 0 : index
    %89 = vector.load %arg11[%c0_43, %c0_44] : memref<1x128xf32, #tpu.memory_space<vmem>>, vector<1x128xf32>
    %c0_45 = arith.constant 0 : index
    %c0_46 = arith.constant 0 : index
    %90 = vector.load %arg12[%c0_45, %c0_46] : memref<1x128xf32, #tpu.memory_space<vmem>>, vector<1x128xf32>
    %cst_47 = arith.constant dense<0.000000e+00> : vector<128xf32>
    %91 = vector.multi_reduction <add>, %88, %cst_47 [0] : vector<2x128xf32> to vector<128xf32>
    %92 = vector.shape_cast %91 : vector<128xf32> to vector<1x128xf32>
    %cst_48 = arith.constant 2.000000e+00 : f32
    %93 = vector.broadcast %cst_48 : f32 to vector<1x128xf32>
    %94 = arith.divf %92, %93 : vector<1x128xf32>
    %95 = arith.mulf %88, %88 : vector<2x128xf32>
    %cst_49 = arith.constant dense<0.000000e+00> : vector<128xf32>
    %96 = vector.multi_reduction <add>, %95, %cst_49 [0] : vector<2x128xf32> to vector<128xf32>
    %97 = vector.shape_cast %96 : vector<128xf32> to vector<1x128xf32>
    %cst_50 = arith.constant 2.000000e+00 : f32
    %98 = vector.broadcast %cst_50 : f32 to vector<1x128xf32>
    %99 = arith.divf %97, %98 : vector<1x128xf32>
    %100 = arith.mulf %94, %94 : vector<1x128xf32>
    %101 = arith.subf %99, %100 : vector<1x128xf32>
    %cst_51 = arith.constant 0.000000e+00 : f32
    %102 = vector.broadcast %cst_51 : f32 to vector<1x128xf32>
    %103 = arith.maximumf %101, %102 : vector<1x128xf32>
    %104 = vector.broadcast %94 : vector<1x128xf32> to vector<2x128xf32>
    %105 = arith.subf %88, %104 : vector<2x128xf32>
    %cst_52 = arith.constant 9.99999974E-6 : f32
    %106 = vector.broadcast %cst_52 : f32 to vector<1x128xf32>
    %107 = arith.addf %103, %106 : vector<1x128xf32>
    %108 = math.rsqrt %107 : vector<1x128xf32>
    %109 = vector.broadcast %108 : vector<1x128xf32> to vector<2x128xf32>
    %110 = arith.mulf %105, %109 : vector<2x128xf32>
    %111 = vector.broadcast %89 : vector<1x128xf32> to vector<2x128xf32>
    %112 = arith.mulf %110, %111 : vector<2x128xf32>
    %113 = vector.broadcast %90 : vector<1x128xf32> to vector<2x128xf32>
    %114 = arith.addf %112, %113 : vector<2x128xf32>
    %cst_53 = arith.constant 0.000000e+00 : f32
    %115 = vector.broadcast %cst_53 : f32 to vector<2x128xf32>
    %116 = arith.maximumf %114, %115 : vector<2x128xf32>
    %c0_54 = arith.constant 0 : index
    %c0_55 = arith.constant 0 : index
    %117 = vector.load %arg13[%c0_54, %c0_55] : memref<128x128xf32, #tpu.memory_space<vmem>>, vector<128x128xf32>
    %cst_56 = arith.constant dense<0.000000e+00> : vector<2x128xf32>
    %118 = tpu.matmul %116, %117, %cst_56 {dimension_numbers = #tpu.dot_dimension_numbers<[1], [0], [0], [1], [0, 0, 1, 1], [], []>} : vector<2x128xf32>, vector<128x128xf32>, vector<2x128xf32> -> vector<2x128xf32>
    %c0_57 = arith.constant 0 : index
    %c0_58 = arith.constant 0 : index
    %119 = vector.load %arg14[%c0_57, %c0_58] : memref<1x128xf32, #tpu.memory_space<vmem>>, vector<1x128xf32>
    %120 = vector.broadcast %119 : vector<1x128xf32> to vector<2x128xf32>
    %121 = arith.addf %118, %120 : vector<2x128xf32>
    %c0_59 = arith.constant 0 : index
    %c0_60 = arith.constant 0 : index
    %c0_61 = arith.constant 0 : index
    %122 = vector.load %arg15[%c0_59, %c0_60, %c0_61] : memref<1x2x128xf32, #tpu.memory_space<vmem>>, vector<1x2x128xf32>
    %123 = vector.shape_cast %122 : vector<1x2x128xf32> to vector<2x128xf32>
    %124 = vector.shape_cast %121 : vector<2x128xf32> to vector<1x2x128xf32>
    tpu.vector_store %arg15[%c0_59, %c0_60, %c0_61], %124 {strides = array<i32>} : memref<1x2x128xf32, #tpu.memory_space<vmem>>, vector<1x2x128xf32>,
    %c0_62 = arith.constant 0 : index
    %c0_63 = arith.constant 0 : index
    %c0_64 = arith.constant 0 : index
    %125 = vector.load %arg16[%c0_62, %c0_63, %c0_64] : memref<1x2x128xf32, #tpu.memory_space<vmem>>, vector<1x2x128xf32>
    %126 = vector.shape_cast %125 : vector<1x2x128xf32> to vector<2x128xf32>
    %127 = vector.shape_cast %86 : vector<2x128xf32> to vector<1x2x128xf32>
    tpu.vector_store %arg16[%c0_62, %c0_63, %c0_64], %127 {strides = array<i32>} : memref<1x2x128xf32, #tpu.memory_space<vmem>>, vector<1x2x128xf32>,
    return
  }
  func.func @transform_0(%arg0: i32) -> (i32, i32, i32) {
    %c0_i32 = arith.constant 0 : i32
    %c0_i32_0 = arith.constant 0 : i32
    %c0_i32_1 = arith.constant 0 : i32
    return %arg0, %c0_i32, %c0_i32_0 : i32, i32, i32
  }
  func.func @transform_1(%arg0: i32) -> (i32, i32) {
    %c0_i32 = arith.constant 0 : i32
    %c0_i32_0 = arith.constant 0 : i32
    %c0_i32_1 = arith.constant 0 : i32
    return %c0_i32, %c0_i32_0 : i32, i32
  }
  func.func @transform_2(%arg0: i32) -> (i32, i32) {
    %c0_i32 = arith.constant 0 : i32
    %c0_i32_0 = arith.constant 0 : i32
    %c0_i32_1 = arith.constant 0 : i32
    return %c0_i32, %c0_i32_0 : i32, i32
  }
  func.func @transform_3(%arg0: i32) -> (i32, i32) {
    %c0_i32 = arith.constant 0 : i32
    %c0_i32_0 = arith.constant 0 : i32
    %c0_i32_1 = arith.constant 0 : i32
    return %c0_i32, %c0_i32_0 : i32, i32
  }
  func.func @transform_4(%arg0: i32) -> (i32, i32) {
    %c0_i32 = arith.constant 0 : i32
    %c0_i32_0 = arith.constant 0 : i32
    %c0_i32_1 = arith.constant 0 : i32
    return %c0_i32, %c0_i32_0 : i32, i32
  }
  func.func @transform_5(%arg0: i32) -> (i32, i32) {
    %c0_i32 = arith.constant 0 : i32
    %c0_i32_0 = arith.constant 0 : i32
    %c0_i32_1 = arith.constant 0 : i32
    return %c0_i32, %c0_i32_0 : i32, i32
  }
  func.func @transform_6(%arg0: i32) -> (i32, i32) {
    %c0_i32 = arith.constant 0 : i32
    %c0_i32_0 = arith.constant 0 : i32
    %c0_i32_1 = arith.constant 0 : i32
    return %c0_i32, %c0_i32_0 : i32, i32
  }
  func.func @transform_7(%arg0: i32) -> (i32, i32) {
    %c0_i32 = arith.constant 0 : i32
    %c0_i32_0 = arith.constant 0 : i32
    %c0_i32_1 = arith.constant 0 : i32
    return %c0_i32, %c0_i32_0 : i32, i32
  }
  func.func @transform_8(%arg0: i32) -> (i32, i32) {
    %c0_i32 = arith.constant 0 : i32
    %c0_i32_0 = arith.constant 0 : i32
    %c0_i32_1 = arith.constant 0 : i32
    return %c0_i32, %c0_i32_0 : i32, i32
  }
  func.func @transform_9(%arg0: i32) -> (i32, i32) {
    %c0_i32 = arith.constant 0 : i32
    %c0_i32_0 = arith.constant 0 : i32
    %c0_i32_1 = arith.constant 0 : i32
    return %c0_i32, %c0_i32_0 : i32, i32
  }
  func.func @transform_10(%arg0: i32) -> (i32, i32) {
    %c0_i32 = arith.constant 0 : i32
    %c0_i32_0 = arith.constant 0 : i32
    %c0_i32_1 = arith.constant 0 : i32
    return %c0_i32, %c0_i32_0 : i32, i32
  }
  func.func @transform_11(%arg0: i32) -> (i32, i32) {
    %c0_i32 = arith.constant 0 : i32
    %c0_i32_0 = arith.constant 0 : i32
    %c0_i32_1 = arith.constant 0 : i32
    return %c0_i32, %c0_i32_0 : i32, i32
  }
  func.func @transform_12(%arg0: i32) -> (i32, i32) {
    %c0_i32 = arith.constant 0 : i32
    %c0_i32_0 = arith.constant 0 : i32
    %c0_i32_1 = arith.constant 0 : i32
    return %c0_i32, %c0_i32_0 : i32, i32
  }
  func.func @transform_13(%arg0: i32) -> (i32, i32) {
    %c0_i32 = arith.constant 0 : i32
    %c0_i32_0 = arith.constant 0 : i32
    %c0_i32_1 = arith.constant 0 : i32
    return %c0_i32, %c0_i32_0 : i32, i32
  }
  func.func @transform_14(%arg0: i32) -> (i32, i32, i32) {
    %c0_i32 = arith.constant 0 : i32
    %c0_i32_0 = arith.constant 0 : i32
    %c0_i32_1 = arith.constant 0 : i32
    return %arg0, %c0_i32, %c0_i32_0 : i32, i32, i32
  }
  func.func @transform_15(%arg0: i32) -> (i32, i32, i32) {
    %c0_i32 = arith.constant 0 : i32
    %c0_i32_0 = arith.constant 0 : i32
    %c0_i32_1 = arith.constant 0 : i32
    return %arg0, %c0_i32, %c0_i32_0 : i32, i32, i32
  }
}

</mosaic_0001>

<llo_original>
// kernel: simsiam_forward.3
$region0: #{simsiam_forward.3}
  #allocation0 [shape = 'u32[]', space=smem, size = 0x4, offset = 0x4, fixed_abs, tag = 'smem constant byte address 0x4 - core index']
  #allocation1 [shape = 'u32[144,128]{1,0:T(1,128)}', space=vmem, size = 0x12000, scoped, tag = 'internal scratch']
  %s0 = inlined_call_operand.vmem [shape: f32[2,2,128], index: 0, kind: input, shape index: {}]
  %s1 = inlined_call_operand.vmem [shape: f32[128,128], index: 1, kind: input, shape index: {}]
  %s2 = inlined_call_operand.vmem [shape: f32[1,128], index: 2, kind: input, shape index: {}]
  %s3 = inlined_call_operand.vmem [shape: f32[1,128], index: 3, kind: input, shape index: {}]
  %s4 = inlined_call_operand.vmem [shape: f32[128,128], index: 4, kind: input, shape index: {}]
  %s5 = inlined_call_operand.vmem [shape: f32[1,128], index: 5, kind: input, shape index: {}]
  %s6 = inlined_call_operand.vmem [shape: f32[1,128], index: 6, kind: input, shape index: {}]
  %s7 = inlined_call_operand.vmem [shape: f32[128,128], index: 7, kind: input, shape index: {}]
  %s8 = inlined_call_operand.vmem [shape: f32[1,128], index: 8, kind: input, shape index: {}]
  %s9 = inlined_call_operand.vmem [shape: f32[128,128], index: 9, kind: input, shape index: {}]
  %s10 = inlined_call_operand.vmem [shape: f32[1,128], index: 10, kind: input, shape index: {}]
  %s11 = inlined_call_operand.vmem [shape: f32[1,128], index: 11, kind: input, shape index: {}]
  %s12 = inlined_call_operand.vmem [shape: f32[128,128], index: 12, kind: input, shape index: {}]
  %s13 = inlined_call_operand.vmem [shape: f32[1,128], index: 13, kind: input, shape index: {}]
  %s14 = inlined_call_operand.vmem [shape: f32[2,2,128], index: 14, kind: output, shape index: {0}]
  %s15 = inlined_call_operand.vmem [shape: f32[2,2,128], index: 15, kind: output, shape index: {1}]
  %16 = xla_tuple %s14, %s15
  %s17 = sld [smem:[#allocation0]]
  $region97: #{simsiam_forward.3} parent=0
    _
  %s19 = ssub.s32 1, %s17
  %s20 = scalar_select 0, %s19, %s17
  loop: start=0, step=1, limit=4
  $region2: #{simsiam_forward.3} parent=0 // loop_pre_header
    _
  $region3: #{simsiam_forward.3} parent=0 // loop_header
    %s22 = sphi 0, %s26
    %p23 = scmp.ge.s32.totalorder %s22, 4
    %s32 = sphi 0, %s34
    %s35 = sphi 0, %s32
    %s36 = sphi 0, %s35
    %s52 = sphi 0, %s36
    %s56 = sphi 0, %s56
    %s58 = sphi 0, %s56
    %s59 = sphi 0, %s58
    %s73 = sphi 0, %s59
    %s77 = sphi 0, %s77
    %s79 = sphi 0, %s77
    %s80 = sphi 0, %s79
    %s94 = sphi 0, %s80
    %s98 = sphi 0, %s98
    %s100 = sphi 0, %s98
    %s101 = sphi 0, %s100
    %s115 = sphi 0, %s101
    %s119 = sphi 0, %s119
    %s121 = sphi 0, %s119
    %s122 = sphi 0, %s121
    %s136 = sphi 0, %s122
    %s140 = sphi 0, %s140
    %s142 = sphi 0, %s140
    %s143 = sphi 0, %s142
    %s157 = sphi 0, %s143
    %s161 = sphi 0, %s161
    %s163 = sphi 0, %s161
    %s164 = sphi 0, %s163
    %s178 = sphi 0, %s164
    %s182 = sphi 0, %s182
    %s184 = sphi 0, %s182
    %s185 = sphi 0, %s184
    %s199 = sphi 0, %s185
    %s203 = sphi 0, %s203
    %s205 = sphi 0, %s203
    %s206 = sphi 0, %s205
    %s220 = sphi 0, %s206
    %s224 = sphi 0, %s224
    %s226 = sphi 0, %s224
    %s227 = sphi 0, %s226
    %s241 = sphi 0, %s227
    %s245 = sphi 0, %s245
    %s247 = sphi 0, %s245
    %s248 = sphi 0, %s247
    %s262 = sphi 0, %s248
    %s266 = sphi 0, %s266
    %s268 = sphi 0, %s266
    %s269 = sphi 0, %s268
    %s283 = sphi 0, %s269
    %s287 = sphi 0, %s287
    %s289 = sphi 0, %s287
    %s290 = sphi 0, %s289
    %s304 = sphi 0, %s290
    %s308 = sphi 0, %s308
    %s310 = sphi 0, %s308
    %s311 = sphi 0, %s310
    %s325 = sphi 0, %s311
    %s331 = sphi 0, %s333
    %s334 = sphi 0, %s331
    %s335 = sphi 0, %s334
    %s351 = sphi 0, %s335
    %s357 = sphi 0, %s359
    %s360 = sphi 0, %s357
    %s361 = sphi 0, %s360
    %s377 = sphi 0, %s361
  $region4: #{simsiam_forward.3} parent=0 // loop_header_branch
    %25 = sbr.rel (%p23) target = $region8
  $region5: #{simsiam_forward.3} parent=0 // loop_body
    %s27 = ssub.s32 %s22, 1
    %s28 = ssub.s32 %s22, 2
    %s29 = sadd.s32 %s22, 1
    %s30 = ssub.s32 %s22, %s29
    %p31 = scmp.eq.s32.totalorder %s30, 0
    %s33 = sadd.s32 %s32, 1
    %s34 = scalar_select %p31, %s32, %s33
    %p37 = pneg %p31
    %p38 = scmp.eq.s32.totalorder %s22, 1
    %p39 = por %p37, %p38
    %p40 = scmp.ne.s32.totalorder %s32, %s35
    %p41 = scmp.eq.s32.totalorder %s22, 0
    %p42 = por %p40, %p41
    %p43 = scmp.ne.s32.totalorder %s32, %s35
    %p44 = scmp.eq.s32.totalorder %s27, 1
    %p45 = por %p43, %p44
    %p46 = scmp.ne.s32.totalorder %s35, %s36
    %p47 = scmp.eq.s32.totalorder %s27, 0
    %p48 = por %p46, %p47
    %p49 = scmp.ne.s32.totalorder %s35, %s36
    %p50 = scmp.eq.s32.totalorder %s28, 1
    %p51 = por %p49, %p50
    %p53 = scmp.ne.s32.totalorder %s36, %s52
    %p54 = scmp.eq.s32.totalorder %s28, 0
    %p55 = por %p53, %p54
    %s57 = sadd.s32 %s56, 1
    %p60 = scmp.eq.s32.totalorder %s22, 1
    %p61 = scmp.ne.s32.totalorder %s56, %s58
    %p62 = scmp.eq.s32.totalorder %s22, 0
    %p63 = por %p61, %p62
    %p64 = scmp.ne.s32.totalorder %s56, %s58
    %p65 = scmp.eq.s32.totalorder %s27, 1
    %p66 = por %p64, %p65
    %p67 = scmp.ne.s32.totalorder %s58, %s59
    %p68 = scmp.eq.s32.totalorder %s27, 0
    %p69 = por %p67, %p68
    %p70 = scmp.ne.s32.totalorder %s58, %s59
    %p71 = scmp.eq.s32.totalorder %s28, 1
    %p72 = por %p70, %p71
    %p74 = scmp.ne.s32.totalorder %s59, %s73
    %p75 = scmp.eq.s32.totalorder %s28, 0
    %p76 = por %p74, %p75
    %s78 = sadd.s32 %s77, 1
    %p81 = scmp.eq.s32.totalorder %s22, 1
    %p82 = scmp.ne.s32.totalorder %s77, %s79
    %p83 = scmp.eq.s32.totalorder %s22, 0
    %p84 = por %p82, %p83
    %p85 = scmp.ne.s32.totalorder %s77, %s79
    %p86 = scmp.eq.s32.totalorder %s27, 1
    %p87 = por %p85, %p86
    %p88 = scmp.ne.s32.totalorder %s79, %s80
    %p89 = scmp.eq.s32.totalorder %s27, 0
    %p90 = por %p88, %p89
    %p91 = scmp.ne.s32.totalorder %s79, %s80
    %p92 = scmp.eq.s32.totalorder %s28, 1
    %p93 = por %p91, %p92
    %p95 = scmp.ne.s32.totalorder %s80, %s94
    %p96 = scmp.eq.s32.totalorder %s28, 0
    %p97 = por %p95, %p96
    %s99 = sadd.s32 %s98, 1
    %p102 = scmp.eq.s32.totalorder %s22, 1
    %p103 = scmp.ne.s32.totalorder %s98, %s100
    %p104 = scmp.eq.s32.totalorder %s22, 0
    %p105 = por %p103, %p104
    %p106 = scmp.ne.s32.totalorder %s98, %s100
    %p107 = scmp.eq.s32.totalorder %s27, 1
    %p108 = por %p106, %p107
    %p109 = scmp.ne.s32.totalorder %s100, %s101
    %p110 = scmp.eq.s32.totalorder %s27, 0
    %p111 = por %p109, %p110
    %p112 = scmp.ne.s32.totalorder %s100, %s101
    %p113 = scmp.eq.s32.totalorder %s28, 1
    %p114 = por %p112, %p113
    %p116 = scmp.ne.s32.totalorder %s101, %s115
    %p117 = scmp.eq.s32.totalorder %s28, 0
    %p118 = por %p116, %p117
    %s120 = sadd.s32 %s119, 1
    %p123 = scmp.eq.s32.totalorder %s22, 1
    %p124 = scmp.ne.s32.totalorder %s119, %s121
    %p125 = scmp.eq.s32.totalorder %s22, 0
    %p126 = por %p124, %p125
    %p127 = scmp.ne.s32.totalorder %s119, %s121
    %p128 = scmp.eq.s32.totalorder %s27, 1
    %p129 = por %p127, %p128
    %p130 = scmp.ne.s32.totalorder %s121, %s122
    %p131 = scmp.eq.s32.totalorder %s27, 0
    %p132 = por %p130, %p131
    %p133 = scmp.ne.s32.totalorder %s121, %s122
    %p134 = scmp.eq.s32.totalorder %s28, 1
    %p135 = por %p133, %p134
    %p137 = scmp.ne.s32.totalorder %s122, %s136
    %p138 = scmp.eq.s32.totalorder %s28, 0
    %p139 = por %p137, %p138
    %s141 = sadd.s32 %s140, 1
    %p144 = scmp.eq.s32.totalorder %s22, 1
    %p145 = scmp.ne.s32.totalorder %s140, %s142
    %p146 = scmp.eq.s32.totalorder %s22, 0
    %p147 = por %p145, %p146
    %p148 = scmp.ne.s32.totalorder %s140, %s142
    %p149 = scmp.eq.s32.totalorder %s27, 1
    %p150 = por %p148, %p149
    %p151 = scmp.ne.s32.totalorder %s142, %s143
    %p152 = scmp.eq.s32.totalorder %s27, 0
    %p153 = por %p151, %p152
    %p154 = scmp.ne.s32.totalorder %s142, %s143
    %p155 = scmp.eq.s32.totalorder %s28, 1
    %p156 = por %p154, %p155
    %p158 = scmp.ne.s32.totalorder %s143, %s157
    %p159 = scmp.eq.s32.totalorder %s28, 0
    %p160 = por %p158, %p159
    %s162 = sadd.s32 %s161, 1
    %p165 = scmp.eq.s32.totalorder %s22, 1
    %p166 = scmp.ne.s32.totalorder %s161, %s163
    %p167 = scmp.eq.s32.totalorder %s22, 0
    %p168 = por %p166, %p167
    %p169 = scmp.ne.s32.totalorder %s161, %s163
    %p170 = scmp.eq.s32.totalorder %s27, 1
    %p171 = por %p169, %p170
    %p172 = scmp.ne.s32.totalorder %s163, %s164
    %p173 = scmp.eq.s32.totalorder %s27, 0
    %p174 = por %p172, %p173
    %p175 = scmp.ne.s32.totalorder %s163, %s164
    %p176 = scmp.eq.s32.totalorder %s28, 1
    %p177 = por %p175, %p176
    %p179 = scmp.ne.s32.totalorder %s164, %s178
    %p180 = scmp.eq.s32.totalorder %s28, 0
    %p181 = por %p179, %p180
    %s183 = sadd.s32 %s182, 1
    %p186 = scmp.eq.s32.totalorder %s22, 1
    %p187 = scmp.ne.s32.totalorder %s182, %s184
    %p188 = scmp.eq.s32.totalorder %s22, 0
    %p189 = por %p187, %p188
    %p190 = scmp.ne.s32.totalorder %s182, %s184
    %p191 = scmp.eq.s32.totalorder %s27, 1
    %p192 = por %p190, %p191
    %p193 = scmp.ne.s32.totalorder %s184, %s185
    %p194 = scmp.eq.s32.totalorder %s27, 0
    %p195 = por %p193, %p194
    %p196 = scmp.ne.s32.totalorder %s184, %s185
    %p197 = scmp.eq.s32.totalorder %s28, 1
    %p198 = por %p196, %p197
    %p200 = scmp.ne.s32.totalorder %s185, %s199
    %p201 = scmp.eq.s32.totalorder %s28, 0
    %p202 = por %p200, %p201
    %s204 = sadd.s32 %s203, 1
    %p207 = scmp.eq.s32.totalorder %s22, 1
    %p208 = scmp.ne.s32.totalorder %s203, %s205
    %p209 = scmp.eq.s32.totalorder %s22, 0
    %p210 = por %p208, %p209
    %p211 = scmp.ne.s32.totalorder %s203, %s205
    %p212 = scmp.eq.s32.totalorder %s27, 1
    %p213 = por %p211, %p212
    %p214 = scmp.ne.s32.totalorder %s205, %s206
    %p215 = scmp.eq.s32.totalorder %s27, 0
    %p216 = por %p214, %p215
    %p217 = scmp.ne.s32.totalorder %s205, %s206
    %p218 = scmp.eq.s32.totalorder %s28, 1
    %p219 = por %p217, %p218
    %p221 = scmp.ne.s32.totalorder %s206, %s220
    %p222 = scmp.eq.s32.totalorder %s28, 0
    %p223 = por %p221, %p222
    %s225 = sadd.s32 %s224, 1
    %p228 = scmp.eq.s32.totalorder %s22, 1
    %p229 = scmp.ne.s32.totalorder %s224, %s226
    %p230 = scmp.eq.s32.totalorder %s22, 0
    %p231 = por %p229, %p230
    %p232 = scmp.ne.s32.totalorder %s224, %s226
    %p233 = scmp.eq.s32.totalorder %s27, 1
    %p234 = por %p232, %p233
    %p235 = scmp.ne.s32.totalorder %s226, %s227
    %p236 = scmp.eq.s32.totalorder %s27, 0
    %p237 = por %p235, %p236
    %p238 = scmp.ne.s32.totalorder %s226, %s227
    %p239 = scmp.eq.s32.totalorder %s28, 1
    %p240 = por %p238, %p239
    %p242 = scmp.ne.s32.totalorder %s227, %s241
    %p243 = scmp.eq.s32.totalorder %s28, 0
    %p244 = por %p242, %p243
    %s246 = sadd.s32 %s245, 1
    %p249 = scmp.eq.s32.totalorder %s22, 1
    %p250 = scmp.ne.s32.totalorder %s245, %s247
    %p251 = scmp.eq.s32.totalorder %s22, 0
    %p252 = por %p250, %p251
    %p253 = scmp.ne.s32.totalorder %s245, %s247
    %p254 = scmp.eq.s32.totalorder %s27, 1
    %p255 = por %p253, %p254
    %p256 = scmp.ne.s32.totalorder %s247, %s248
    %p257 = scmp.eq.s32.totalorder %s27, 0
    %p258 = por %p256, %p257
    %p259 = scmp.ne.s32.totalorder %s247, %s248
    %p260 = scmp.eq.s32.totalorder %s28, 1
    %p261 = por %p259, %p260
    %p263 = scmp.ne.s32.totalorder %s248, %s262
    %p264 = scmp.eq.s32.totalorder %s28, 0
    %p265 = por %p263, %p264
    %s267 = sadd.s32 %s266, 1
    %p270 = scmp.eq.s32.totalorder %s22, 1
    %p271 = scmp.ne.s32.totalorder %s266, %s268
    %p272 = scmp.eq.s32.totalorder %s22, 0
    %p273 = por %p271, %p272
    %p274 = scmp.ne.s32.totalorder %s266, %s268
    %p275 = scmp.eq.s32.totalorder %s27, 1
    %p276 = por %p274, %p275
    %p277 = scmp.ne.s32.totalorder %s268, %s269
    %p278 = scmp.eq.s32.totalorder %s27, 0
    %p279 = por %p277, %p278
    %p280 = scmp.ne.s32.totalorder %s268, %s269
    %p281 = scmp.eq.s32.totalorder %s28, 1
    %p282 = por %p280, %p281
    %p284 = scmp.ne.s32.totalorder %s269, %s283
    %p285 = scmp.eq.s32.totalorder %s28, 0
    %p286 = por %p284, %p285
    %s288 = sadd.s32 %s287, 1
    %p291 = scmp.eq.s32.totalorder %s22, 1
    %p292 = scmp.ne.s32.totalorder %s287, %s289
    %p293 = scmp.eq.s32.totalorder %s22, 0
    %p294 = por %p292, %p293
    %p295 = scmp.ne.s32.totalorder %s287, %s289
    %p296 = scmp.eq.s32.totalorder %s27, 1
    %p297 = por %p295, %p296
    %p298 = scmp.ne.s32.totalorder %s289, %s290
    %p299 = scmp.eq.s32.totalorder %s27, 0
    %p300 = por %p298, %p299
    %p301 = scmp.ne.s32.totalorder %s289, %s290
    %p302 = scmp.eq.s32.totalorder %s28, 1
    %p303 = por %p301, %p302
    %p305 = scmp.ne.s32.totalorder %s290, %s304
    %p306 = scmp.eq.s32.totalorder %s28, 0
    %p307 = por %p305, %p306
    %s309 = sadd.s32 %s308, 1
    %p312 = scmp.eq.s32.totalorder %s22, 1
    %p313 = scmp.ne.s32.totalorder %s308, %s310
    %p314 = scmp.eq.s32.totalorder %s22, 0
    %p315 = por %p313, %p314
    %p316 = scmp.ne.s32.totalorder %s308, %s310
    %p317 = scmp.eq.s32.totalorder %s27, 1
    %p318 = por %p316, %p317
    %p319 = scmp.ne.s32.totalorder %s310, %s311
    %p320 = scmp.eq.s32.totalorder %s27, 0
    %p321 = por %p319, %p320
    %p322 = scmp.ne.s32.totalorder %s310, %s311
    %p323 = scmp.eq.s32.totalorder %s28, 1
    %p324 = por %p322, %p323
    %p326 = scmp.ne.s32.totalorder %s311, %s325
    %p327 = scmp.eq.s32.totalorder %s28, 0
    %p328 = por %p326, %p327
    %s329 = ssub.s32 %s22, %s29
    %p330 = scmp.eq.s32.totalorder %s329, 0
    %s332 = sadd.s32 %s331, 1
    %s333 = scalar_select %p330, %s331, %s332
    %p336 = pneg %p330
    %p337 = scmp.eq.s32.totalorder %s22, 1
    %p338 = por %p336, %p337
    %p339 = scmp.ne.s32.totalorder %s331, %s334
    %p340 = scmp.eq.s32.totalorder %s22, 0
    %p341 = por %p339, %p340
    %p342 = scmp.ne.s32.totalorder %s331, %s334
    %p343 = scmp.eq.s32.totalorder %s27, 1
    %p344 = por %p342, %p343
    %p345 = scmp.ne.s32.totalorder %s334, %s335
    %p346 = scmp.eq.s32.totalorder %s27, 0
    %p347 = por %p345, %p346
    %p348 = scmp.ne.s32.totalorder %s334, %s335
    %p349 = scmp.eq.s32.totalorder %s28, 1
    %p350 = por %p348, %p349
    %p352 = scmp.ne.s32.totalorder %s335, %s351
    %p353 = scmp.eq.s32.totalorder %s28, 0
    %p354 = por %p352, %p353
    %s355 = ssub.s32 %s22, %s29
    %p356 = scmp.eq.s32.totalorder %s355, 0
    %s358 = sadd.s32 %s357, 1
    %s359 = scalar_select %p356, %s357, %s358
    %p362 = pneg %p356
    %p363 = scmp.eq.s32.totalorder %s22, 1
    %p364 = por %p362, %p363
    %p365 = scmp.ne.s32.totalorder %s357, %s360
    %p366 = scmp.eq.s32.totalorder %s22, 0
    %p367 = por %p365, %p366
    %p368 = scmp.ne.s32.totalorder %s357, %s360
    %p369 = scmp.eq.s32.totalorder %s27, 1
    %p370 = por %p368, %p369
    %p371 = scmp.ne.s32.totalorder %s360, %s361
    %p372 = scmp.eq.s32.totalorder %s27, 0
    %p373 = por %p371, %p372
    %p374 = scmp.ne.s32.totalorder %s360, %s361
    %p375 = scmp.eq.s32.totalorder %s28, 1
    %p376 = por %p374, %p375
    %p378 = scmp.ne.s32.totalorder %s361, %s377
    %p379 = scmp.eq.s32.totalorder %s28, 0
    %p380 = por %p378, %p379
    %p381 = scmp.le.s32.totalorder 1, %s22
    %p382 = scmp.lt.s32.totalorder %s22, 3
    %p383 = pnand %p381, %p382
    %p384 = pneg %p383
    // Predicated region
    $region9: #{simsiam_forward.3} parent=5 // pred_check
      _
    $region10: #{simsiam_forward.3} parent=5 // pred_check_branch
      %386 = sbr.rel (%p383) target = $region12
    $region11: #{simsiam_forward.3} parent=5 // pred_region
      %s387 = ssub.s32 %s22, 1
      // Predicated region
      $region13: #{simsiam_forward.3} parent=11 // pred_check
        %p388 = pneg %p69
      $region14: #{simsiam_forward.3} parent=11 // pred_check_branch
        %390 = sbr.rel (%p388) target = $region16
      $region15: #{simsiam_forward.3} parent=11 // pred_region
        _
      $region16: #{simsiam_forward.3} parent=11 // pred_fallthru
        _
      // Predicated region
      $region17: #{simsiam_forward.3} parent=11 // pred_check
        %p391 = pneg %p90
      $region18: #{simsiam_forward.3} parent=11 // pred_check_branch
        %393 = sbr.rel (%p391) target = $region20
      $region19: #{simsiam_forward.3} parent=11 // pred_region
        _
      $region20: #{simsiam_forward.3} parent=11 // pred_fallthru
        _
      // Predicated region
      $region21: #{simsiam_forward.3} parent=11 // pred_check
        %p394 = pneg %p111
      $region22: #{simsiam_forward.3} parent=11 // pred_check_branch
        %396 = sbr.rel (%p394) target = $region24
      $region23: #{simsiam_forward.3} parent=11 // pred_region
        _
      $region24: #{simsiam_forward.3} parent=11 // pred_fallthru
        _
      // Predicated region
      $region25: #{simsiam_forward.3} parent=11 // pred_check
        %p397 = pneg %p132
      $region26: #{simsiam_forward.3} parent=11 // pred_check_branch
        %399 = sbr.rel (%p397) target = $region28
      $region27: #{simsiam_forward.3} parent=11 // pred_region
        _
      $region28: #{simsiam_forward.3} parent=11 // pred_fallthru
        _
      // Predicated region
      $region29: #{simsiam_forward.3} parent=11 // pred_check
        %p400 = pneg %p153
      $region30: #{simsiam_forward.3} parent=11 // pred_check_branch
        %402 = sbr.rel (%p400) target = $region32
      $region31: #{simsiam_forward.3} parent=11 // pred_region
        _
      $region32: #{simsiam_forward.3} parent=11 // pred_fallthru
        _
      // Predicated region
      $region33: #{simsiam_forward.3} parent=11 // pred_check
        %p403 = pneg %p174
      $region34: #{simsiam_forward.3} parent=11 // pred_check_branch
        %405 = sbr.rel (%p403) target = $region36
      $region35: #{simsiam_forward.3} parent=11 // pred_region
        _
      $region36: #{simsiam_forward.3} parent=11 // pred_fallthru
        _
      // Predicated region
      $region37: #{simsiam_forward.3} parent=11 // pred_check
        %p406 = pneg %p195
      $region38: #{simsiam_forward.3} parent=11 // pred_check_branch
        %408 = sbr.rel (%p406) target = $region40
      $region39: #{simsiam_forward.3} parent=11 // pred_region
        _
      $region40: #{simsiam_forward.3} parent=11 // pred_fallthru
        _
      // Predicated region
      $region41: #{simsiam_forward.3} parent=11 // pred_check
        %p409 = pneg %p216
      $region42: #{simsiam_forward.3} parent=11 // pred_check_branch
        %411 = sbr.rel (%p409) target = $region44
      $region43: #{simsiam_forward.3} parent=11 // pred_region
        _
      $region44: #{simsiam_forward.3} parent=11 // pred_fallthru
        _
      // Predicated region
      $region45: #{simsiam_forward.3} parent=11 // pred_check
        %p412 = pneg %p237
      $region46: #{simsiam_forward.3} parent=11 // pred_check_branch
        %414 = sbr.rel (%p412) target = $region48
      $region47: #{simsiam_forward.3} parent=11 // pred_region
        _
      $region48: #{simsiam_forward.3} parent=11 // pred_fallthru
        _
      // Predicated region
      $region49: #{simsiam_forward.3} parent=11 // pred_check
        %p415 = pneg %p258
      $region50: #{simsiam_forward.3} parent=11 // pred_check_branch
        %417 = sbr.rel (%p415) target = $region52
      $region51: #{simsiam_forward.3} parent=11 // pred_region
        _
      $region52: #{simsiam_forward.3} parent=11 // pred_fallthru
        _
      // Predicated region
      $region53: #{simsiam_forward.3} parent=11 // pred_check
        %p418 = pneg %p279
      $region54: #{simsiam_forward.3} parent=11 // pred_check_branch
        %420 = sbr.rel (%p418) target = $region56
      $region55: #{simsiam_forward.3} parent=11 // pred_region
        _
      $region56: #{simsiam_forward.3} parent=11 // pred_fallthru
        _
      // Predicated region
      $region57: #{simsiam_forward.3} parent=11 // pred_check
        %p421 = pneg %p300
      $region58: #{simsiam_forward.3} parent=11 // pred_check_branch
        %423 = sbr.rel (%p421) target = $region60
      $region59: #{simsiam_forward.3} parent=11 // pred_region
        _
      $region60: #{simsiam_forward.3} parent=11 // pred_fallthru
        _
      // Predicated region
      $region61: #{simsiam_forward.3} parent=11 // pred_check
        %p424 = pneg %p321
      $region62: #{simsiam_forward.3} parent=11 // pred_check_branch
        %426 = sbr.rel (%p424) target = $region64
      $region63: #{simsiam_forward.3} parent=11 // pred_region
        _
      $region64: #{simsiam_forward.3} parent=11 // pred_fallthru
        _
    $region12: #{simsiam_forward.3} parent=5 // pred_fallthru
      _
    %p427 = scmp.lt.s32.totalorder %s22, 2
    // Predicated region
    $region65: #{simsiam_forward.3} parent=5 // pred_check
      %p428 = pneg %p427
    $region66: #{simsiam_forward.3} parent=5 // pred_check_branch
      %430 = sbr.rel (%p428) target = $region68
    $region67: #{simsiam_forward.3} parent=5 // pred_region
      // Predicated region
      $region69: #{simsiam_forward.3} parent=67 // pred_check
        %p431 = pneg %p42
      $region70: #{simsiam_forward.3} parent=67 // pred_check_branch
        %433 = sbr.rel (%p431) target = $region72
      $region71: #{simsiam_forward.3} parent=67 // pred_region
        %p434 = scmp.lt.s32.totalorder %s22, 1
        %s435 = scalar_select %p434, %s22, 1
        %s436 = smul.addr %s435, 2
        %s437 = scalar_lea.vmem %s0, %s436
      $region72: #{simsiam_forward.3} parent=67 // pred_fallthru
        _
    $region68: #{simsiam_forward.3} parent=5 // pred_fallthru
      _
    %p438 = scmp.le.s32.totalorder 1, %s22
    %p439 = scmp.lt.s32.totalorder %s22, 3
    %p440 = pnand %p438, %p439
    %p441 = pneg %p440
    // Predicated region
    $region73: #{simsiam_forward.3} parent=5 // pred_check
      _
    $region74: #{simsiam_forward.3} parent=5 // pred_check_branch
      %443 = sbr.rel (%p440) target = $region76
    $region75: #{simsiam_forward.3} parent=5 // pred_region
      %s444 = ssub.s32 %s22, 1
      %p445 = scmp.lt.s32.totalorder %s27, 1
      %s446 = scalar_select %p445, %s27, 1
      %s447 = smul.addr %s446, 2
      %s448 = scalar_lea.vmem %s0, %s447
      %p449 = pneg %p48
      %p450 = pneg %p45
      %p451 = pneg %p69
      %p452 = pneg %p66
      %p453 = pneg %p90
      %p454 = pneg %p87
      %p455 = pneg %p111
      %p456 = pneg %p108
      %p457 = pneg %p132
      %p458 = pneg %p129
      %p459 = pneg %p153
      %p460 = pneg %p150
      %p461 = pneg %p174
      %p462 = pneg %p171
      %p463 = pneg %p195
      %p464 = pneg %p192
      %p465 = pneg %p216
      %p466 = pneg %p213
      %p467 = pneg %p237
      %p468 = pneg %p234
      %p469 = pneg %p258
      %p470 = pneg %p255
      %p471 = pneg %p279
      %p472 = pneg %p276
      %p473 = pneg %p300
      %p474 = pneg %p297
      %p475 = pneg %p321
      %p476 = pneg %p318
      %p477 = pneg %p347
      %p478 = pneg %p344
      %p479 = scmp.lt.s32.totalorder %s27, 1
      %s480 = scalar_select %p479, %s27, 1
      %s481 = smul.addr %s480, 2
      %s482 = scalar_lea.vmem %s14, %s481
      %p483 = pneg %p373
      %p484 = pneg %p370
      %p485 = scmp.lt.s32.totalorder %s27, 1
      %s486 = scalar_select %p485, %s27, 1
      %s487 = smul.addr %s486, 2
      %s488 = scalar_lea.vmem %s15, %s487
      %p489 = scmp.lt.s32.totalorder %s27, 1
      %s490 = scalar_select %p489, %s27, 1
      %s491 = smul.addr %s490, 2
      %s492 = scalar_lea.vmem %s0, %s491
      %p493 = scmp.lt.s32.totalorder %s27, 1
      %s494 = scalar_select %p493, %s27, 1
      %s495 = smul.addr %s494, 2
      %s496 = scalar_lea.vmem %s14, %s495
      %p497 = scmp.lt.s32.totalorder %s27, 1
      %s498 = scalar_select %p497, %s27, 1
      %s499 = smul.addr %s498, 2
      %s500 = scalar_lea.vmem %s15, %s499
      %v501 = vld [vmem:[%s492] sm:$0x3]
      %v502 = vld [vmem:[%s1] sm:$0xff]
      %v503 = vld [vmem:[%s1 + $0x8] sm:$0xff]
      %v504 = vld [vmem:[%s1 + $0x10] sm:$0xff]
      %v505 = vld [vmem:[%s1 + $0x18] sm:$0xff]
      %v506 = vld [vmem:[%s1 + $0x20] sm:$0xff]
      %v507 = vld [vmem:[%s1 + $0x28] sm:$0xff]
      %v508 = vld [vmem:[%s1 + $0x30] sm:$0xff]
      %v509 = vld [vmem:[%s1 + $0x38] sm:$0xff]
      %v510 = vld [vmem:[%s1 + $0x40] sm:$0xff]
      %v511 = vld [vmem:[%s1 + $0x48] sm:$0xff]
      %v512 = vld [vmem:[%s1 + $0x50] sm:$0xff]
      %v513 = vld [vmem:[%s1 + $0x58] sm:$0xff]
      %v514 = vld [vmem:[%s1 + $0x60] sm:$0xff]
      %v515 = vld [vmem:[%s1 + $0x68] sm:$0xff]
      %v516 = vld [vmem:[%s1 + $0x70] sm:$0xff]
      %v517 = vld [vmem:[%s1 + $0x78] sm:$0xff]
      %518 = vmatprep.subr.mxu0 0.0
      %519 = vmatpush1.msra.mxu0 %v502
      %520 = vmatprep.subr.mxu0 0.0
      %521 = vmatpush1.msra.mxu0 %v503
      %522 = vmatprep.subr.mxu0 0.0
      %523 = vmatpush1.msra.mxu0 %v504
      %524 = vmatprep.subr.mxu0 0.0
      %525 = vmatpush1.msra.mxu0 %v505
      %526 = vmatprep.subr.mxu0 0.0
      %527 = vmatpush1.msra.mxu0 %v506
      %528 = vmatprep.subr.mxu0 0.0
      %529 = vmatpush1.msra.mxu0 %v507
      %530 = vmatprep.subr.mxu0 0.0
      %531 = vmatpush1.msra.mxu0 %v508
      %532 = vmatprep.subr.mxu0 0.0
      %533 = vmatpush1.msra.mxu0 %v509
      %534 = vmatprep.subr.mxu0 0.0
      %535 = vmatpush1.msra.mxu0 %v510
      %536 = vmatprep.subr.mxu0 0.0
      %537 = vmatpush1.msra.mxu0 %v511
      %538 = vmatprep.subr.mxu0 0.0
      %539 = vmatpush1.msra.mxu0 %v512
      %540 = vmatprep.subr.mxu0 0.0
      %541 = vmatpush1.msra.mxu0 %v513
      %542 = vmatprep.subr.mxu0 0.0
      %543 = vmatpush1.msra.mxu0 %v514
      %544 = vmatprep.subr.mxu0 0.0
      %545 = vmatpush1.msra.mxu0 %v515
      %546 = vmatprep.subr.mxu0 0.0
      %547 = vmatpush1.msra.mxu0 %v516
      %548 = vmatprep.subr.mxu0 0.0
      %549 = vmatpush1.msra.mxu0 %v517
      %550 = vmatprep.subr.mxu0 0.0
      %551 = vmatpush1.msra.mxu0 0.0
      %552 = vmatprep.subr.mxu0 0.0
      %553 = vmatpush1.msra.mxu0 0.0
      %554 = vmatprep.subr.mxu0 0.0
      %555 = vmatpush1.msra.mxu0 0.0
      %556 = vmatprep.subr.mxu0 0.0
      %557 = vmatpush1.msra.mxu0 0.0
      %558 = vmatprep.subr.mxu0 0.0
      %559 = vmatpush1.msra.mxu0 0.0
      %560 = vmatprep.subr.mxu0 0.0
      %561 = vmatpush1.msra.mxu0 0.0
      %562 = vmatprep.subr.mxu0 0.0
      %563 = vmatpush1.msra.mxu0 0.0
      %564 = vmatprep.subr.mxu0 0.0
      %565 = vmatpush1.msra.mxu0 0.0
      %566 = vmatprep.subr.mxu0 0.0
      %567 = vmatpush1.msra.mxu0 0.0
      %568 = vmatprep.subr.mxu0 0.0
      %569 = vmatpush1.msra.mxu0 0.0
      %570 = vmatprep.subr.mxu0 0.0
      %571 = vmatpush1.msra.mxu0 0.0
      %572 = vmatprep.subr.mxu0 0.0
      %573 = vmatpush1.msra.mxu0 0.0
      %574 = vmatprep.subr.mxu0 0.0
      %575 = vmatpush1.msra.mxu0 0.0
      %576 = vmatprep.subr.mxu0 0.0
      %577 = vmatpush1.msra.mxu0 0.0
      %578 = vmatprep.subr.mxu0 0.0
      %579 = vmatpush1.msra.mxu0 0.0
      %580 = vmatprep.subr.mxu0 0.0
      %581 = vmatpush1.msra.mxu0 0.0
      %582 = vmatprep.mubr.f32.mxu0 0.0
      %583 = vmatmul.mubr.f32.gmra.mrb[0].mxu0 %v501
      %v584 = vpop.f32.mrb[0].mxu0
      %v585 = vadd.f32 0.0, %v584
      %v586 = vpop.f32.mrb[0].mxu0
      %587 = vdwg.mxu0
      %v588 = vld [vmem:[%s2] sm:$0x1]
      %v589 = vld [vmem:[%s3] sm:$0x1]
      %vm590 = vcmask 1041408
      %v591 = vsel %vm590, %v585, 0.0
      %v592 = vrot.slane %v591, 4
      %v593 = vadd.f32 %v591, %v592
      %v594 = vrot.slane %v593, 2
      %v595 = vadd.f32 %v593, %v594
      %v596 = vrot.slane %v595, 1
      %v597 = vadd.f32 %v595, %v596
      %v598 = vrcp.pop 2.0
      %v599 = vmul.f32 %v597, %v598
      %v600 = vmul.f32 %v585, %v585
      %v601 = vsel %vm590, %v600, 0.0
      %v602 = vrot.slane %v601, 4
      %v603 = vadd.f32 %v601, %v602
      %v604 = vrot.slane %v603, 2
      %v605 = vadd.f32 %v603, %v604
      %v606 = vrot.slane %v605, 1
      %v607 = vadd.f32 %v605, %v606
      %v608 = vmul.f32 %v607, %v598
      %v609 = vmul.f32 %v599, %v599
      %v610 = vsub.f32 %v608, %v609
      %v611 = vmax.f32 %v610, 0.0
      %v612 = vsub.f32 %v585, %v599
      %v613 = vadd.f32 %v611, 1e-05
      %v614 = vrsqrt.pop %v613
      %v615 = vmul.f32 %v612, %v614
      %v617 = vlaneseq
      %v618 = vshrl.u32 %v617, 7
      %v619 = vsub.s32 0, %v618
      %v620 = vrot.slane %v588, %v619
      %v622 = vmul.f32 %v615, %v620
      %v624 = vlaneseq
      %v625 = vshrl.u32 %v624, 7
      %v626 = vsub.s32 0, %v625
      %v627 = vrot.slane %v589, %v626
      %v629 = vadd.f32 %v622, %v627
      %v630 = vmax.f32 %v629, 0.0
      %v631 = vld [vmem:[%s4] sm:$0xff]
      %v632 = vld [vmem:[%s4 + $0x8] sm:$0xff]
      %v633 = vld [vmem:[%s4 + $0x10] sm:$0xff]
      %v634 = vld [vmem:[%s4 + $0x18] sm:$0xff]
      %v635 = vld [vmem:[%s4 + $0x20] sm:$0xff]
      %v636 = vld [vmem:[%s4 + $0x28] sm:$0xff]
      %v637 = vld [vmem:[%s4 + $0x30] sm:$0xff]
      %v638 = vld [vmem:[%s4 + $0x38] sm:$0xff]
      %v639 = vld [vmem:[%s4 + $0x40] sm:$0xff]
      %v640 = vld [vmem:[%s4 + $0x48] sm:$0xff]
      %v641 = vld [vmem:[%s4 + $0x50] sm:$0xff]
      %v642 = vld [vmem:[%s4 + $0x58] sm:$0xff]
      %v643 = vld [vmem:[%s4 + $0x60] sm:$0xff]
      %v644 = vld [vmem:[%s4 + $0x68] sm:$0xff]
      %v645 = vld [vmem:[%s4 + $0x70] sm:$0xff]
      %v646 = vld [vmem:[%s4 + $0x78] sm:$0xff]
      %647 = vmatprep.subr.mxu0 0.0
      %648 = vmatpush1.msra.mxu0 %v631
      %649 = vmatprep.subr.mxu0 0.0
      %650 = vmatpush1.msra.mxu0 %v632
      %651 = vmatprep.subr.mxu0 0.0
      %652 = vmatpush1.msra.mxu0 %v633
      %653 = vmatprep.subr.mxu0 0.0
      %654 = vmatpush1.msra.mxu0 %v634
      %655 = vmatprep.subr.mxu0 0.0
      %656 = vmatpush1.msra.mxu0 %v635
      %657 = vmatprep.subr.mxu0 0.0
      %658 = vmatpush1.msra.mxu0 %v636
      %659 = vmatprep.subr.mxu0 0.0
      %660 = vmatpush1.msra.mxu0 %v637
      %661 = vmatprep.subr.mxu0 0.0
      %662 = vmatpush1.msra.mxu0 %v638
      %663 = vmatprep.subr.mxu0 0.0
      %664 = vmatpush1.msra.mxu0 %v639
      %665 = vmatprep.subr.mxu0 0.0
      %666 = vmatpush1.msra.mxu0 %v640
      %667 = vmatprep.subr.mxu0 0.0
      %668 = vmatpush1.msra.mxu0 %v641
      %669 = vmatprep.subr.mxu0 0.0
      %670 = vmatpush1.msra.mxu0 %v642
      %671 = vmatprep.subr.mxu0 0.0
      %672 = vmatpush1.msra.mxu0 %v643
      %673 = vmatprep.subr.mxu0 0.0
      %674 = vmatpush1.msra.mxu0 %v644
      %675 = vmatprep.subr.mxu0 0.0
      %676 = vmatpush1.msra.mxu0 %v645
      %677 = vmatprep.subr.mxu0 0.0
      %678 = vmatpush1.msra.mxu0 %v646
      %679 = vmatprep.subr.mxu0 0.0
      %680 = vmatpush1.msra.mxu0 0.0
      %681 = vmatprep.subr.mxu0 0.0
      %682 = vmatpush1.msra.mxu0 0.0
      %683 = vmatprep.subr.mxu0 0.0
      %684 = vmatpush1.msra.mxu0 0.0
      %685 = vmatprep.subr.mxu0 0.0
      %686 = vmatpush1.msra.mxu0 0.0
      %687 = vmatprep.subr.mxu0 0.0
      %688 = vmatpush1.msra.mxu0 0.0
      %689 = vmatprep.subr.mxu0 0.0
      %690 = vmatpush1.msra.mxu0 0.0
      %691 = vmatprep.subr.mxu0 0.0
      %692 = vmatpush1.msra.mxu0 0.0
      %693 = vmatprep.subr.mxu0 0.0
      %694 = vmatpush1.msra.mxu0 0.0
      %695 = vmatprep.subr.mxu0 0.0
      %696 = vmatpush1.msra.mxu0 0.0
      %697 = vmatprep.subr.mxu0 0.0
      %698 = vmatpush1.msra.mxu0 0.0
      %699 = vmatprep.subr.mxu0 0.0
      %700 = vmatpush1.msra.mxu0 0.0
      %701 = vmatprep.subr.mxu0 0.0
      %702 = vmatpush1.msra.mxu0 0.0
      %703 = vmatprep.subr.mxu0 0.0
      %704 = vmatpush1.msra.mxu0 0.0
      %705 = vmatprep.subr.mxu0 0.0
      %706 = vmatpush1.msra.mxu0 0.0
      %707 = vmatprep.subr.mxu0 0.0
      %708 = vmatpush1.msra.mxu0 0.0
      %709 = vmatprep.subr.mxu0 0.0
      %710 = vmatpush1.msra.mxu0 0.0
      %711 = vmatprep.mubr.f32.mxu0 0.0
      %712 = vmatmul.mubr.f32.gmra.mrb[0].mxu0 %v630
      %v713 = vpop.f32.mrb[0].mxu0
      %v714 = vadd.f32 0.0, %v713
      %v715 = vpop.f32.mrb[0].mxu0
      %716 = vdwg.mxu0
      %v717 = vld [vmem:[%s5] sm:$0x1]
      %v718 = vld [vmem:[%s6] sm:$0x1]
      %v719 = vsel %vm590, %v714, 0.0
      %v720 = vrot.slane %v719, 4
      %v721 = vadd.f32 %v719, %v720
      %v722 = vrot.slane %v721, 2
      %v723 = vadd.f32 %v721, %v722
      %v724 = vrot.slane %v723, 1
      %v725 = vadd.f32 %v723, %v724
      %v726 = vmul.f32 %v725, %v598
      %v727 = vmul.f32 %v714, %v714
      %v728 = vsel %vm590, %v727, 0.0
      %v729 = vrot.slane %v728, 4
      %v730 = vadd.f32 %v728, %v729
      %v731 = vrot.slane %v730, 2
      %v732 = vadd.f32 %v730, %v731
      %v733 = vrot.slane %v732, 1
      %v734 = vadd.f32 %v732, %v733
      %v735 = vmul.f32 %v734, %v598
      %v736 = vmul.f32 %v726, %v726
      %v737 = vsub.f32 %v735, %v736
      %v738 = vmax.f32 %v737, 0.0
      %v739 = vsub.f32 %v714, %v726
      %v740 = vadd.f32 %v738, 1e-05
      %v741 = vrsqrt.pop %v740
      %v742 = vmul.f32 %v739, %v741
      %v744 = vlaneseq
      %v745 = vshrl.u32 %v744, 7
      %v746 = vsub.s32 0, %v745
      %v747 = vrot.slane %v717, %v746
      %v749 = vmul.f32 %v742, %v747
      %v751 = vlaneseq
      %v752 = vshrl.u32 %v751, 7
      %v753 = vsub.s32 0, %v752
      %v754 = vrot.slane %v718, %v753
      %v756 = vadd.f32 %v749, %v754
      %v757 = vmax.f32 %v756, 0.0
      %v758 = vld [vmem:[%s7] sm:$0xff]
      %v759 = vld [vmem:[%s7 + $0x8] sm:$0xff]
      %v760 = vld [vmem:[%s7 + $0x10] sm:$0xff]
      %v761 = vld [vmem:[%s7 + $0x18] sm:$0xff]
      %v762 = vld [vmem:[%s7 + $0x20] sm:$0xff]
      %v763 = vld [vmem:[%s7 + $0x28] sm:$0xff]
      %v764 = vld [vmem:[%s7 + $0x30] sm:$0xff]
      %v765 = vld [vmem:[%s7 + $0x38] sm:$0xff]
      %v766 = vld [vmem:[%s7 + $0x40] sm:$0xff]
      %v767 = vld [vmem:[%s7 + $0x48] sm:$0xff]
      %v768 = vld [vmem:[%s7 + $0x50] sm:$0xff]
      %v769 = vld [vmem:[%s7 + $0x58] sm:$0xff]
      %v770 = vld [vmem:[%s7 + $0x60] sm:$0xff]
      %v771 = vld [vmem:[%s7 + $0x68] sm:$0xff]
      %v772 = vld [vmem:[%s7 + $0x70] sm:$0xff]
      %v773 = vld [vmem:[%s7 + $0x78] sm:$0xff]
      %v774 = vld [vmem:[%s8] sm:$0x1]
      %v776 = vlaneseq
      %v777 = vshrl.u32 %v776, 7
      %v778 = vsub.s32 0, %v777
      %v779 = vrot.slane %v774, %v778
      %781 = vmatprep.subr.mxu0 0.0
      %782 = vmatpush1.msra.mxu0 %v758
      %783 = vmatprep.subr.mxu0 0.0
      %784 = vmatpush1.msra.mxu0 %v759
      %785 = vmatprep.subr.mxu0 0.0
      %786 = vmatpush1.msra.mxu0 %v760
      %787 = vmatprep.subr.mxu0 0.0
      %788 = vmatpush1.msra.mxu0 %v761
      %789 = vmatprep.subr.mxu0 0.0
      %790 = vmatpush1.msra.mxu0 %v762
      %791 = vmatprep.subr.mxu0 0.0
      %792 = vmatpush1.msra.mxu0 %v763
      %793 = vmatprep.subr.mxu0 0.0
      %794 = vmatpush1.msra.mxu0 %v764
      %795 = vmatprep.subr.mxu0 0.0
      %796 = vmatpush1.msra.mxu0 %v765
      %797 = vmatprep.subr.mxu0 0.0
      %798 = vmatpush1.msra.mxu0 %v766
      %799 = vmatprep.subr.mxu0 0.0
      %800 = vmatpush1.msra.mxu0 %v767
      %801 = vmatprep.subr.mxu0 0.0
      %802 = vmatpush1.msra.mxu0 %v768
      %803 = vmatprep.subr.mxu0 0.0
      %804 = vmatpush1.msra.mxu0 %v769
      %805 = vmatprep.subr.mxu0 0.0
      %806 = vmatpush1.msra.mxu0 %v770
      %807 = vmatprep.subr.mxu0 0.0
      %808 = vmatpush1.msra.mxu0 %v771
      %809 = vmatprep.subr.mxu0 0.0
      %810 = vmatpush1.msra.mxu0 %v772
      %811 = vmatprep.subr.mxu0 0.0
      %812 = vmatpush1.msra.mxu0 %v773
      %813 = vmatprep.subr.mxu0 0.0
      %814 = vmatpush1.msra.mxu0 0.0
      %815 = vmatprep.subr.mxu0 0.0
      %816 = vmatpush1.msra.mxu0 0.0
      %817 = vmatprep.subr.mxu0 0.0
      %818 = vmatpush1.msra.mxu0 0.0
      %819 = vmatprep.subr.mxu0 0.0
      %820 = vmatpush1.msra.mxu0 0.0
      %821 = vmatprep.subr.mxu0 0.0
      %822 = vmatpush1.msra.mxu0 0.0
      %823 = vmatprep.subr.mxu0 0.0
      %824 = vmatpush1.msra.mxu0 0.0
      %825 = vmatprep.subr.mxu0 0.0
      %826 = vmatpush1.msra.mxu0 0.0
      %827 = vmatprep.subr.mxu0 0.0
      %828 = vmatpush1.msra.mxu0 0.0
      %829 = vmatprep.subr.mxu0 0.0
      %830 = vmatpush1.msra.mxu0 0.0
      %831 = vmatprep.subr.mxu0 0.0
      %832 = vmatpush1.msra.mxu0 0.0
      %833 = vmatprep.subr.mxu0 0.0
      %834 = vmatpush1.msra.mxu0 0.0
      %835 = vmatprep.subr.mxu0 0.0
      %836 = vmatpush1.msra.mxu0 0.0
      %837 = vmatprep.subr.mxu0 0.0
      %838 = vmatpush1.msra.mxu0 0.0
      %839 = vmatprep.subr.mxu0 0.0
      %840 = vmatpush1.msra.mxu0 0.0
      %841 = vmatprep.subr.mxu0 0.0
      %842 = vmatpush1.msra.mxu0 0.0
      %843 = vmatprep.subr.mxu0 0.0
      %844 = vmatpush1.msra.mxu0 0.0
      %845 = vmatprep.mubr.f32.mxu0 0.0
      %846 = vmatmul.mubr.f32.gmra.mrb[0].mxu0 %v757
      %v847 = vpop.f32.mrb[0].mxu0
      %v848 = vadd.f32 %v779, %v847
      %v849 = vpop.f32.mrb[0].mxu0
      %850 = vdwg.mxu0
      %v851 = vsel %vm590, %v848, 0.0
      %v852 = vrot.slane %v851, 4
      %v853 = vadd.f32 %v851, %v852
      %v854 = vrot.slane %v853, 2
      %v855 = vadd.f32 %v853, %v854
      %v856 = vrot.slane %v855, 1
      %v857 = vadd.f32 %v855, %v856
      %v858 = vmul.f32 %v857, %v598
      %v859 = vmul.f32 %v848, %v848
      %v860 = vsel %vm590, %v859, 0.0
      %v861 = vrot.slane %v860, 4
      %v862 = vadd.f32 %v860, %v861
      %v863 = vrot.slane %v862, 2
      %v864 = vadd.f32 %v862, %v863
      %v865 = vrot.slane %v864, 1
      %v866 = vadd.f32 %v864, %v865
      %v867 = vmul.f32 %v866, %v598
      %v868 = vmul.f32 %v858, %v858
      %v869 = vsub.f32 %v867, %v868
      %v870 = vmax.f32 %v869, 0.0
      %v871 = vsub.f32 %v848, %v858
      %v872 = vadd.f32 %v870, 1e-05
      %v873 = vrsqrt.pop %v872
      %v874 = vmul.f32 %v871, %v873
      %v875 = vld [vmem:[%s9] sm:$0xff]
      %v876 = vld [vmem:[%s9 + $0x8] sm:$0xff]
      %v877 = vld [vmem:[%s9 + $0x10] sm:$0xff]
      %v878 = vld [vmem:[%s9 + $0x18] sm:$0xff]
      %v879 = vld [vmem:[%s9 + $0x20] sm:$0xff]
      %v880 = vld [vmem:[%s9 + $0x28] sm:$0xff]
      %v881 = vld [vmem:[%s9 + $0x30] sm:$0xff]
      %v882 = vld [vmem:[%s9 + $0x38] sm:$0xff]
      %v883 = vld [vmem:[%s9 + $0x40] sm:$0xff]
      %v884 = vld [vmem:[%s9 + $0x48] sm:$0xff]
      %v885 = vld [vmem:[%s9 + $0x50] sm:$0xff]
      %v886 = vld [vmem:[%s9 + $0x58] sm:$0xff]
      %v887 = vld [vmem:[%s9 + $0x60] sm:$0xff]
      %v888 = vld [vmem:[%s9 + $0x68] sm:$0xff]
      %v889 = vld [vmem:[%s9 + $0x70] sm:$0xff]
      %v890 = vld [vmem:[%s9 + $0x78] sm:$0xff]
      %891 = vmatprep.subr.mxu0 0.0
      %892 = vmatpush1.msra.mxu0 %v875
      %893 = vmatprep.subr.mxu0 0.0
      %894 = vmatpush1.msra.mxu0 %v876
      %895 = vmatprep.subr.mxu0 0.0
      %896 = vmatpush1.msra.mxu0 %v877
      %897 = vmatprep.subr.mxu0 0.0
      %898 = vmatpush1.msra.mxu0 %v878
      %899 = vmatprep.subr.mxu0 0.0
      %900 = vmatpush1.msra.mxu0 %v879
      %901 = vmatprep.subr.mxu0 0.0
      %902 = vmatpush1.msra.mxu0 %v880
      %903 = vmatprep.subr.mxu0 0.0
      %904 = vmatpush1.msra.mxu0 %v881
      %905 = vmatprep.subr.mxu0 0.0
      %906 = vmatpush1.msra.mxu0 %v882
      %907 = vmatprep.subr.mxu0 0.0
      %908 = vmatpush1.msra.mxu0 %v883
      %909 = vmatprep.subr.mxu0 0.0
      %910 = vmatpush1.msra.mxu0 %v884
      %911 = vmatprep.subr.mxu0 0.0
      %912 = vmatpush1.msra.mxu0 %v885
      %913 = vmatprep.subr.mxu0 0.0
      %914 = vmatpush1.msra.mxu0 %v886
      %915 = vmatprep.subr.mxu0 0.0
      %916 = vmatpush1.msra.mxu0 %v887
      %917 = vmatprep.subr.mxu0 0.0
      %918 = vmatpush1.msra.mxu0 %v888
      %919 = vmatprep.subr.mxu0 0.0
      %920 = vmatpush1.msra.mxu0 %v889
      %921 = vmatprep.subr.mxu0 0.0
      %922 = vmatpush1.msra.mxu0 %v890
      %923 = vmatprep.subr.mxu0 0.0
      %924 = vmatpush1.msra.mxu0 0.0
      %925 = vmatprep.subr.mxu0 0.0
      %926 = vmatpush1.msra.mxu0 0.0
      %927 = vmatprep.subr.mxu0 0.0
      %928 = vmatpush1.msra.mxu0 0.0
      %929 = vmatprep.subr.mxu0 0.0
      %930 = vmatpush1.msra.mxu0 0.0
      %931 = vmatprep.subr.mxu0 0.0
      %932 = vmatpush1.msra.mxu0 0.0
      %933 = vmatprep.subr.mxu0 0.0
      %934 = vmatpush1.msra.mxu0 0.0
      %935 = vmatprep.subr.mxu0 0.0
      %936 = vmatpush1.msra.mxu0 0.0
      %937 = vmatprep.subr.mxu0 0.0
      %938 = vmatpush1.msra.mxu0 0.0
      %939 = vmatprep.subr.mxu0 0.0
      %940 = vmatpush1.msra.mxu0 0.0
      %941 = vmatprep.subr.mxu0 0.0
      %942 = vmatpush1.msra.mxu0 0.0
      %943 = vmatprep.subr.mxu0 0.0
      %944 = vmatpush1.msra.mxu0 0.0
      %945 = vmatprep.subr.mxu0 0.0
      %946 = vmatpush1.msra.mxu0 0.0
      %947 = vmatprep.subr.mxu0 0.0
      %948 = vmatpush1.msra.mxu0 0.0
      %949 = vmatprep.subr.mxu0 0.0
      %950 = vmatpush1.msra.mxu0 0.0
      %951 = vmatprep.subr.mxu0 0.0
      %952 = vmatpush1.msra.mxu0 0.0
      %953 = vmatprep.subr.mxu0 0.0
      %954 = vmatpush1.msra.mxu0 0.0
      %955 = vmatprep.mubr.f32.mxu0 0.0
      %956 = vmatmul.mubr.f32.gmra.mrb[0].mxu0 %v874
      %v957 = vpop.f32.mrb[0].mxu0
      %v958 = vadd.f32 0.0, %v957
      %v959 = vpop.f32.mrb[0].mxu0
      %960 = vdwg.mxu0
      %v961 = vld [vmem:[%s10] sm:$0x1]
      %v962 = vld [vmem:[%s11] sm:$0x1]
      %v963 = vsel %vm590, %v958, 0.0
      %v964 = vrot.slane %v963, 4
      %v965 = vadd.f32 %v963, %v964
      %v966 = vrot.slane %v965, 2
      %v967 = vadd.f32 %v965, %v966
      %v968 = vrot.slane %v967, 1
      %v969 = vadd.f32 %v967, %v968
      %v970 = vmul.f32 %v969, %v598
      %v971 = vmul.f32 %v958, %v958
      %v972 = vsel %vm590, %v971, 0.0
      %v973 = vrot.slane %v972, 4
      %v974 = vadd.f32 %v972, %v973
      %v975 = vrot.slane %v974, 2
      %v976 = vadd.f32 %v974, %v975
      %v977 = vrot.slane %v976, 1
      %v978 = vadd.f32 %v976, %v977
      %v979 = vmul.f32 %v978, %v598
      %v980 = vmul.f32 %v970, %v970
      %v981 = vsub.f32 %v979, %v980
      %v982 = vmax.f32 %v981, 0.0
      %v983 = vsub.f32 %v958, %v970
      %v984 = vadd.f32 %v982, 1e-05
      %v985 = vrsqrt.pop %v984
      %v986 = vmul.f32 %v983, %v985
      %v988 = vlaneseq
      %v989 = vshrl.u32 %v988, 7
      %v990 = vsub.s32 0, %v989
      %v991 = vrot.slane %v961, %v990
      %v993 = vmul.f32 %v986, %v991
      %v995 = vlaneseq
      %v996 = vshrl.u32 %v995, 7
      %v997 = vsub.s32 0, %v996
      %v998 = vrot.slane %v962, %v997
      %v1000 = vadd.f32 %v993, %v998
      %v1001 = vmax.f32 %v1000, 0.0
      %v1002 = vld [vmem:[%s12] sm:$0xff]
      %v1003 = vld [vmem:[%s12 + $0x8] sm:$0xff]
      %v1004 = vld [vmem:[%s12 + $0x10] sm:$0xff]
      %v1005 = vld [vmem:[%s12 + $0x18] sm:$0xff]
      %v1006 = vld [vmem:[%s12 + $0x20] sm:$0xff]
      %v1007 = vld [vmem:[%s12 + $0x28] sm:$0xff]
      %v1008 = vld [vmem:[%s12 + $0x30] sm:$0xff]
      %v1009 = vld [vmem:[%s12 + $0x38] sm:$0xff]
      %v1010 = vld [vmem:[%s12 + $0x40] sm:$0xff]
      %v1011 = vld [vmem:[%s12 + $0x48] sm:$0xff]
      %v1012 = vld [vmem:[%s12 + $0x50] sm:$0xff]
      %v1013 = vld [vmem:[%s12 + $0x58] sm:$0xff]
      %v1014 = vld [vmem:[%s12 + $0x60] sm:$0xff]
      %v1015 = vld [vmem:[%s12 + $0x68] sm:$0xff]
      %v1016 = vld [vmem:[%s12 + $0x70] sm:$0xff]
      %v1017 = vld [vmem:[%s12 + $0x78] sm:$0xff]
      %v1018 = vld [vmem:[%s13] sm:$0x1]
      %v1020 = vlaneseq
      %v1021 = vshrl.u32 %v1020, 7
      %v1022 = vsub.s32 0, %v1021
      %v1023 = vrot.slane %v1018, %v1022
      %1025 = vmatprep.subr.mxu0 0.0
      %1026 = vmatpush1.msra.mxu0 %v1002
      %1027 = vmatprep.subr.mxu0 0.0
      %1028 = vmatpush1.msra.mxu0 %v1003
      %1029 = vmatprep.subr.mxu0 0.0
      %1030 = vmatpush1.msra.mxu0 %v1004
      %1031 = vmatprep.subr.mxu0 0.0
      %1032 = vmatpush1.msra.mxu0 %v1005
      %1033 = vmatprep.subr.mxu0 0.0
      %1034 = vmatpush1.msra.mxu0 %v1006
      %1035 = vmatprep.subr.mxu0 0.0
      %1036 = vmatpush1.msra.mxu0 %v1007
      %1037 = vmatprep.subr.mxu0 0.0
      %1038 = vmatpush1.msra.mxu0 %v1008
      %1039 = vmatprep.subr.mxu0 0.0
      %1040 = vmatpush1.msra.mxu0 %v1009
      %1041 = vmatprep.subr.mxu0 0.0
      %1042 = vmatpush1.msra.mxu0 %v1010
      %1043 = vmatprep.subr.mxu0 0.0
      %1044 = vmatpush1.msra.mxu0 %v1011
      %1045 = vmatprep.subr.mxu0 0.0
      %1046 = vmatpush1.msra.mxu0 %v1012
      %1047 = vmatprep.subr.mxu0 0.0
      %1048 = vmatpush1.msra.mxu0 %v1013
      %1049 = vmatprep.subr.mxu0 0.0
      %1050 = vmatpush1.msra.mxu0 %v1014
      %1051 = vmatprep.subr.mxu0 0.0
      %1052 = vmatpush1.msra.mxu0 %v1015
      %1053 = vmatprep.subr.mxu0 0.0
      %1054 = vmatpush1.msra.mxu0 %v1016
      %1055 = vmatprep.subr.mxu0 0.0
      %1056 = vmatpush1.msra.mxu0 %v1017
      %1057 = vmatprep.subr.mxu0 0.0
      %1058 = vmatpush1.msra.mxu0 0.0
      %1059 = vmatprep.subr.mxu0 0.0
      %1060 = vmatpush1.msra.mxu0 0.0
      %1061 = vmatprep.subr.mxu0 0.0
      %1062 = vmatpush1.msra.mxu0 0.0
      %1063 = vmatprep.subr.mxu0 0.0
      %1064 = vmatpush1.msra.mxu0 0.0
      %1065 = vmatprep.subr.mxu0 0.0
      %1066 = vmatpush1.msra.mxu0 0.0
      %1067 = vmatprep.subr.mxu0 0.0
      %1068 = vmatpush1.msra.mxu0 0.0
      %1069 = vmatprep.subr.mxu0 0.0
      %1070 = vmatpush1.msra.mxu0 0.0
      %1071 = vmatprep.subr.mxu0 0.0
      %1072 = vmatpush1.msra.mxu0 0.0
      %1073 = vmatprep.subr.mxu0 0.0
      %1074 = vmatpush1.msra.mxu0 0.0
      %1075 = vmatprep.subr.mxu0 0.0
      %1076 = vmatpush1.msra.mxu0 0.0
      %1077 = vmatprep.subr.mxu0 0.0
      %1078 = vmatpush1.msra.mxu0 0.0
      %1079 = vmatprep.subr.mxu0 0.0
      %1080 = vmatpush1.msra.mxu0 0.0
      %1081 = vmatprep.subr.mxu0 0.0
      %1082 = vmatpush1.msra.mxu0 0.0
      %1083 = vmatprep.subr.mxu0 0.0
      %1084 = vmatpush1.msra.mxu0 0.0
      %1085 = vmatprep.subr.mxu0 0.0
      %1086 = vmatpush1.msra.mxu0 0.0
      %1087 = vmatprep.subr.mxu0 0.0
      %1088 = vmatpush1.msra.mxu0 0.0
      %1089 = vmatprep.mubr.f32.mxu0 0.0
      %1090 = vmatmul.mubr.f32.gmra.mrb[0].mxu0 %v1001
      %v1091 = vpop.f32.mrb[0].mxu0
      %v1092 = vadd.f32 %v1023, %v1091
      %v1093 = vpop.f32.mrb[0].mxu0
      %1094 = vdwg.mxu0
      %1095 = vst [vmem:[%s496] sm:$0x3] %v1092
      %1096 = vst [vmem:[%s500] sm:$0x3] %v874
      %p1097 = scmp.lt.s32.totalorder %s27, 1
      %s1098 = scalar_select %p1097, %s27, 1
      %s1099 = smul.addr %s1098, 2
      %s1100 = scalar_lea.vmem %s14, %s1099
      %p1101 = scmp.lt.s32.totalorder %s27, 1
      %s1102 = scalar_select %p1101, %s27, 1
      %s1103 = smul.addr %s1102, 2
      %s1104 = scalar_lea.vmem %s15, %s1103
      // Predicated region
      $region77: #{simsiam_forward.3} parent=75 // pred_check
        %p1105 = pneg %p344
      $region78: #{simsiam_forward.3} parent=75 // pred_check_branch
        %1107 = sbr.rel (%p1105) target = $region80
      $region79: #{simsiam_forward.3} parent=75 // pred_region
        _
      $region80: #{simsiam_forward.3} parent=75 // pred_fallthru
        _
      // Predicated region
      $region81: #{simsiam_forward.3} parent=75 // pred_check
        %p1108 = pneg %p370
      $region82: #{simsiam_forward.3} parent=75 // pred_check_branch
        %1110 = sbr.rel (%p1108) target = $region84
      $region83: #{simsiam_forward.3} parent=75 // pred_region
        _
      $region84: #{simsiam_forward.3} parent=75 // pred_fallthru
        _
    $region76: #{simsiam_forward.3} parent=5 // pred_fallthru
      _
    %p1111 = scmp.le.s32.totalorder 2, %s22
    // Predicated region
    $region85: #{simsiam_forward.3} parent=5 // pred_check
      %p1112 = pneg %p1111
    $region86: #{simsiam_forward.3} parent=5 // pred_check_branch
      %1114 = sbr.rel (%p1112) target = $region88
    $region87: #{simsiam_forward.3} parent=5 // pred_region
      %s1115 = ssub.s32 %s22, 2
      // Predicated region
      $region89: #{simsiam_forward.3} parent=87 // pred_check
        %p1116 = pneg %p350
      $region90: #{simsiam_forward.3} parent=87 // pred_check_branch
        %1118 = sbr.rel (%p1116) target = $region92
      $region91: #{simsiam_forward.3} parent=87 // pred_region
        %p1119 = scmp.lt.s32.totalorder %s28, 1
        %s1120 = scalar_select %p1119, %s28, 1
        %s1121 = smul.addr %s1120, 2
        %s1122 = scalar_lea.vmem %s14, %s1121
      $region92: #{simsiam_forward.3} parent=87 // pred_fallthru
        _
      // Predicated region
      $region93: #{simsiam_forward.3} parent=87 // pred_check
        %p1123 = pneg %p376
      $region94: #{simsiam_forward.3} parent=87 // pred_check_branch
        %1125 = sbr.rel (%p1123) target = $region96
      $region95: #{simsiam_forward.3} parent=87 // pred_region
        %p1126 = scmp.lt.s32.totalorder %s28, 1
        %s1127 = scalar_select %p1126, %s28, 1
        %s1128 = smul.addr %s1127, 2
        %s1129 = scalar_lea.vmem %s15, %s1128
      $region96: #{simsiam_forward.3} parent=87 // pred_fallthru
        _
    $region88: #{simsiam_forward.3} parent=5 // pred_fallthru
      _
  $region6: #{simsiam_forward.3} parent=0 // loop_footer
    %s26 = sadd.s32 1, %s22
  $region7: #{simsiam_forward.3} parent=0 // loop_footer_branch
    %21 = sbr.rel target = $region3
  $region8: #{simsiam_forward.3} parent=0 // loop_exit
    _

// kernel: simsiam_forward.2
$region0: #{simsiam_forward.2}
  #allocation0 [shape = 'u32[]', space=smem, size = 0x4, offset = 0x4, fixed_abs, tag = 'smem constant byte address 0x4 - core index']
  #allocation1 [shape = 'u32[144,128]{1,0:T(1,128)}', space=vmem, size = 0x12000, scoped, tag = 'internal scratch']
  %s0 = inlined_call_operand.vmem [shape: bf16[4,18,18,3], index: 0, kind: input, shape index: {}]
  %s1 = inlined_call_operand.vmem [shape: bf16[9,3,128], index: 1, kind: input, shape index: {}]
  %s2 = inlined_call_operand.vmem [shape: f32[4,1,128], index: 2, kind: output, shape index: {}]
  %s3 = sld [smem:[#allocation0]]
  $region48: #{simsiam_forward.2} parent=0
    _
  %s5 = ssub.s32 1, %s3
  %s6 = scalar_select 0, %s5, %s3
  loop: start=0, step=1, limit=6
  $region2: #{simsiam_forward.2} parent=0 // loop_pre_header
    _
  $region3: #{simsiam_forward.2} parent=0 // loop_header
    %s8 = sphi 0, %s12
    %p9 = scmp.ge.s32.totalorder %s8, 6
    %s18 = sphi 0, %s20
    %s21 = sphi 0, %s18
    %s22 = sphi 0, %s21
    %s38 = sphi 0, %s22
    %s42 = sphi 0, %s42
    %s44 = sphi 0, %s42
    %s45 = sphi 0, %s44
    %s59 = sphi 0, %s45
    %s65 = sphi 0, %s67
    %s68 = sphi 0, %s65
    %s69 = sphi 0, %s68
    %s85 = sphi 0, %s69
  $region4: #{simsiam_forward.2} parent=0 // loop_header_branch
    %11 = sbr.rel (%p9) target = $region8
  $region5: #{simsiam_forward.2} parent=0 // loop_body
    %s13 = ssub.s32 %s8, 1
    %s14 = ssub.s32 %s8, 2
    %s15 = sadd.s32 %s8, 1
    %s16 = ssub.s32 %s8, %s15
    %p17 = scmp.eq.s32.totalorder %s16, 0
    %s19 = sadd.s32 %s18, 1
    %s20 = scalar_select %p17, %s18, %s19
    %p23 = pneg %p17
    %p24 = scmp.eq.s32.totalorder %s8, 3
    %p25 = por %p23, %p24
    %p26 = scmp.ne.s32.totalorder %s18, %s21
    %p27 = scmp.eq.s32.totalorder %s8, 0
    %p28 = por %p26, %p27
    %p29 = scmp.ne.s32.totalorder %s18, %s21
    %p30 = scmp.eq.s32.totalorder %s13, 3
    %p31 = por %p29, %p30
    %p32 = scmp.ne.s32.totalorder %s21, %s22
    %p33 = scmp.eq.s32.totalorder %s13, 0
    %p34 = por %p32, %p33
    %p35 = scmp.ne.s32.totalorder %s21, %s22
    %p36 = scmp.eq.s32.totalorder %s14, 3
    %p37 = por %p35, %p36
    %p39 = scmp.ne.s32.totalorder %s22, %s38
    %p40 = scmp.eq.s32.totalorder %s14, 0
    %p41 = por %p39, %p40
    %s43 = sadd.s32 %s42, 1
    %p46 = scmp.eq.s32.totalorder %s8, 3
    %p47 = scmp.ne.s32.totalorder %s42, %s44
    %p48 = scmp.eq.s32.totalorder %s8, 0
    %p49 = por %p47, %p48
    %p50 = scmp.ne.s32.totalorder %s42, %s44
    %p51 = scmp.eq.s32.totalorder %s13, 3
    %p52 = por %p50, %p51
    %p53 = scmp.ne.s32.totalorder %s44, %s45
    %p54 = scmp.eq.s32.totalorder %s13, 0
    %p55 = por %p53, %p54
    %p56 = scmp.ne.s32.totalorder %s44, %s45
    %p57 = scmp.eq.s32.totalorder %s14, 3
    %p58 = por %p56, %p57
    %p60 = scmp.ne.s32.totalorder %s45, %s59
    %p61 = scmp.eq.s32.totalorder %s14, 0
    %p62 = por %p60, %p61
    %s63 = ssub.s32 %s8, %s15
    %p64 = scmp.eq.s32.totalorder %s63, 0
    %s66 = sadd.s32 %s65, 1
    %s67 = scalar_select %p64, %s65, %s66
    %p70 = pneg %p64
    %p71 = scmp.eq.s32.totalorder %s8, 3
    %p72 = por %p70, %p71
    %p73 = scmp.ne.s32.totalorder %s65, %s68
    %p74 = scmp.eq.s32.totalorder %s8, 0
    %p75 = por %p73, %p74
    %p76 = scmp.ne.s32.totalorder %s65, %s68
    %p77 = scmp.eq.s32.totalorder %s13, 3
    %p78 = por %p76, %p77
    %p79 = scmp.ne.s32.totalorder %s68, %s69
    %p80 = scmp.eq.s32.totalorder %s13, 0
    %p81 = por %p79, %p80
    %p82 = scmp.ne.s32.totalorder %s68, %s69
    %p83 = scmp.eq.s32.totalorder %s14, 3
    %p84 = por %p82, %p83
    %p86 = scmp.ne.s32.totalorder %s69, %s85
    %p87 = scmp.eq.s32.totalorder %s14, 0
    %p88 = por %p86, %p87
    %p89 = scmp.le.s32.totalorder 1, %s8
    %p90 = scmp.lt.s32.totalorder %s8, 5
    %p91 = pnand %p89, %p90
    %p92 = pneg %p91
    // Predicated region
    $region9: #{simsiam_forward.2} parent=5 // pred_check
      _
    $region10: #{simsiam_forward.2} parent=5 // pred_check_branch
      %94 = sbr.rel (%p91) target = $region12
    $region11: #{simsiam_forward.2} parent=5 // pred_region
      %s95 = ssub.s32 %s8, 1
      // Predicated region
      $region13: #{simsiam_forward.2} parent=11 // pred_check
        %p96 = pneg %p55
      $region14: #{simsiam_forward.2} parent=11 // pred_check_branch
        %98 = sbr.rel (%p96) target = $region16
      $region15: #{simsiam_forward.2} parent=11 // pred_region
        _
      $region16: #{simsiam_forward.2} parent=11 // pred_fallthru
        _
    $region12: #{simsiam_forward.2} parent=5 // pred_fallthru
      _
    %p99 = scmp.lt.s32.totalorder %s8, 4
    // Predicated region
    $region17: #{simsiam_forward.2} parent=5 // pred_check
      %p100 = pneg %p99
    $region18: #{simsiam_forward.2} parent=5 // pred_check_branch
      %102 = sbr.rel (%p100) target = $region20
    $region19: #{simsiam_forward.2} parent=5 // pred_region
      // Predicated region
      $region21: #{simsiam_forward.2} parent=19 // pred_check
        %p103 = pneg %p28
      $region22: #{simsiam_forward.2} parent=19 // pred_check_branch
        %105 = sbr.rel (%p103) target = $region24
      $region23: #{simsiam_forward.2} parent=19 // pred_region
        %p106 = scmp.lt.s32.totalorder %s8, 3
        %s107 = scalar_select %p106, %s8, 3
        %s108 = smul.addr %s107, 54
        %s109 = smul.addr %s108, 4
        %s110 = scalar_lea.vmem %s0, %s109
      $region24: #{simsiam_forward.2} parent=19 // pred_fallthru
        _
    $region20: #{simsiam_forward.2} parent=5 // pred_fallthru
      _
    %p111 = scmp.le.s32.totalorder 1, %s8
    %p112 = scmp.lt.s32.totalorder %s8, 5
    %p113 = pnand %p111, %p112
    %p114 = pneg %p113
    // Predicated region
    $region25: #{simsiam_forward.2} parent=5 // pred_check
      _
    $region26: #{simsiam_forward.2} parent=5 // pred_check_branch
      %116 = sbr.rel (%p113) target = $region28
    $region27: #{simsiam_forward.2} parent=5 // pred_region
      %s117 = ssub.s32 %s8, 1
      %p118 = scmp.lt.s32.totalorder %s13, 3
      %s119 = scalar_select %p118, %s13, 3
      %s120 = smul.addr %s119, 54
      %s121 = smul.addr %s120, 4
      %s122 = scalar_lea.vmem %s0, %s121
      %p123 = pneg %p34
      %p124 = pneg %p31
      %p125 = pneg %p55
      %p126 = pneg %p52
      %p127 = pneg %p81
      %p128 = pneg %p78
      %p129 = scmp.lt.s32.totalorder %s13, 3
      %s130 = scalar_select %p129, %s13, 3
      %s131 = scalar_lea.vmem %s2, %s130
      %p132 = scmp.lt.s32.totalorder %s13, 3
      %s133 = scalar_select %p132, %s13, 3
      %s134 = smul.addr %s133, 54
      %s135 = smul.addr %s134, 4
      %s136 = scalar_lea.vmem %s0, %s135
      %p137 = scmp.lt.s32.totalorder %s13, 3
      %s138 = scalar_select %p137, %s13, 3
      %s139 = scalar_lea.vmem %s2, %s138
      %v141 = vld [vmem:[%s1] sm:$0x3]
      %v142 = vld [vmem:[%s1 + $0x2] sm:$0x3]
      %v143 = vld [vmem:[%s1 + $0x4] sm:$0x3]
      %v144 = vld [vmem:[%s1 + $0x6] sm:$0x3]
      %v145 = vld [vmem:[%s1 + $0x8] sm:$0x3]
      %v146 = vld [vmem:[%s1 + $0xa] sm:$0x3]
      %v147 = vld [vmem:[%s1 + $0xc] sm:$0x3]
      %v148 = vld [vmem:[%s1 + $0xe] sm:$0x3]
      %v149 = vld [vmem:[%s1 + $0x10] sm:$0x3]
      loop: start=0, step=1, limit=2
      $region29: #{simsiam_forward.2} parent=27 // loop_pre_header
        _
      $region30: #{simsiam_forward.2} parent=27 // loop_header
        %s151 = sphi 0, %s155
        %p152 = scmp.ge.s32.totalorder %s151, 2
        %v156 = vphi 0.0, %v2645
      $region31: #{simsiam_forward.2} parent=27 // loop_header_branch
        %154 = sbr.rel (%p152) target = $region35
      $region32: #{simsiam_forward.2} parent=27 // loop_body
        %s157 = smul.u32 %s151, 8
        %s158 = smul.u32 %s157, 3
        %s159 = smul.addr %s158, 4
        %s160 = scalar_lea.vmem %s136, %s159
        %v161 = vld [vmem:[%s160] sm:$0xf]
        %v162 = vld [vmem:[%s160 + $0x4] sm:$0xf]
        %v163 = vld [vmem:[%s160 + $0xc] sm:$0xf]
        %v164 = vld [vmem:[%s160 + $0x10] sm:$0xf]
        %v165 = vld [vmem:[%s160 + $0x18] sm:$0xf]
        %v166 = vld [vmem:[%s160 + $0x1c] sm:$0xf]
        %v167 = vld [vmem:[%s160 + $0x24] sm:$0xf]
        %v168 = vld [vmem:[%s160 + $0x28] sm:$0xf]
        %v169 = vld [vmem:[%s160 + $0x30] sm:$0xf]
        %v170 = vld [vmem:[%s160 + $0x34] sm:$0xf]
        %v171 = vld [vmem:[%s160 + $0x3c] sm:$0xf]
        %v172 = vld [vmem:[%s160 + $0x40] sm:$0xf]
        %v173 = vld [vmem:[%s160 + $0x48] sm:$0xf]
        %v174 = vld [vmem:[%s160 + $0x4c] sm:$0xf]
        %v175 = vld [vmem:[%s160 + $0x54] sm:$0xf]
        %v176 = vld [vmem:[%s160 + $0x58] sm:$0xf]
        %v177 = vld [vmem:[%s160 + $0x8] sm:$0x1]
        %v178 = vld [vmem:[%s160 + $0x14] sm:$0x1]
        %v179 = vld [vmem:[%s160 + $0x20] sm:$0x1]
        %v180 = vld [vmem:[%s160 + $0x2c] sm:$0x1]
        %v181 = vld [vmem:[%s160 + $0x38] sm:$0x1]
        %v182 = vld [vmem:[%s160 + $0x44] sm:$0x1]
        %v183 = vld [vmem:[%s160 + $0x50] sm:$0x1]
        %v184 = vld [vmem:[%s160 + $0x5c] sm:$0x1]
        %vm185 = vsmask.f32 3328
        %vm186 = vsmask.f32 7440
        %vm187 = vmor %vm185, %vm186
        %v189 = vshrl.u32 %v161, 16
        %v191 = vrot.slane %v189, 4
        %v192 = vshll.u32 %v161, 16
        %v194 = vrot.slane %v192, 5
        %v195 = vor.u32 %v191, %v194
        %v196 = vrot.slane %v195, 4
        %v198 = vshll.u32 %v162, 16
        %v200 = vrot.slane %v198, 5
        %v201 = vsel %vm187, %v196, %v200
        %v202 = vshrl.u32 %v162, 16
        %v204 = vrot.slane %v202, 4
        %v205 = vor.u32 %v204, %v200
        %v206 = vrot.slane %v205, 4
        %v208 = vshll.u32 %v177, 16
        %v210 = vrot.slane %v208, 5
        %v211 = vsel %vm187, %v206, %v210
        %v213 = vshrl.u32 %v163, 16
        %v215 = vrot.slane %v213, 4
        %v216 = vshll.u32 %v163, 16
        %v218 = vrot.slane %v216, 5
        %v219 = vor.u32 %v215, %v218
        %v220 = vrot.slane %v219, 4
        %v222 = vshll.u32 %v164, 16
        %v224 = vrot.slane %v222, 5
        %v225 = vsel %vm187, %v220, %v224
        %v226 = vshrl.u32 %v164, 16
        %v228 = vrot.slane %v226, 4
        %v229 = vor.u32 %v228, %v224
        %v230 = vrot.slane %v229, 4
        %v232 = vshll.u32 %v178, 16
        %v234 = vrot.slane %v232, 5
        %v235 = vsel %vm187, %v230, %v234
        %v237 = vshrl.u32 %v165, 16
        %v239 = vrot.slane %v237, 4
        %v240 = vshll.u32 %v165, 16
        %v242 = vrot.slane %v240, 5
        %v243 = vor.u32 %v239, %v242
        %v244 = vrot.slane %v243, 4
        %v246 = vshll.u32 %v166, 16
        %v248 = vrot.slane %v246, 5
        %v249 = vsel %vm187, %v244, %v248
        %v250 = vshrl.u32 %v166, 16
        %v252 = vrot.slane %v250, 4
        %v253 = vor.u32 %v252, %v248
        %v254 = vrot.slane %v253, 4
        %v256 = vshll.u32 %v179, 16
        %v258 = vrot.slane %v256, 5
        %v259 = vsel %vm187, %v254, %v258
        %v261 = vshrl.u32 %v167, 16
        %v263 = vrot.slane %v261, 4
        %v264 = vshll.u32 %v167, 16
        %v266 = vrot.slane %v264, 5
        %v267 = vor.u32 %v263, %v266
        %v268 = vrot.slane %v267, 4
        %v270 = vshll.u32 %v168, 16
        %v272 = vrot.slane %v270, 5
        %v273 = vsel %vm187, %v268, %v272
        %v274 = vshrl.u32 %v168, 16
        %v276 = vrot.slane %v274, 4
        %v277 = vor.u32 %v276, %v272
        %v278 = vrot.slane %v277, 4
        %v280 = vshll.u32 %v180, 16
        %v282 = vrot.slane %v280, 5
        %v283 = vsel %vm187, %v278, %v282
        %v285 = vshrl.u32 %v169, 16
        %v287 = vrot.slane %v285, 4
        %v288 = vshll.u32 %v169, 16
        %v290 = vrot.slane %v288, 5
        %v291 = vor.u32 %v287, %v290
        %v292 = vrot.slane %v291, 4
        %v294 = vshll.u32 %v170, 16
        %v296 = vrot.slane %v294, 5
        %v297 = vsel %vm187, %v292, %v296
        %v298 = vshrl.u32 %v170, 16
        %v300 = vrot.slane %v298, 4
        %v301 = vor.u32 %v300, %v296
        %v302 = vrot.slane %v301, 4
        %v304 = vshll.u32 %v181, 16
        %v306 = vrot.slane %v304, 5
        %v307 = vsel %vm187, %v302, %v306
        %v309 = vshrl.u32 %v171, 16
        %v311 = vrot.slane %v309, 4
        %v312 = vshll.u32 %v171, 16
        %v314 = vrot.slane %v312, 5
        %v315 = vor.u32 %v311, %v314
        %v316 = vrot.slane %v315, 4
        %v318 = vshll.u32 %v172, 16
        %v320 = vrot.slane %v318, 5
        %v321 = vsel %vm187, %v316, %v320
        %v322 = vshrl.u32 %v172, 16
        %v324 = vrot.slane %v322, 4
        %v325 = vor.u32 %v324, %v320
        %v326 = vrot.slane %v325, 4
        %v328 = vshll.u32 %v182, 16
        %v330 = vrot.slane %v328, 5
        %v331 = vsel %vm187, %v326, %v330
        %v333 = vshrl.u32 %v173, 16
        %v335 = vrot.slane %v333, 4
        %v336 = vshll.u32 %v173, 16
        %v338 = vrot.slane %v336, 5
        %v339 = vor.u32 %v335, %v338
        %v340 = vrot.slane %v339, 4
        %v342 = vshll.u32 %v174, 16
        %v344 = vrot.slane %v342, 5
        %v345 = vsel %vm187, %v340, %v344
        %v346 = vshrl.u32 %v174, 16
        %v348 = vrot.slane %v346, 4
        %v349 = vor.u32 %v348, %v344
        %v350 = vrot.slane %v349, 4
        %v352 = vshll.u32 %v183, 16
        %v354 = vrot.slane %v352, 5
        %v355 = vsel %vm187, %v350, %v354
        %v357 = vshrl.u32 %v175, 16
        %v359 = vrot.slane %v357, 4
        %v360 = vshll.u32 %v175, 16
        %v362 = vrot.slane %v360, 5
        %v363 = vor.u32 %v359, %v362
        %v364 = vrot.slane %v363, 4
        %v366 = vshll.u32 %v176, 16
        %v368 = vrot.slane %v366, 5
        %v369 = vsel %vm187, %v364, %v368
        %v370 = vshrl.u32 %v176, 16
        %v372 = vrot.slane %v370, 4
        %v373 = vor.u32 %v372, %v368
        %v374 = vrot.slane %v373, 4
        %v376 = vshll.u32 %v184, 16
        %v378 = vrot.slane %v376, 5
        %v379 = vsel %vm187, %v374, %v378
        %v380 = vunpack.c.l.b16 %v201
        %v381 = vunpack.c.l.b16 %v211
        %v382 = vunpack.c.l.b16 %v225
        %v383 = vunpack.c.l.b16 %v235
        %v384 = vunpack.c.l.b16 %v249
        %v385 = vunpack.c.l.b16 %v259
        %v386 = vunpack.c.l.b16 %v273
        %v387 = vunpack.c.l.b16 %v283
        %v388 = vunpack.c.l.b16 %v297
        %v389 = vunpack.c.l.b16 %v307
        %v390 = vunpack.c.l.b16 %v321
        %v391 = vunpack.c.l.b16 %v331
        %v392 = vunpack.c.l.b16 %v345
        %v393 = vunpack.c.l.b16 %v355
        %v394 = vunpack.c.l.b16 %v369
        %v395 = vunpack.c.l.b16 %v379
        %v396 = vpack.c.b16 %v381, %v380
        %v397 = vpack.c.b16 %v383, %v382
        %v398 = vpack.c.b16 %v385, %v384
        %v399 = vpack.c.b16 %v387, %v386
        %v400 = vpack.c.b16 %v389, %v388
        %v401 = vpack.c.b16 %v391, %v390
        %v402 = vpack.c.b16 %v393, %v392
        %v403 = vpack.c.b16 %v395, %v394
        %vm404 = vcmask 23552
        %v406 = vsel %vm404, %v396, 0
        %v409 = vsel %vm404, %v397, 0
        %v412 = vsel %vm404, %v398, 0
        %v415 = vsel %vm404, %v399, 0
        %v418 = vsel %vm404, %v400, 0
        %v421 = vsel %vm404, %v401, 0
        %v424 = vsel %vm404, %v402, 0
        %v427 = vsel %vm404, %v403, 0
        %vm429 = vcmask 1040384
        %vm430 = vcmask 1041408
        %v431 = vsel %vm429, 4294967295, 65535
        %v432 = vsel %vm430, %v431, 0
        %v434 = vand.u32 %v142, %v432
        %436 = vmatprep.subr.bf16.mxu0 0
        %437 = vmatpush1.bf16.msra.mxu0 %v434
        %438 = vmatprep.subr.bf16.mxu0 0
        %439 = vmatpush1.bf16.msra.mxu0 0
        %440 = vmatprep.subr.bf16.mxu0 0
        %441 = vmatpush1.bf16.msra.mxu0 0
        %442 = vmatprep.subr.bf16.mxu0 0
        %443 = vmatpush1.bf16.msra.mxu0 0
        %444 = vmatprep.subr.bf16.mxu0 0
        %445 = vmatpush1.bf16.msra.mxu0 0
        %446 = vmatprep.subr.bf16.mxu0 0
        %447 = vmatpush1.bf16.msra.mxu0 0
        %448 = vmatprep.subr.bf16.mxu0 0
        %449 = vmatpush1.bf16.msra.mxu0 0
        %450 = vmatprep.subr.bf16.mxu0 0
        %451 = vmatpush1.bf16.msra.mxu0 0
        %452 = vmatprep.subr.bf16.mxu0 0
        %453 = vmatpush1.bf16.msra.mxu0 0
        %454 = vmatprep.subr.bf16.mxu0 0
        %455 = vmatpush1.bf16.msra.mxu0 0
        %456 = vmatprep.subr.bf16.mxu0 0
        %457 = vmatpush1.bf16.msra.mxu0 0
        %458 = vmatprep.subr.bf16.mxu0 0
        %459 = vmatpush1.bf16.msra.mxu0 0
        %460 = vmatprep.subr.bf16.mxu0 0
        %461 = vmatpush1.bf16.msra.mxu0 0
        %462 = vmatprep.subr.bf16.mxu0 0
        %463 = vmatpush1.bf16.msra.mxu0 0
        %464 = vmatprep.subr.bf16.mxu0 0
        %465 = vmatpush1.bf16.msra.mxu0 0
        %466 = vmatprep.subr.bf16.mxu0 0
        %467 = vmatpush1.bf16.msra.mxu0 0
        %468 = vmatprep.mubr.bf16.mxu0 0
        %469 = vmatmul.mubr.bf16.gmra.mrb[0].mxu0 %v406
        %v470 = vpop.f32.mrb[0].mxu0
        %v471 = vadd.f32 0.0, %v470
        %v472 = vpop.f32.mrb[0].mxu0
        %v473 = vpop.f32.mrb[0].mxu0
        %v474 = vadd.f32 0.0, %v473
        %v475 = vpop.f32.mrb[0].mxu0
        %476 = vmatprep.mubr.bf16.mxu0 0
        %477 = vmatmul.mubr.bf16.gmra.mrb[0].mxu0 %v409
        %v478 = vpop.f32.mrb[0].mxu0
        %v479 = vadd.f32 0.0, %v478
        %v480 = vpop.f32.mrb[0].mxu0
        %v481 = vpop.f32.mrb[0].mxu0
        %v482 = vadd.f32 0.0, %v481
        %v483 = vpop.f32.mrb[0].mxu0
        %484 = vmatprep.mubr.bf16.mxu0 0
        %485 = vmatmul.mubr.bf16.gmra.mrb[0].mxu0 %v412
        %v486 = vpop.f32.mrb[0].mxu0
        %v487 = vadd.f32 0.0, %v486
        %v488 = vpop.f32.mrb[0].mxu0
        %v489 = vpop.f32.mrb[0].mxu0
        %v490 = vadd.f32 0.0, %v489
        %v491 = vpop.f32.mrb[0].mxu0
        %492 = vmatprep.mubr.bf16.mxu0 0
        %493 = vmatmul.mubr.bf16.gmra.mrb[0].mxu0 %v415
        %v494 = vpop.f32.mrb[0].mxu0
        %v495 = vadd.f32 0.0, %v494
        %v496 = vpop.f32.mrb[0].mxu0
        %v497 = vpop.f32.mrb[0].mxu0
        %v498 = vadd.f32 0.0, %v497
        %v499 = vpop.f32.mrb[0].mxu0
        %500 = vmatprep.mubr.bf16.mxu0 0
        %501 = vmatmul.mubr.bf16.gmra.mrb[0].mxu0 %v418
        %v502 = vpop.f32.mrb[0].mxu0
        %v503 = vadd.f32 0.0, %v502
        %v504 = vpop.f32.mrb[0].mxu0
        %v505 = vpop.f32.mrb[0].mxu0
        %v506 = vadd.f32 0.0, %v505
        %v507 = vpop.f32.mrb[0].mxu0
        %508 = vmatprep.mubr.bf16.mxu0 0
        %509 = vmatmul.mubr.bf16.gmra.mrb[0].mxu0 %v421
        %v510 = vpop.f32.mrb[0].mxu0
        %v511 = vadd.f32 0.0, %v510
        %v512 = vpop.f32.mrb[0].mxu0
        %v513 = vpop.f32.mrb[0].mxu0
        %v514 = vadd.f32 0.0, %v513
        %v515 = vpop.f32.mrb[0].mxu0
        %516 = vmatprep.mubr.bf16.mxu0 0
        %517 = vmatmul.mubr.bf16.gmra.mrb[0].mxu0 %v424
        %v518 = vpop.f32.mrb[0].mxu0
        %v519 = vadd.f32 0.0, %v518
        %v520 = vpop.f32.mrb[0].mxu0
        %v521 = vpop.f32.mrb[0].mxu0
        %v522 = vadd.f32 0.0, %v521
        %v523 = vpop.f32.mrb[0].mxu0
        %524 = vmatprep.mubr.bf16.mxu0 0
        %525 = vmatmul.mubr.bf16.gmra.mrb[0].mxu0 %v427
        %v526 = vpop.f32.mrb[0].mxu0
        %v527 = vadd.f32 0.0, %v526
        %v528 = vpop.f32.mrb[0].mxu0
        %v529 = vpop.f32.mrb[0].mxu0
        %v530 = vadd.f32 0.0, %v529
        %v531 = vpop.f32.mrb[0].mxu0
        %532 = vdwg.mxu0
        %v549 = vunpack.c.l.b16 %v161
        %v550 = vunpack.c.l.b16 %v162
        %v551 = vunpack.c.l.b16 %v163
        %v552 = vunpack.c.l.b16 %v164
        %v553 = vunpack.c.l.b16 %v165
        %v554 = vunpack.c.l.b16 %v166
        %v555 = vunpack.c.l.b16 %v167
        %v556 = vunpack.c.l.b16 %v168
        %v557 = vunpack.c.l.b16 %v169
        %v558 = vunpack.c.l.b16 %v170
        %v559 = vunpack.c.l.b16 %v171
        %v560 = vunpack.c.l.b16 %v172
        %v561 = vunpack.c.l.b16 %v173
        %v562 = vunpack.c.l.b16 %v174
        %v563 = vunpack.c.l.b16 %v175
        %v564 = vunpack.c.l.b16 %v176
        %v565 = vpack.c.b16 %v550, %v549
        %v566 = vpack.c.b16 %v552, %v551
        %v567 = vpack.c.b16 %v554, %v553
        %v568 = vpack.c.b16 %v556, %v555
        %v569 = vpack.c.b16 %v558, %v557
        %v570 = vpack.c.b16 %v560, %v559
        %v571 = vpack.c.b16 %v562, %v561
        %v572 = vpack.c.b16 %v564, %v563
        %v574 = vsel %vm404, %v565, 0
        %v577 = vsel %vm404, %v566, 0
        %v580 = vsel %vm404, %v567, 0
        %v583 = vsel %vm404, %v568, 0
        %v586 = vsel %vm404, %v569, 0
        %v589 = vsel %vm404, %v570, 0
        %v592 = vsel %vm404, %v571, 0
        %v595 = vsel %vm404, %v572, 0
        %v598 = vand.u32 %v141, %v432
        %600 = vmatprep.subr.bf16.mxu0 0
        %601 = vmatpush1.bf16.msra.mxu0 %v598
        %602 = vmatprep.subr.bf16.mxu0 0
        %603 = vmatpush1.bf16.msra.mxu0 0
        %604 = vmatprep.subr.bf16.mxu0 0
        %605 = vmatpush1.bf16.msra.mxu0 0
        %606 = vmatprep.subr.bf16.mxu0 0
        %607 = vmatpush1.bf16.msra.mxu0 0
        %608 = vmatprep.subr.bf16.mxu0 0
        %609 = vmatpush1.bf16.msra.mxu0 0
        %610 = vmatprep.subr.bf16.mxu0 0
        %611 = vmatpush1.bf16.msra.mxu0 0
        %612 = vmatprep.subr.bf16.mxu0 0
        %613 = vmatpush1.bf16.msra.mxu0 0
        %614 = vmatprep.subr.bf16.mxu0 0
        %615 = vmatpush1.bf16.msra.mxu0 0
        %616 = vmatprep.subr.bf16.mxu0 0
        %617 = vmatpush1.bf16.msra.mxu0 0
        %618 = vmatprep.subr.bf16.mxu0 0
        %619 = vmatpush1.bf16.msra.mxu0 0
        %620 = vmatprep.subr.bf16.mxu0 0
        %621 = vmatpush1.bf16.msra.mxu0 0
        %622 = vmatprep.subr.bf16.mxu0 0
        %623 = vmatpush1.bf16.msra.mxu0 0
        %624 = vmatprep.subr.bf16.mxu0 0
        %625 = vmatpush1.bf16.msra.mxu0 0
        %626 = vmatprep.subr.bf16.mxu0 0
        %627 = vmatpush1.bf16.msra.mxu0 0
        %628 = vmatprep.subr.bf16.mxu0 0
        %629 = vmatpush1.bf16.msra.mxu0 0
        %630 = vmatprep.subr.bf16.mxu0 0
        %631 = vmatpush1.bf16.msra.mxu0 0
        %632 = vmatprep.mubr.bf16.mxu0 0
        %633 = vmatmul.mubr.bf16.gmra.mrb[0].mxu0 %v574
        %v634 = vpop.f32.mrb[0].mxu0
        %v635 = vadd.f32 %v471, %v634
        %v636 = vpop.f32.mrb[0].mxu0
        %v637 = vpop.f32.mrb[0].mxu0
        %v638 = vadd.f32 %v474, %v637
        %v639 = vpop.f32.mrb[0].mxu0
        %640 = vmatprep.mubr.bf16.mxu0 0
        %641 = vmatmul.mubr.bf16.gmra.mrb[0].mxu0 %v577
        %v642 = vpop.f32.mrb[0].mxu0
        %v643 = vadd.f32 %v479, %v642
        %v644 = vpop.f32.mrb[0].mxu0
        %v645 = vpop.f32.mrb[0].mxu0
        %v646 = vadd.f32 %v482, %v645
        %v647 = vpop.f32.mrb[0].mxu0
        %648 = vmatprep.mubr.bf16.mxu0 0
        %649 = vmatmul.mubr.bf16.gmra.mrb[0].mxu0 %v580
        %v650 = vpop.f32.mrb[0].mxu0
        %v651 = vadd.f32 %v487, %v650
        %v652 = vpop.f32.mrb[0].mxu0
        %v653 = vpop.f32.mrb[0].mxu0
        %v654 = vadd.f32 %v490, %v653
        %v655 = vpop.f32.mrb[0].mxu0
        %656 = vmatprep.mubr.bf16.mxu0 0
        %657 = vmatmul.mubr.bf16.gmra.mrb[0].mxu0 %v583
        %v658 = vpop.f32.mrb[0].mxu0
        %v659 = vadd.f32 %v495, %v658
        %v660 = vpop.f32.mrb[0].mxu0
        %v661 = vpop.f32.mrb[0].mxu0
        %v662 = vadd.f32 %v498, %v661
        %v663 = vpop.f32.mrb[0].mxu0
        %664 = vmatprep.mubr.bf16.mxu0 0
        %665 = vmatmul.mubr.bf16.gmra.mrb[0].mxu0 %v586
        %v666 = vpop.f32.mrb[0].mxu0
        %v667 = vadd.f32 %v503, %v666
        %v668 = vpop.f32.mrb[0].mxu0
        %v669 = vpop.f32.mrb[0].mxu0
        %v670 = vadd.f32 %v506, %v669
        %v671 = vpop.f32.mrb[0].mxu0
        %672 = vmatprep.mubr.bf16.mxu0 0
        %673 = vmatmul.mubr.bf16.gmra.mrb[0].mxu0 %v589
        %v674 = vpop.f32.mrb[0].mxu0
        %v675 = vadd.f32 %v511, %v674
        %v676 = vpop.f32.mrb[0].mxu0
        %v677 = vpop.f32.mrb[0].mxu0
        %v678 = vadd.f32 %v514, %v677
        %v679 = vpop.f32.mrb[0].mxu0
        %680 = vmatprep.mubr.bf16.mxu0 0
        %681 = vmatmul.mubr.bf16.gmra.mrb[0].mxu0 %v592
        %v682 = vpop.f32.mrb[0].mxu0
        %v683 = vadd.f32 %v519, %v682
        %v684 = vpop.f32.mrb[0].mxu0
        %v685 = vpop.f32.mrb[0].mxu0
        %v686 = vadd.f32 %v522, %v685
        %v687 = vpop.f32.mrb[0].mxu0
        %688 = vmatprep.mubr.bf16.mxu0 0
        %689 = vmatmul.mubr.bf16.gmra.mrb[0].mxu0 %v595
        %v690 = vpop.f32.mrb[0].mxu0
        %v691 = vadd.f32 %v527, %v690
        %v692 = vpop.f32.mrb[0].mxu0
        %v693 = vpop.f32.mrb[0].mxu0
        %v694 = vadd.f32 %v530, %v693
        %v695 = vpop.f32.mrb[0].mxu0
        %696 = vdwg.mxu0
        %v697 = vld [vmem:[%s160] sm:$0xe]
        %v698 = vld [vmem:[%s160 + $0xc] sm:$0xe]
        %v699 = vld [vmem:[%s160 + $0x18] sm:$0xe]
        %v700 = vld [vmem:[%s160 + $0x24] sm:$0xe]
        %v701 = vld [vmem:[%s160 + $0x30] sm:$0xe]
        %v702 = vld [vmem:[%s160 + $0x3c] sm:$0xe]
        %v703 = vld [vmem:[%s160 + $0x48] sm:$0xe]
        %v704 = vld [vmem:[%s160 + $0x54] sm:$0xe]
        %vm721 = vcmask 1042432
        %vm722 = vcmask 1046532
        %vm723 = vmor %vm721, %vm722
        %v724 = vrot.slane %v697, 5
        %v725 = vrot.slane %v724, 4
        %v726 = vrot.slane %v162, 5
        %v727 = vsel %vm723, %v725, %v726
        %v728 = vrot.slane %v726, 4
        %v729 = vrot.slane %v177, 5
        %v730 = vsel %vm723, %v728, %v729
        %v731 = vrot.slane %v698, 5
        %v732 = vrot.slane %v731, 4
        %v733 = vrot.slane %v164, 5
        %v734 = vsel %vm723, %v732, %v733
        %v735 = vrot.slane %v733, 4
        %v736 = vrot.slane %v178, 5
        %v737 = vsel %vm723, %v735, %v736
        %v738 = vrot.slane %v699, 5
        %v739 = vrot.slane %v738, 4
        %v740 = vrot.slane %v166, 5
        %v741 = vsel %vm723, %v739, %v740
        %v742 = vrot.slane %v740, 4
        %v743 = vrot.slane %v179, 5
        %v744 = vsel %vm723, %v742, %v743
        %v745 = vrot.slane %v700, 5
        %v746 = vrot.slane %v745, 4
        %v747 = vrot.slane %v168, 5
        %v748 = vsel %vm723, %v746, %v747
        %v749 = vrot.slane %v747, 4
        %v750 = vrot.slane %v180, 5
        %v751 = vsel %vm723, %v749, %v750
        %v752 = vrot.slane %v701, 5
        %v753 = vrot.slane %v752, 4
        %v754 = vrot.slane %v170, 5
        %v755 = vsel %vm723, %v753, %v754
        %v756 = vrot.slane %v754, 4
        %v757 = vrot.slane %v181, 5
        %v758 = vsel %vm723, %v756, %v757
        %v759 = vrot.slane %v702, 5
        %v760 = vrot.slane %v759, 4
        %v761 = vrot.slane %v172, 5
        %v762 = vsel %vm723, %v760, %v761
        %v763 = vrot.slane %v761, 4
        %v764 = vrot.slane %v182, 5
        %v765 = vsel %vm723, %v763, %v764
        %v766 = vrot.slane %v703, 5
        %v767 = vrot.slane %v766, 4
        %v768 = vrot.slane %v174, 5
        %v769 = vsel %vm723, %v767, %v768
        %v770 = vrot.slane %v768, 4
        %v771 = vrot.slane %v183, 5
        %v772 = vsel %vm723, %v770, %v771
        %v773 = vrot.slane %v704, 5
        %v774 = vrot.slane %v773, 4
        %v775 = vrot.slane %v176, 5
        %v776 = vsel %vm723, %v774, %v775
        %v777 = vrot.slane %v775, 4
        %v778 = vrot.slane %v184, 5
        %v779 = vsel %vm723, %v777, %v778
        %v780 = vunpack.c.l.b16 %v727
        %v781 = vunpack.c.l.b16 %v730
        %v782 = vunpack.c.l.b16 %v734
        %v783 = vunpack.c.l.b16 %v737
        %v784 = vunpack.c.l.b16 %v741
        %v785 = vunpack.c.l.b16 %v744
        %v786 = vunpack.c.l.b16 %v748
        %v787 = vunpack.c.l.b16 %v751
        %v788 = vunpack.c.l.b16 %v755
        %v789 = vunpack.c.l.b16 %v758
        %v790 = vunpack.c.l.b16 %v762
        %v791 = vunpack.c.l.b16 %v765
        %v792 = vunpack.c.l.b16 %v769
        %v793 = vunpack.c.l.b16 %v772
        %v794 = vunpack.c.l.b16 %v776
        %v795 = vunpack.c.l.b16 %v779
        %v796 = vpack.c.b16 %v781, %v780
        %v797 = vpack.c.b16 %v783, %v782
        %v798 = vpack.c.b16 %v785, %v784
        %v799 = vpack.c.b16 %v787, %v786
        %v800 = vpack.c.b16 %v789, %v788
        %v801 = vpack.c.b16 %v791, %v790
        %v802 = vpack.c.b16 %v793, %v792
        %v803 = vpack.c.b16 %v795, %v794
        %v805 = vsel %vm404, %v796, 0
        %v808 = vsel %vm404, %v797, 0
        %v811 = vsel %vm404, %v798, 0
        %v814 = vsel %vm404, %v799, 0
        %v817 = vsel %vm404, %v800, 0
        %v820 = vsel %vm404, %v801, 0
        %v823 = vsel %vm404, %v802, 0
        %v826 = vsel %vm404, %v803, 0
        %v829 = vand.u32 %v143, %v432
        %831 = vmatprep.subr.bf16.mxu0 0
        %832 = vmatpush1.bf16.msra.mxu0 %v829
        %833 = vmatprep.subr.bf16.mxu0 0
        %834 = vmatpush1.bf16.msra.mxu0 0
        %835 = vmatprep.subr.bf16.mxu0 0
        %836 = vmatpush1.bf16.msra.mxu0 0
        %837 = vmatprep.subr.bf16.mxu0 0
        %838 = vmatpush1.bf16.msra.mxu0 0
        %839 = vmatprep.subr.bf16.mxu0 0
        %840 = vmatpush1.bf16.msra.mxu0 0
        %841 = vmatprep.subr.bf16.mxu0 0
        %842 = vmatpush1.bf16.msra.mxu0 0
        %843 = vmatprep.subr.bf16.mxu0 0
        %844 = vmatpush1.bf16.msra.mxu0 0
        %845 = vmatprep.subr.bf16.mxu0 0
        %846 = vmatpush1.bf16.msra.mxu0 0
        %847 = vmatprep.subr.bf16.mxu0 0
        %848 = vmatpush1.bf16.msra.mxu0 0
        %849 = vmatprep.subr.bf16.mxu0 0
        %850 = vmatpush1.bf16.msra.mxu0 0
        %851 = vmatprep.subr.bf16.mxu0 0
        %852 = vmatpush1.bf16.msra.mxu0 0
        %853 = vmatprep.subr.bf16.mxu0 0
        %854 = vmatpush1.bf16.msra.mxu0 0
        %855 = vmatprep.subr.bf16.mxu0 0
        %856 = vmatpush1.bf16.msra.mxu0 0
        %857 = vmatprep.subr.bf16.mxu0 0
        %858 = vmatpush1.bf16.msra.mxu0 0
        %859 = vmatprep.subr.bf16.mxu0 0
        %860 = vmatpush1.bf16.msra.mxu0 0
        %861 = vmatprep.subr.bf16.mxu0 0
        %862 = vmatpush1.bf16.msra.mxu0 0
        %863 = vmatprep.mubr.bf16.mxu0 0
        %864 = vmatmul.mubr.bf16.gmra.mrb[0].mxu0 %v805
        %v865 = vpop.f32.mrb[0].mxu0
        %v866 = vadd.f32 0.0, %v865
        %v867 = vpop.f32.mrb[0].mxu0
        %v868 = vpop.f32.mrb[0].mxu0
        %v869 = vadd.f32 0.0, %v868
        %v870 = vpop.f32.mrb[0].mxu0
        %871 = vmatprep.mubr.bf16.mxu0 0
        %872 = vmatmul.mubr.bf16.gmra.mrb[0].mxu0 %v808
        %v873 = vpop.f32.mrb[0].mxu0
        %v874 = vadd.f32 0.0, %v873
        %v875 = vpop.f32.mrb[0].mxu0
        %v876 = vpop.f32.mrb[0].mxu0
        %v877 = vadd.f32 0.0, %v876
        %v878 = vpop.f32.mrb[0].mxu0
        %879 = vmatprep.mubr.bf16.mxu0 0
        %880 = vmatmul.mubr.bf16.gmra.mrb[0].mxu0 %v811
        %v881 = vpop.f32.mrb[0].mxu0
        %v882 = vadd.f32 0.0, %v881
        %v883 = vpop.f32.mrb[0].mxu0
        %v884 = vpop.f32.mrb[0].mxu0
        %v885 = vadd.f32 0.0, %v884
        %v886 = vpop.f32.mrb[0].mxu0
        %887 = vmatprep.mubr.bf16.mxu0 0
        %888 = vmatmul.mubr.bf16.gmra.mrb[0].mxu0 %v814
        %v889 = vpop.f32.mrb[0].mxu0
        %v890 = vadd.f32 0.0, %v889
        %v891 = vpop.f32.mrb[0].mxu0
        %v892 = vpop.f32.mrb[0].mxu0
        %v893 = vadd.f32 0.0, %v892
        %v894 = vpop.f32.mrb[0].mxu0
        %895 = vmatprep.mubr.bf16.mxu0 0
        %896 = vmatmul.mubr.bf16.gmra.mrb[0].mxu0 %v817
        %v897 = vpop.f32.mrb[0].mxu0
        %v898 = vadd.f32 0.0, %v897
        %v899 = vpop.f32.mrb[0].mxu0
        %v900 = vpop.f32.mrb[0].mxu0
        %v901 = vadd.f32 0.0, %v900
        %v902 = vpop.f32.mrb[0].mxu0
        %903 = vmatprep.mubr.bf16.mxu0 0
        %904 = vmatmul.mubr.bf16.gmra.mrb[0].mxu0 %v820
        %v905 = vpop.f32.mrb[0].mxu0
        %v906 = vadd.f32 0.0, %v905
        %v907 = vpop.f32.mrb[0].mxu0
        %v908 = vpop.f32.mrb[0].mxu0
        %v909 = vadd.f32 0.0, %v908
        %v910 = vpop.f32.mrb[0].mxu0
        %911 = vmatprep.mubr.bf16.mxu0 0
        %912 = vmatmul.mubr.bf16.gmra.mrb[0].mxu0 %v823
        %v913 = vpop.f32.mrb[0].mxu0
        %v914 = vadd.f32 0.0, %v913
        %v915 = vpop.f32.mrb[0].mxu0
        %v916 = vpop.f32.mrb[0].mxu0
        %v917 = vadd.f32 0.0, %v916
        %v918 = vpop.f32.mrb[0].mxu0
        %919 = vmatprep.mubr.bf16.mxu0 0
        %920 = vmatmul.mubr.bf16.gmra.mrb[0].mxu0 %v826
        %v921 = vpop.f32.mrb[0].mxu0
        %v922 = vadd.f32 0.0, %v921
        %v923 = vpop.f32.mrb[0].mxu0
        %v924 = vpop.f32.mrb[0].mxu0
        %v925 = vadd.f32 0.0, %v924
        %v926 = vpop.f32.mrb[0].mxu0
        %927 = vdwg.mxu0
        %v928 = vadd.f32 %v635, %v866
        %v929 = vadd.f32 %v638, %v869
        %v930 = vadd.f32 %v643, %v874
        %v931 = vadd.f32 %v646, %v877
        %v932 = vadd.f32 %v651, %v882
        %v933 = vadd.f32 %v654, %v885
        %v934 = vadd.f32 %v659, %v890
        %v935 = vadd.f32 %v662, %v893
        %v936 = vadd.f32 %v667, %v898
        %v937 = vadd.f32 %v670, %v901
        %v938 = vadd.f32 %v675, %v906
        %v939 = vadd.f32 %v678, %v909
        %v940 = vadd.f32 %v683, %v914
        %v941 = vadd.f32 %v686, %v917
        %v942 = vadd.f32 %v691, %v922
        %v943 = vadd.f32 %v694, %v925
        %s944 = sadd.s32 %s157, 1
        %s945 = smul.u32 %s944, 3
        %s946 = smul.addr %s945, 4
        %s947 = scalar_lea.vmem %s136, %s946
        %v948 = vld [vmem:[%s947] sm:$0xf]
        %v949 = vld [vmem:[%s947 + $0x4] sm:$0xf]
        %v950 = vld [vmem:[%s947 + $0xc] sm:$0xf]
        %v951 = vld [vmem:[%s947 + $0x10] sm:$0xf]
        %v952 = vld [vmem:[%s947 + $0x18] sm:$0xf]
        %v953 = vld [vmem:[%s947 + $0x1c] sm:$0xf]
        %v954 = vld [vmem:[%s947 + $0x24] sm:$0xf]
        %v955 = vld [vmem:[%s947 + $0x28] sm:$0xf]
        %v956 = vld [vmem:[%s947 + $0x30] sm:$0xf]
        %v957 = vld [vmem:[%s947 + $0x34] sm:$0xf]
        %v958 = vld [vmem:[%s947 + $0x3c] sm:$0xf]
        %v959 = vld [vmem:[%s947 + $0x40] sm:$0xf]
        %v960 = vld [vmem:[%s947 + $0x48] sm:$0xf]
        %v961 = vld [vmem:[%s947 + $0x4c] sm:$0xf]
        %v962 = vld [vmem:[%s947 + $0x54] sm:$0xf]
        %v963 = vld [vmem:[%s947 + $0x58] sm:$0xf]
        %v980 = vunpack.c.l.b16 %v948
        %v981 = vunpack.c.l.b16 %v949
        %v982 = vunpack.c.l.b16 %v950
        %v983 = vunpack.c.l.b16 %v951
        %v984 = vunpack.c.l.b16 %v952
        %v985 = vunpack.c.l.b16 %v953
        %v986 = vunpack.c.l.b16 %v954
        %v987 = vunpack.c.l.b16 %v955
        %v988 = vunpack.c.l.b16 %v956
        %v989 = vunpack.c.l.b16 %v957
        %v990 = vunpack.c.l.b16 %v958
        %v991 = vunpack.c.l.b16 %v959
        %v992 = vunpack.c.l.b16 %v960
        %v993 = vunpack.c.l.b16 %v961
        %v994 = vunpack.c.l.b16 %v962
        %v995 = vunpack.c.l.b16 %v963
        %v996 = vpack.c.b16 %v981, %v980
        %v997 = vpack.c.b16 %v983, %v982
        %v998 = vpack.c.b16 %v985, %v984
        %v999 = vpack.c.b16 %v987, %v986
        %v1000 = vpack.c.b16 %v989, %v988
        %v1001 = vpack.c.b16 %v991, %v990
        %v1002 = vpack.c.b16 %v993, %v992
        %v1003 = vpack.c.b16 %v995, %v994
        %v1005 = vsel %vm404, %v996, 0
        %v1008 = vsel %vm404, %v997, 0
        %v1011 = vsel %vm404, %v998, 0
        %v1014 = vsel %vm404, %v999, 0
        %v1017 = vsel %vm404, %v1000, 0
        %v1020 = vsel %vm404, %v1001, 0
        %v1023 = vsel %vm404, %v1002, 0
        %v1026 = vsel %vm404, %v1003, 0
        %v1029 = vand.u32 %v144, %v432
        %1031 = vmatprep.subr.bf16.mxu0 0
        %1032 = vmatpush1.bf16.msra.mxu0 %v1029
        %1033 = vmatprep.subr.bf16.mxu0 0
        %1034 = vmatpush1.bf16.msra.mxu0 0
        %1035 = vmatprep.subr.bf16.mxu0 0
        %1036 = vmatpush1.bf16.msra.mxu0 0
        %1037 = vmatprep.subr.bf16.mxu0 0
        %1038 = vmatpush1.bf16.msra.mxu0 0
        %1039 = vmatprep.subr.bf16.mxu0 0
        %1040 = vmatpush1.bf16.msra.mxu0 0
        %1041 = vmatprep.subr.bf16.mxu0 0
        %1042 = vmatpush1.bf16.msra.mxu0 0
        %1043 = vmatprep.subr.bf16.mxu0 0
        %1044 = vmatpush1.bf16.msra.mxu0 0
        %1045 = vmatprep.subr.bf16.mxu0 0
        %1046 = vmatpush1.bf16.msra.mxu0 0
        %1047 = vmatprep.subr.bf16.mxu0 0
        %1048 = vmatpush1.bf16.msra.mxu0 0
        %1049 = vmatprep.subr.bf16.mxu0 0
        %1050 = vmatpush1.bf16.msra.mxu0 0
        %1051 = vmatprep.subr.bf16.mxu0 0
        %1052 = vmatpush1.bf16.msra.mxu0 0
        %1053 = vmatprep.subr.bf16.mxu0 0
        %1054 = vmatpush1.bf16.msra.mxu0 0
        %1055 = vmatprep.subr.bf16.mxu0 0
        %1056 = vmatpush1.bf16.msra.mxu0 0
        %1057 = vmatprep.subr.bf16.mxu0 0
        %1058 = vmatpush1.bf16.msra.mxu0 0
        %1059 = vmatprep.subr.bf16.mxu0 0
        %1060 = vmatpush1.bf16.msra.mxu0 0
        %1061 = vmatprep.subr.bf16.mxu0 0
        %1062 = vmatpush1.bf16.msra.mxu0 0
        %1063 = vmatprep.mubr.bf16.mxu0 0
        %1064 = vmatmul.mubr.bf16.gmra.mrb[0].mxu0 %v1005
        %v1065 = vpop.f32.mrb[0].mxu0
        %v1066 = vadd.f32 0.0, %v1065
        %v1067 = vpop.f32.mrb[0].mxu0
        %v1068 = vpop.f32.mrb[0].mxu0
        %v1069 = vadd.f32 0.0, %v1068
        %v1070 = vpop.f32.mrb[0].mxu0
        %1071 = vmatprep.mubr.bf16.mxu0 0
        %1072 = vmatmul.mubr.bf16.gmra.mrb[0].mxu0 %v1008
        %v1073 = vpop.f32.mrb[0].mxu0
        %v1074 = vadd.f32 0.0, %v1073
        %v1075 = vpop.f32.mrb[0].mxu0
        %v1076 = vpop.f32.mrb[0].mxu0
        %v1077 = vadd.f32 0.0, %v1076
        %v1078 = vpop.f32.mrb[0].mxu0
        %1079 = vmatprep.mubr.bf16.mxu0 0
        %1080 = vmatmul.mubr.bf16.gmra.mrb[0].mxu0 %v1011
        %v1081 = vpop.f32.mrb[0].mxu0
        %v1082 = vadd.f32 0.0, %v1081
        %v1083 = vpop.f32.mrb[0].mxu0
        %v1084 = vpop.f32.mrb[0].mxu0
        %v1085 = vadd.f32 0.0, %v1084
        %v1086 = vpop.f32.mrb[0].mxu0
        %1087 = vmatprep.mubr.bf16.mxu0 0
        %1088 = vmatmul.mubr.bf16.gmra.mrb[0].mxu0 %v1014
        %v1089 = vpop.f32.mrb[0].mxu0
        %v1090 = vadd.f32 0.0, %v1089
        %v1091 = vpop.f32.mrb[0].mxu0
        %v1092 = vpop.f32.mrb[0].mxu0
        %v1093 = vadd.f32 0.0, %v1092
        %v1094 = vpop.f32.mrb[0].mxu0
        %1095 = vmatprep.mubr.bf16.mxu0 0
        %1096 = vmatmul.mubr.bf16.gmra.mrb[0].mxu0 %v1017
        %v1097 = vpop.f32.mrb[0].mxu0
        %v1098 = vadd.f32 0.0, %v1097
        %v1099 = vpop.f32.mrb[0].mxu0
        %v1100 = vpop.f32.mrb[0].mxu0
        %v1101 = vadd.f32 0.0, %v1100
        %v1102 = vpop.f32.mrb[0].mxu0
        %1103 = vmatprep.mubr.bf16.mxu0 0
        %1104 = vmatmul.mubr.bf16.gmra.mrb[0].mxu0 %v1020
        %v1105 = vpop.f32.mrb[0].mxu0
        %v1106 = vadd.f32 0.0, %v1105
        %v1107 = vpop.f32.mrb[0].mxu0
        %v1108 = vpop.f32.mrb[0].mxu0
        %v1109 = vadd.f32 0.0, %v1108
        %v1110 = vpop.f32.mrb[0].mxu0
        %1111 = vmatprep.mubr.bf16.mxu0 0
        %1112 = vmatmul.mubr.bf16.gmra.mrb[0].mxu0 %v1023
        %v1113 = vpop.f32.mrb[0].mxu0
        %v1114 = vadd.f32 0.0, %v1113
        %v1115 = vpop.f32.mrb[0].mxu0
        %v1116 = vpop.f32.mrb[0].mxu0
        %v1117 = vadd.f32 0.0, %v1116
        %v1118 = vpop.f32.mrb[0].mxu0
        %1119 = vmatprep.mubr.bf16.mxu0 0
        %1120 = vmatmul.mubr.bf16.gmra.mrb[0].mxu0 %v1026
        %v1121 = vpop.f32.mrb[0].mxu0
        %v1122 = vadd.f32 0.0, %v1121
        %v1123 = vpop.f32.mrb[0].mxu0
        %v1124 = vpop.f32.mrb[0].mxu0
        %v1125 = vadd.f32 0.0, %v1124
        %v1126 = vpop.f32.mrb[0].mxu0
        %1127 = vdwg.mxu0
        %v1128 = vadd.f32 %v928, %v1066
        %v1129 = vadd.f32 %v929, %v1069
        %v1130 = vadd.f32 %v930, %v1074
        %v1131 = vadd.f32 %v931, %v1077
        %v1132 = vadd.f32 %v932, %v1082
        %v1133 = vadd.f32 %v933, %v1085
        %v1134 = vadd.f32 %v934, %v1090
        %v1135 = vadd.f32 %v935, %v1093
        %v1136 = vadd.f32 %v936, %v1098
        %v1137 = vadd.f32 %v937, %v1101
        %v1138 = vadd.f32 %v938, %v1106
        %v1139 = vadd.f32 %v939, %v1109
        %v1140 = vadd.f32 %v940, %v1114
        %v1141 = vadd.f32 %v941, %v1117
        %v1142 = vadd.f32 %v942, %v1122
        %v1143 = vadd.f32 %v943, %v1125
        %v1144 = vld [vmem:[%s947] sm:$0xf]
        %v1145 = vld [vmem:[%s947 + $0x4] sm:$0xf]
        %v1146 = vld [vmem:[%s947 + $0x8] sm:$0x1]
        %v1147 = vld [vmem:[%s947 + $0xc] sm:$0xf]
        %v1148 = vld [vmem:[%s947 + $0x10] sm:$0xf]
        %v1149 = vld [vmem:[%s947 + $0x14] sm:$0x1]
        %v1150 = vld [vmem:[%s947 + $0x18] sm:$0xf]
        %v1151 = vld [vmem:[%s947 + $0x1c] sm:$0xf]
        %v1152 = vld [vmem:[%s947 + $0x20] sm:$0x1]
        %v1153 = vld [vmem:[%s947 + $0x24] sm:$0xf]
        %v1154 = vld [vmem:[%s947 + $0x28] sm:$0xf]
        %v1155 = vld [vmem:[%s947 + $0x2c] sm:$0x1]
        %v1156 = vld [vmem:[%s947 + $0x30] sm:$0xf]
        %v1157 = vld [vmem:[%s947 + $0x34] sm:$0xf]
        %v1158 = vld [vmem:[%s947 + $0x38] sm:$0x1]
        %v1159 = vld [vmem:[%s947 + $0x3c] sm:$0xf]
        %v1160 = vld [vmem:[%s947 + $0x40] sm:$0xf]
        %v1161 = vld [vmem:[%s947 + $0x44] sm:$0x1]
        %v1162 = vld [vmem:[%s947 + $0x48] sm:$0xf]
        %v1163 = vld [vmem:[%s947 + $0x4c] sm:$0xf]
        %v1164 = vld [vmem:[%s947 + $0x50] sm:$0x1]
        %v1165 = vld [vmem:[%s947 + $0x54] sm:$0xf]
        %v1166 = vld [vmem:[%s947 + $0x58] sm:$0xf]
        %v1167 = vld [vmem:[%s947 + $0x5c] sm:$0x1]
        %v1169 = vshrl.u32 %v1144, 16
        %v1171 = vrot.slane %v1169, 4
        %v1172 = vshll.u32 %v1144, 16
        %v1174 = vrot.slane %v1172, 5
        %v1175 = vor.u32 %v1171, %v1174
        %v1176 = vrot.slane %v1175, 4
        %v1178 = vshll.u32 %v1145, 16
        %v1180 = vrot.slane %v1178, 5
        %v1181 = vsel %vm187, %v1176, %v1180
        %v1182 = vshrl.u32 %v1145, 16
        %v1184 = vrot.slane %v1182, 4
        %v1185 = vor.u32 %v1184, %v1180
        %v1186 = vrot.slane %v1185, 4
        %v1188 = vshll.u32 %v1146, 16
        %v1190 = vrot.slane %v1188, 5
        %v1191 = vsel %vm187, %v1186, %v1190
        %v1193 = vshrl.u32 %v1147, 16
        %v1195 = vrot.slane %v1193, 4
        %v1196 = vshll.u32 %v1147, 16
        %v1198 = vrot.slane %v1196, 5
        %v1199 = vor.u32 %v1195, %v1198
        %v1200 = vrot.slane %v1199, 4
        %v1202 = vshll.u32 %v1148, 16
        %v1204 = vrot.slane %v1202, 5
        %v1205 = vsel %vm187, %v1200, %v1204
        %v1206 = vshrl.u32 %v1148, 16
        %v1208 = vrot.slane %v1206, 4
        %v1209 = vor.u32 %v1208, %v1204
        %v1210 = vrot.slane %v1209, 4
        %v1212 = vshll.u32 %v1149, 16
        %v1214 = vrot.slane %v1212, 5
        %v1215 = vsel %vm187, %v1210, %v1214
        %v1217 = vshrl.u32 %v1150, 16
        %v1219 = vrot.slane %v1217, 4
        %v1220 = vshll.u32 %v1150, 16
        %v1222 = vrot.slane %v1220, 5
        %v1223 = vor.u32 %v1219, %v1222
        %v1224 = vrot.slane %v1223, 4
        %v1226 = vshll.u32 %v1151, 16
        %v1228 = vrot.slane %v1226, 5
        %v1229 = vsel %vm187, %v1224, %v1228
        %v1230 = vshrl.u32 %v1151, 16
        %v1232 = vrot.slane %v1230, 4
        %v1233 = vor.u32 %v1232, %v1228
        %v1234 = vrot.slane %v1233, 4
        %v1236 = vshll.u32 %v1152, 16
        %v1238 = vrot.slane %v1236, 5
        %v1239 = vsel %vm187, %v1234, %v1238
        %v1241 = vshrl.u32 %v1153, 16
        %v1243 = vrot.slane %v1241, 4
        %v1244 = vshll.u32 %v1153, 16
        %v1246 = vrot.slane %v1244, 5
        %v1247 = vor.u32 %v1243, %v1246
        %v1248 = vrot.slane %v1247, 4
        %v1250 = vshll.u32 %v1154, 16
        %v1252 = vrot.slane %v1250, 5
        %v1253 = vsel %vm187, %v1248, %v1252
        %v1254 = vshrl.u32 %v1154, 16
        %v1256 = vrot.slane %v1254, 4
        %v1257 = vor.u32 %v1256, %v1252
        %v1258 = vrot.slane %v1257, 4
        %v1260 = vshll.u32 %v1155, 16
        %v1262 = vrot.slane %v1260, 5
        %v1263 = vsel %vm187, %v1258, %v1262
        %v1265 = vshrl.u32 %v1156, 16
        %v1267 = vrot.slane %v1265, 4
        %v1268 = vshll.u32 %v1156, 16
        %v1270 = vrot.slane %v1268, 5
        %v1271 = vor.u32 %v1267, %v1270
        %v1272 = vrot.slane %v1271, 4
        %v1274 = vshll.u32 %v1157, 16
        %v1276 = vrot.slane %v1274, 5
        %v1277 = vsel %vm187, %v1272, %v1276
        %v1278 = vshrl.u32 %v1157, 16
        %v1280 = vrot.slane %v1278, 4
        %v1281 = vor.u32 %v1280, %v1276
        %v1282 = vrot.slane %v1281, 4
        %v1284 = vshll.u32 %v1158, 16
        %v1286 = vrot.slane %v1284, 5
        %v1287 = vsel %vm187, %v1282, %v1286
        %v1289 = vshrl.u32 %v1159, 16
        %v1291 = vrot.slane %v1289, 4
        %v1292 = vshll.u32 %v1159, 16
        %v1294 = vrot.slane %v1292, 5
        %v1295 = vor.u32 %v1291, %v1294
        %v1296 = vrot.slane %v1295, 4
        %v1298 = vshll.u32 %v1160, 16
        %v1300 = vrot.slane %v1298, 5
        %v1301 = vsel %vm187, %v1296, %v1300
        %v1302 = vshrl.u32 %v1160, 16
        %v1304 = vrot.slane %v1302, 4
        %v1305 = vor.u32 %v1304, %v1300
        %v1306 = vrot.slane %v1305, 4
        %v1308 = vshll.u32 %v1161, 16
        %v1310 = vrot.slane %v1308, 5
        %v1311 = vsel %vm187, %v1306, %v1310
        %v1313 = vshrl.u32 %v1162, 16
        %v1315 = vrot.slane %v1313, 4
        %v1316 = vshll.u32 %v1162, 16
        %v1318 = vrot.slane %v1316, 5
        %v1319 = vor.u32 %v1315, %v1318
        %v1320 = vrot.slane %v1319, 4
        %v1322 = vshll.u32 %v1163, 16
        %v1324 = vrot.slane %v1322, 5
        %v1325 = vsel %vm187, %v1320, %v1324
        %v1326 = vshrl.u32 %v1163, 16
        %v1328 = vrot.slane %v1326, 4
        %v1329 = vor.u32 %v1328, %v1324
        %v1330 = vrot.slane %v1329, 4
        %v1332 = vshll.u32 %v1164, 16
        %v1334 = vrot.slane %v1332, 5
        %v1335 = vsel %vm187, %v1330, %v1334
        %v1337 = vshrl.u32 %v1165, 16
        %v1339 = vrot.slane %v1337, 4
        %v1340 = vshll.u32 %v1165, 16
        %v1342 = vrot.slane %v1340, 5
        %v1343 = vor.u32 %v1339, %v1342
        %v1344 = vrot.slane %v1343, 4
        %v1346 = vshll.u32 %v1166, 16
        %v1348 = vrot.slane %v1346, 5
        %v1349 = vsel %vm187, %v1344, %v1348
        %v1350 = vshrl.u32 %v1166, 16
        %v1352 = vrot.slane %v1350, 4
        %v1353 = vor.u32 %v1352, %v1348
        %v1354 = vrot.slane %v1353, 4
        %v1356 = vshll.u32 %v1167, 16
        %v1358 = vrot.slane %v1356, 5
        %v1359 = vsel %vm187, %v1354, %v1358
        %v1360 = vunpack.c.l.b16 %v1181
        %v1361 = vunpack.c.l.b16 %v1191
        %v1362 = vunpack.c.l.b16 %v1205
        %v1363 = vunpack.c.l.b16 %v1215
        %v1364 = vunpack.c.l.b16 %v1229
        %v1365 = vunpack.c.l.b16 %v1239
        %v1366 = vunpack.c.l.b16 %v1253
        %v1367 = vunpack.c.l.b16 %v1263
        %v1368 = vunpack.c.l.b16 %v1277
        %v1369 = vunpack.c.l.b16 %v1287
        %v1370 = vunpack.c.l.b16 %v1301
        %v1371 = vunpack.c.l.b16 %v1311
        %v1372 = vunpack.c.l.b16 %v1325
        %v1373 = vunpack.c.l.b16 %v1335
        %v1374 = vunpack.c.l.b16 %v1349
        %v1375 = vunpack.c.l.b16 %v1359
        %v1376 = vpack.c.b16 %v1361, %v1360
        %v1377 = vpack.c.b16 %v1363, %v1362
        %v1378 = vpack.c.b16 %v1365, %v1364
        %v1379 = vpack.c.b16 %v1367, %v1366
        %v1380 = vpack.c.b16 %v1369, %v1368
        %v1381 = vpack.c.b16 %v1371, %v1370
        %v1382 = vpack.c.b16 %v1373, %v1372
        %v1383 = vpack.c.b16 %v1375, %v1374
        %v1385 = vsel %vm404, %v1376, 0
        %v1388 = vsel %vm404, %v1377, 0
        %v1391 = vsel %vm404, %v1378, 0
        %v1394 = vsel %vm404, %v1379, 0
        %v1397 = vsel %vm404, %v1380, 0
        %v1400 = vsel %vm404, %v1381, 0
        %v1403 = vsel %vm404, %v1382, 0
        %v1406 = vsel %vm404, %v1383, 0
        %v1409 = vand.u32 %v145, %v432
        %1411 = vmatprep.subr.bf16.mxu0 0
        %1412 = vmatpush1.bf16.msra.mxu0 %v1409
        %1413 = vmatprep.subr.bf16.mxu0 0
        %1414 = vmatpush1.bf16.msra.mxu0 0
        %1415 = vmatprep.subr.bf16.mxu0 0
        %1416 = vmatpush1.bf16.msra.mxu0 0
        %1417 = vmatprep.subr.bf16.mxu0 0
        %1418 = vmatpush1.bf16.msra.mxu0 0
        %1419 = vmatprep.subr.bf16.mxu0 0
        %1420 = vmatpush1.bf16.msra.mxu0 0
        %1421 = vmatprep.subr.bf16.mxu0 0
        %1422 = vmatpush1.bf16.msra.mxu0 0
        %1423 = vmatprep.subr.bf16.mxu0 0
        %1424 = vmatpush1.bf16.msra.mxu0 0
        %1425 = vmatprep.subr.bf16.mxu0 0
        %1426 = vmatpush1.bf16.msra.mxu0 0
        %1427 = vmatprep.subr.bf16.mxu0 0
        %1428 = vmatpush1.bf16.msra.mxu0 0
        %1429 = vmatprep.subr.bf16.mxu0 0
        %1430 = vmatpush1.bf16.msra.mxu0 0
        %1431 = vmatprep.subr.bf16.mxu0 0
        %1432 = vmatpush1.bf16.msra.mxu0 0
        %1433 = vmatprep.subr.bf16.mxu0 0
        %1434 = vmatpush1.bf16.msra.mxu0 0
        %1435 = vmatprep.subr.bf16.mxu0 0
        %1436 = vmatpush1.bf16.msra.mxu0 0
        %1437 = vmatprep.subr.bf16.mxu0 0
        %1438 = vmatpush1.bf16.msra.mxu0 0
        %1439 = vmatprep.subr.bf16.mxu0 0
        %1440 = vmatpush1.bf16.msra.mxu0 0
        %1441 = vmatprep.subr.bf16.mxu0 0
        %1442 = vmatpush1.bf16.msra.mxu0 0
        %1443 = vmatprep.mubr.bf16.mxu0 0
        %1444 = vmatmul.mubr.bf16.gmra.mrb[0].mxu0 %v1385
        %v1445 = vpop.f32.mrb[0].mxu0
        %v1446 = vadd.f32 0.0, %v1445
        %v1447 = vpop.f32.mrb[0].mxu0
        %v1448 = vpop.f32.mrb[0].mxu0
        %v1449 = vadd.f32 0.0, %v1448
        %v1450 = vpop.f32.mrb[0].mxu0
        %1451 = vmatprep.mubr.bf16.mxu0 0
        %1452 = vmatmul.mubr.bf16.gmra.mrb[0].mxu0 %v1388
        %v1453 = vpop.f32.mrb[0].mxu0
        %v1454 = vadd.f32 0.0, %v1453
        %v1455 = vpop.f32.mrb[0].mxu0
        %v1456 = vpop.f32.mrb[0].mxu0
        %v1457 = vadd.f32 0.0, %v1456
        %v1458 = vpop.f32.mrb[0].mxu0
        %1459 = vmatprep.mubr.bf16.mxu0 0
        %1460 = vmatmul.mubr.bf16.gmra.mrb[0].mxu0 %v1391
        %v1461 = vpop.f32.mrb[0].mxu0
        %v1462 = vadd.f32 0.0, %v1461
        %v1463 = vpop.f32.mrb[0].mxu0
        %v1464 = vpop.f32.mrb[0].mxu0
        %v1465 = vadd.f32 0.0, %v1464
        %v1466 = vpop.f32.mrb[0].mxu0
        %1467 = vmatprep.mubr.bf16.mxu0 0
        %1468 = vmatmul.mubr.bf16.gmra.mrb[0].mxu0 %v1394
        %v1469 = vpop.f32.mrb[0].mxu0
        %v1470 = vadd.f32 0.0, %v1469
        %v1471 = vpop.f32.mrb[0].mxu0
        %v1472 = vpop.f32.mrb[0].mxu0
        %v1473 = vadd.f32 0.0, %v1472
        %v1474 = vpop.f32.mrb[0].mxu0
        %1475 = vmatprep.mubr.bf16.mxu0 0
        %1476 = vmatmul.mubr.bf16.gmra.mrb[0].mxu0 %v1397
        %v1477 = vpop.f32.mrb[0].mxu0
        %v1478 = vadd.f32 0.0, %v1477
        %v1479 = vpop.f32.mrb[0].mxu0
        %v1480 = vpop.f32.mrb[0].mxu0
        %v1481 = vadd.f32 0.0, %v1480
        %v1482 = vpop.f32.mrb[0].mxu0
        %1483 = vmatprep.mubr.bf16.mxu0 0
        %1484 = vmatmul.mubr.bf16.gmra.mrb[0].mxu0 %v1400
        %v1485 = vpop.f32.mrb[0].mxu0
        %v1486 = vadd.f32 0.0, %v1485
        %v1487 = vpop.f32.mrb[0].mxu0
        %v1488 = vpop.f32.mrb[0].mxu0
        %v1489 = vadd.f32 0.0, %v1488
        %v1490 = vpop.f32.mrb[0].mxu0
        %1491 = vmatprep.mubr.bf16.mxu0 0
        %1492 = vmatmul.mubr.bf16.gmra.mrb[0].mxu0 %v1403
        %v1493 = vpop.f32.mrb[0].mxu0
        %v1494 = vadd.f32 0.0, %v1493
        %v1495 = vpop.f32.mrb[0].mxu0
        %v1496 = vpop.f32.mrb[0].mxu0
        %v1497 = vadd.f32 0.0, %v1496
        %v1498 = vpop.f32.mrb[0].mxu0
        %1499 = vmatprep.mubr.bf16.mxu0 0
        %1500 = vmatmul.mubr.bf16.gmra.mrb[0].mxu0 %v1406
        %v1501 = vpop.f32.mrb[0].mxu0
        %v1502 = vadd.f32 0.0, %v1501
        %v1503 = vpop.f32.mrb[0].mxu0
        %v1504 = vpop.f32.mrb[0].mxu0
        %v1505 = vadd.f32 0.0, %v1504
        %v1506 = vpop.f32.mrb[0].mxu0
        %1507 = vdwg.mxu0
        %v1508 = vadd.f32 %v1128, %v1446
        %v1509 = vadd.f32 %v1129, %v1449
        %v1510 = vadd.f32 %v1130, %v1454
        %v1511 = vadd.f32 %v1131, %v1457
        %v1512 = vadd.f32 %v1132, %v1462
        %v1513 = vadd.f32 %v1133, %v1465
        %v1514 = vadd.f32 %v1134, %v1470
        %v1515 = vadd.f32 %v1135, %v1473
        %v1516 = vadd.f32 %v1136, %v1478
        %v1517 = vadd.f32 %v1137, %v1481
        %v1518 = vadd.f32 %v1138, %v1486
        %v1519 = vadd.f32 %v1139, %v1489
        %v1520 = vadd.f32 %v1140, %v1494
        %v1521 = vadd.f32 %v1141, %v1497
        %v1522 = vadd.f32 %v1142, %v1502
        %v1523 = vadd.f32 %v1143, %v1505
        %v1524 = vld [vmem:[%s947] sm:$0xe]
        %v1525 = vld [vmem:[%s947 + $0xc] sm:$0xe]
        %v1526 = vld [vmem:[%s947 + $0x18] sm:$0xe]
        %v1527 = vld [vmem:[%s947 + $0x24] sm:$0xe]
        %v1528 = vld [vmem:[%s947 + $0x30] sm:$0xe]
        %v1529 = vld [vmem:[%s947 + $0x3c] sm:$0xe]
        %v1530 = vld [vmem:[%s947 + $0x48] sm:$0xe]
        %v1531 = vld [vmem:[%s947 + $0x54] sm:$0xe]
        %v1556 = vrot.slane %v1524, 5
        %v1557 = vrot.slane %v1556, 4
        %v1558 = vrot.slane %v1145, 5
        %v1559 = vsel %vm723, %v1557, %v1558
        %v1560 = vrot.slane %v1558, 4
        %v1561 = vrot.slane %v1146, 5
        %v1562 = vsel %vm723, %v1560, %v1561
        %v1563 = vrot.slane %v1525, 5
        %v1564 = vrot.slane %v1563, 4
        %v1565 = vrot.slane %v1148, 5
        %v1566 = vsel %vm723, %v1564, %v1565
        %v1567 = vrot.slane %v1565, 4
        %v1568 = vrot.slane %v1149, 5
        %v1569 = vsel %vm723, %v1567, %v1568
        %v1570 = vrot.slane %v1526, 5
        %v1571 = vrot.slane %v1570, 4
        %v1572 = vrot.slane %v1151, 5
        %v1573 = vsel %vm723, %v1571, %v1572
        %v1574 = vrot.slane %v1572, 4
        %v1575 = vrot.slane %v1152, 5
        %v1576 = vsel %vm723, %v1574, %v1575
        %v1577 = vrot.slane %v1527, 5
        %v1578 = vrot.slane %v1577, 4
        %v1579 = vrot.slane %v1154, 5
        %v1580 = vsel %vm723, %v1578, %v1579
        %v1581 = vrot.slane %v1579, 4
        %v1582 = vrot.slane %v1155, 5
        %v1583 = vsel %vm723, %v1581, %v1582
        %v1584 = vrot.slane %v1528, 5
        %v1585 = vrot.slane %v1584, 4
        %v1586 = vrot.slane %v1157, 5
        %v1587 = vsel %vm723, %v1585, %v1586
        %v1588 = vrot.slane %v1586, 4
        %v1589 = vrot.slane %v1158, 5
        %v1590 = vsel %vm723, %v1588, %v1589
        %v1591 = vrot.slane %v1529, 5
        %v1592 = vrot.slane %v1591, 4
        %v1593 = vrot.slane %v1160, 5
        %v1594 = vsel %vm723, %v1592, %v1593
        %v1595 = vrot.slane %v1593, 4
        %v1596 = vrot.slane %v1161, 5
        %v1597 = vsel %vm723, %v1595, %v1596
        %v1598 = vrot.slane %v1530, 5
        %v1599 = vrot.slane %v1598, 4
        %v1600 = vrot.slane %v1163, 5
        %v1601 = vsel %vm723, %v1599, %v1600
        %v1602 = vrot.slane %v1600, 4
        %v1603 = vrot.slane %v1164, 5
        %v1604 = vsel %vm723, %v1602, %v1603
        %v1605 = vrot.slane %v1531, 5
        %v1606 = vrot.slane %v1605, 4
        %v1607 = vrot.slane %v1166, 5
        %v1608 = vsel %vm723, %v1606, %v1607
        %v1609 = vrot.slane %v1607, 4
        %v1610 = vrot.slane %v1167, 5
        %v1611 = vsel %vm723, %v1609, %v1610
        %v1612 = vunpack.c.l.b16 %v1559
        %v1613 = vunpack.c.l.b16 %v1562
        %v1614 = vunpack.c.l.b16 %v1566
        %v1615 = vunpack.c.l.b16 %v1569
        %v1616 = vunpack.c.l.b16 %v1573
        %v1617 = vunpack.c.l.b16 %v1576
        %v1618 = vunpack.c.l.b16 %v1580
        %v1619 = vunpack.c.l.b16 %v1583
        %v1620 = vunpack.c.l.b16 %v1587
        %v1621 = vunpack.c.l.b16 %v1590
        %v1622 = vunpack.c.l.b16 %v1594
        %v1623 = vunpack.c.l.b16 %v1597
        %v1624 = vunpack.c.l.b16 %v1601
        %v1625 = vunpack.c.l.b16 %v1604
        %v1626 = vunpack.c.l.b16 %v1608
        %v1627 = vunpack.c.l.b16 %v1611
        %v1628 = vpack.c.b16 %v1613, %v1612
        %v1629 = vpack.c.b16 %v1615, %v1614
        %v1630 = vpack.c.b16 %v1617, %v1616
        %v1631 = vpack.c.b16 %v1619, %v1618
        %v1632 = vpack.c.b16 %v1621, %v1620
        %v1633 = vpack.c.b16 %v1623, %v1622
        %v1634 = vpack.c.b16 %v1625, %v1624
        %v1635 = vpack.c.b16 %v1627, %v1626
        %v1637 = vsel %vm404, %v1628, 0
        %v1640 = vsel %vm404, %v1629, 0
        %v1643 = vsel %vm404, %v1630, 0
        %v1646 = vsel %vm404, %v1631, 0
        %v1649 = vsel %vm404, %v1632, 0
        %v1652 = vsel %vm404, %v1633, 0
        %v1655 = vsel %vm404, %v1634, 0
        %v1658 = vsel %vm404, %v1635, 0
        %v1661 = vand.u32 %v146, %v432
        %1663 = vmatprep.subr.bf16.mxu0 0
        %1664 = vmatpush1.bf16.msra.mxu0 %v1661
        %1665 = vmatprep.subr.bf16.mxu0 0
        %1666 = vmatpush1.bf16.msra.mxu0 0
        %1667 = vmatprep.subr.bf16.mxu0 0
        %1668 = vmatpush1.bf16.msra.mxu0 0
        %1669 = vmatprep.subr.bf16.mxu0 0
        %1670 = vmatpush1.bf16.msra.mxu0 0
        %1671 = vmatprep.subr.bf16.mxu0 0
        %1672 = vmatpush1.bf16.msra.mxu0 0
        %1673 = vmatprep.subr.bf16.mxu0 0
        %1674 = vmatpush1.bf16.msra.mxu0 0
        %1675 = vmatprep.subr.bf16.mxu0 0
        %1676 = vmatpush1.bf16.msra.mxu0 0
        %1677 = vmatprep.subr.bf16.mxu0 0
        %1678 = vmatpush1.bf16.msra.mxu0 0
        %1679 = vmatprep.subr.bf16.mxu0 0
        %1680 = vmatpush1.bf16.msra.mxu0 0
        %1681 = vmatprep.subr.bf16.mxu0 0
        %1682 = vmatpush1.bf16.msra.mxu0 0
        %1683 = vmatprep.subr.bf16.mxu0 0
        %1684 = vmatpush1.bf16.msra.mxu0 0
        %1685 = vmatprep.subr.bf16.mxu0 0
        %1686 = vmatpush1.bf16.msra.mxu0 0
        %1687 = vmatprep.subr.bf16.mxu0 0
        %1688 = vmatpush1.bf16.msra.mxu0 0
        %1689 = vmatprep.subr.bf16.mxu0 0
        %1690 = vmatpush1.bf16.msra.mxu0 0
        %1691 = vmatprep.subr.bf16.mxu0 0
        %1692 = vmatpush1.bf16.msra.mxu0 0
        %1693 = vmatprep.subr.bf16.mxu0 0
        %1694 = vmatpush1.bf16.msra.mxu0 0
        %1695 = vmatprep.mubr.bf16.mxu0 0
        %1696 = vmatmul.mubr.bf16.gmra.mrb[0].mxu0 %v1637
        %v1697 = vpop.f32.mrb[0].mxu0
        %v1698 = vadd.f32 0.0, %v1697
        %v1699 = vpop.f32.mrb[0].mxu0
        %v1700 = vpop.f32.mrb[0].mxu0
        %v1701 = vadd.f32 0.0, %v1700
        %v1702 = vpop.f32.mrb[0].mxu0
        %1703 = vmatprep.mubr.bf16.mxu0 0
        %1704 = vmatmul.mubr.bf16.gmra.mrb[0].mxu0 %v1640
        %v1705 = vpop.f32.mrb[0].mxu0
        %v1706 = vadd.f32 0.0, %v1705
        %v1707 = vpop.f32.mrb[0].mxu0
        %v1708 = vpop.f32.mrb[0].mxu0
        %v1709 = vadd.f32 0.0, %v1708
        %v1710 = vpop.f32.mrb[0].mxu0
        %1711 = vmatprep.mubr.bf16.mxu0 0
        %1712 = vmatmul.mubr.bf16.gmra.mrb[0].mxu0 %v1643
        %v1713 = vpop.f32.mrb[0].mxu0
        %v1714 = vadd.f32 0.0, %v1713
        %v1715 = vpop.f32.mrb[0].mxu0
        %v1716 = vpop.f32.mrb[0].mxu0
        %v1717 = vadd.f32 0.0, %v1716
        %v1718 = vpop.f32.mrb[0].mxu0
        %1719 = vmatprep.mubr.bf16.mxu0 0
        %1720 = vmatmul.mubr.bf16.gmra.mrb[0].mxu0 %v1646
        %v1721 = vpop.f32.mrb[0].mxu0
        %v1722 = vadd.f32 0.0, %v1721
        %v1723 = vpop.f32.mrb[0].mxu0
        %v1724 = vpop.f32.mrb[0].mxu0
        %v1725 = vadd.f32 0.0, %v1724
        %v1726 = vpop.f32.mrb[0].mxu0
        %1727 = vmatprep.mubr.bf16.mxu0 0
        %1728 = vmatmul.mubr.bf16.gmra.mrb[0].mxu0 %v1649
        %v1729 = vpop.f32.mrb[0].mxu0
        %v1730 = vadd.f32 0.0, %v1729
        %v1731 = vpop.f32.mrb[0].mxu0
        %v1732 = vpop.f32.mrb[0].mxu0
        %v1733 = vadd.f32 0.0, %v1732
        %v1734 = vpop.f32.mrb[0].mxu0
        %1735 = vmatprep.mubr.bf16.mxu0 0
        %1736 = vmatmul.mubr.bf16.gmra.mrb[0].mxu0 %v1652
        %v1737 = vpop.f32.mrb[0].mxu0
        %v1738 = vadd.f32 0.0, %v1737
        %v1739 = vpop.f32.mrb[0].mxu0
        %v1740 = vpop.f32.mrb[0].mxu0
        %v1741 = vadd.f32 0.0, %v1740
        %v1742 = vpop.f32.mrb[0].mxu0
        %1743 = vmatprep.mubr.bf16.mxu0 0
        %1744 = vmatmul.mubr.bf16.gmra.mrb[0].mxu0 %v1655
        %v1745 = vpop.f32.mrb[0].mxu0
        %v1746 = vadd.f32 0.0, %v1745
        %v1747 = vpop.f32.mrb[0].mxu0
        %v1748 = vpop.f32.mrb[0].mxu0
        %v1749 = vadd.f32 0.0, %v1748
        %v1750 = vpop.f32.mrb[0].mxu0
        %1751 = vmatprep.mubr.bf16.mxu0 0
        %1752 = vmatmul.mubr.bf16.gmra.mrb[0].mxu0 %v1658
        %v1753 = vpop.f32.mrb[0].mxu0
        %v1754 = vadd.f32 0.0, %v1753
        %v1755 = vpop.f32.mrb[0].mxu0
        %v1756 = vpop.f32.mrb[0].mxu0
        %v1757 = vadd.f32 0.0, %v1756
        %v1758 = vpop.f32.mrb[0].mxu0
        %1759 = vdwg.mxu0
        %v1760 = vadd.f32 %v1508, %v1698
        %v1761 = vadd.f32 %v1509, %v1701
        %v1762 = vadd.f32 %v1510, %v1706
        %v1763 = vadd.f32 %v1511, %v1709
        %v1764 = vadd.f32 %v1512, %v1714
        %v1765 = vadd.f32 %v1513, %v1717
        %v1766 = vadd.f32 %v1514, %v1722
        %v1767 = vadd.f32 %v1515, %v1725
        %v1768 = vadd.f32 %v1516, %v1730
        %v1769 = vadd.f32 %v1517, %v1733
        %v1770 = vadd.f32 %v1518, %v1738
        %v1771 = vadd.f32 %v1519, %v1741
        %v1772 = vadd.f32 %v1520, %v1746
        %v1773 = vadd.f32 %v1521, %v1749
        %v1774 = vadd.f32 %v1522, %v1754
        %v1775 = vadd.f32 %v1523, %v1757
        %s1776 = sadd.s32 %s157, 2
        %s1777 = smul.u32 %s1776, 3
        %s1778 = smul.addr %s1777, 4
        %s1779 = scalar_lea.vmem %s136, %s1778
        %v1780 = vld [vmem:[%s1779] sm:$0xf]
        %v1781 = vld [vmem:[%s1779 + $0x4] sm:$0xf]
        %v1782 = vld [vmem:[%s1779 + $0xc] sm:$0xf]
        %v1783 = vld [vmem:[%s1779 + $0x10] sm:$0xf]
        %v1784 = vld [vmem:[%s1779 + $0x18] sm:$0xf]
        %v1785 = vld [vmem:[%s1779 + $0x1c] sm:$0xf]
        %v1786 = vld [vmem:[%s1779 + $0x24] sm:$0xf]
        %v1787 = vld [vmem:[%s1779 + $0x28] sm:$0xf]
        %v1788 = vld [vmem:[%s1779 + $0x30] sm:$0xf]
        %v1789 = vld [vmem:[%s1779 + $0x34] sm:$0xf]
        %v1790 = vld [vmem:[%s1779 + $0x3c] sm:$0xf]
        %v1791 = vld [vmem:[%s1779 + $0x40] sm:$0xf]
        %v1792 = vld [vmem:[%s1779 + $0x48] sm:$0xf]
        %v1793 = vld [vmem:[%s1779 + $0x4c] sm:$0xf]
        %v1794 = vld [vmem:[%s1779 + $0x54] sm:$0xf]
        %v1795 = vld [vmem:[%s1779 + $0x58] sm:$0xf]
        %v1812 = vunpack.c.l.b16 %v1780
        %v1813 = vunpack.c.l.b16 %v1781
        %v1814 = vunpack.c.l.b16 %v1782
        %v1815 = vunpack.c.l.b16 %v1783
        %v1816 = vunpack.c.l.b16 %v1784
        %v1817 = vunpack.c.l.b16 %v1785
        %v1818 = vunpack.c.l.b16 %v1786
        %v1819 = vunpack.c.l.b16 %v1787
        %v1820 = vunpack.c.l.b16 %v1788
        %v1821 = vunpack.c.l.b16 %v1789
        %v1822 = vunpack.c.l.b16 %v1790
        %v1823 = vunpack.c.l.b16 %v1791
        %v1824 = vunpack.c.l.b16 %v1792
        %v1825 = vunpack.c.l.b16 %v1793
        %v1826 = vunpack.c.l.b16 %v1794
        %v1827 = vunpack.c.l.b16 %v1795
        %v1828 = vpack.c.b16 %v1813, %v1812
        %v1829 = vpack.c.b16 %v1815, %v1814
        %v1830 = vpack.c.b16 %v1817, %v1816
        %v1831 = vpack.c.b16 %v1819, %v1818
        %v1832 = vpack.c.b16 %v1821, %v1820
        %v1833 = vpack.c.b16 %v1823, %v1822
        %v1834 = vpack.c.b16 %v1825, %v1824
        %v1835 = vpack.c.b16 %v1827, %v1826
        %v1837 = vsel %vm404, %v1828, 0
        %v1840 = vsel %vm404, %v1829, 0
        %v1843 = vsel %vm404, %v1830, 0
        %v1846 = vsel %vm404, %v1831, 0
        %v1849 = vsel %vm404, %v1832, 0
        %v1852 = vsel %vm404, %v1833, 0
        %v1855 = vsel %vm404, %v1834, 0
        %v1858 = vsel %vm404, %v1835, 0
        %v1861 = vand.u32 %v147, %v432
        %1863 = vmatprep.subr.bf16.mxu0 0
        %1864 = vmatpush1.bf16.msra.mxu0 %v1861
        %1865 = vmatprep.subr.bf16.mxu0 0
        %1866 = vmatpush1.bf16.msra.mxu0 0
        %1867 = vmatprep.subr.bf16.mxu0 0
        %1868 = vmatpush1.bf16.msra.mxu0 0
        %1869 = vmatprep.subr.bf16.mxu0 0
        %1870 = vmatpush1.bf16.msra.mxu0 0
        %1871 = vmatprep.subr.bf16.mxu0 0
        %1872 = vmatpush1.bf16.msra.mxu0 0
        %1873 = vmatprep.subr.bf16.mxu0 0
        %1874 = vmatpush1.bf16.msra.mxu0 0
        %1875 = vmatprep.subr.bf16.mxu0 0
        %1876 = vmatpush1.bf16.msra.mxu0 0
        %1877 = vmatprep.subr.bf16.mxu0 0
        %1878 = vmatpush1.bf16.msra.mxu0 0
        %1879 = vmatprep.subr.bf16.mxu0 0
        %1880 = vmatpush1.bf16.msra.mxu0 0
        %1881 = vmatprep.subr.bf16.mxu0 0
        %1882 = vmatpush1.bf16.msra.mxu0 0
        %1883 = vmatprep.subr.bf16.mxu0 0
        %1884 = vmatpush1.bf16.msra.mxu0 0
        %1885 = vmatprep.subr.bf16.mxu0 0
        %1886 = vmatpush1.bf16.msra.mxu0 0
        %1887 = vmatprep.subr.bf16.mxu0 0
        %1888 = vmatpush1.bf16.msra.mxu0 0
        %1889 = vmatprep.subr.bf16.mxu0 0
        %1890 = vmatpush1.bf16.msra.mxu0 0
        %1891 = vmatprep.subr.bf16.mxu0 0
        %1892 = vmatpush1.bf16.msra.mxu0 0
        %1893 = vmatprep.subr.bf16.mxu0 0
        %1894 = vmatpush1.bf16.msra.mxu0 0
        %1895 = vmatprep.mubr.bf16.mxu0 0
        %1896 = vmatmul.mubr.bf16.gmra.mrb[0].mxu0 %v1837
        %v1897 = vpop.f32.mrb[0].mxu0
        %v1898 = vadd.f32 0.0, %v1897
        %v1899 = vpop.f32.mrb[0].mxu0
        %v1900 = vpop.f32.mrb[0].mxu0
        %v1901 = vadd.f32 0.0, %v1900
        %v1902 = vpop.f32.mrb[0].mxu0
        %1903 = vmatprep.mubr.bf16.mxu0 0
        %1904 = vmatmul.mubr.bf16.gmra.mrb[0].mxu0 %v1840
        %v1905 = vpop.f32.mrb[0].mxu0
        %v1906 = vadd.f32 0.0, %v1905
        %v1907 = vpop.f32.mrb[0].mxu0
        %v1908 = vpop.f32.mrb[0].mxu0
        %v1909 = vadd.f32 0.0, %v1908
        %v1910 = vpop.f32.mrb[0].mxu0
        %1911 = vmatprep.mubr.bf16.mxu0 0
        %1912 = vmatmul.mubr.bf16.gmra.mrb[0].mxu0 %v1843
        %v1913 = vpop.f32.mrb[0].mxu0
        %v1914 = vadd.f32 0.0, %v1913
        %v1915 = vpop.f32.mrb[0].mxu0
        %v1916 = vpop.f32.mrb[0].mxu0
        %v1917 = vadd.f32 0.0, %v1916
        %v1918 = vpop.f32.mrb[0].mxu0
        %1919 = vmatprep.mubr.bf16.mxu0 0
        %1920 = vmatmul.mubr.bf16.gmra.mrb[0].mxu0 %v1846
        %v1921 = vpop.f32.mrb[0].mxu0
        %v1922 = vadd.f32 0.0, %v1921
        %v1923 = vpop.f32.mrb[0].mxu0
        %v1924 = vpop.f32.mrb[0].mxu0
        %v1925 = vadd.f32 0.0, %v1924
        %v1926 = vpop.f32.mrb[0].mxu0
        %1927 = vmatprep.mubr.bf16.mxu0 0
        %1928 = vmatmul.mubr.bf16.gmra.mrb[0].mxu0 %v1849
        %v1929 = vpop.f32.mrb[0].mxu0
        %v1930 = vadd.f32 0.0, %v1929
        %v1931 = vpop.f32.mrb[0].mxu0
        %v1932 = vpop.f32.mrb[0].mxu0
        %v1933 = vadd.f32 0.0, %v1932
        %v1934 = vpop.f32.mrb[0].mxu0
        %1935 = vmatprep.mubr.bf16.mxu0 0
        %1936 = vmatmul.mubr.bf16.gmra.mrb[0].mxu0 %v1852
        %v1937 = vpop.f32.mrb[0].mxu0
        %v1938 = vadd.f32 0.0, %v1937
        %v1939 = vpop.f32.mrb[0].mxu0
        %v1940 = vpop.f32.mrb[0].mxu0
        %v1941 = vadd.f32 0.0, %v1940
        %v1942 = vpop.f32.mrb[0].mxu0
        %1943 = vmatprep.mubr.bf16.mxu0 0
        %1944 = vmatmul.mubr.bf16.gmra.mrb[0].mxu0 %v1855
        %v1945 = vpop.f32.mrb[0].mxu0
        %v1946 = vadd.f32 0.0, %v1945
        %v1947 = vpop.f32.mrb[0].mxu0
        %v1948 = vpop.f32.mrb[0].mxu0
        %v1949 = vadd.f32 0.0, %v1948
        %v1950 = vpop.f32.mrb[0].mxu0
        %1951 = vmatprep.mubr.bf16.mxu0 0
        %1952 = vmatmul.mubr.bf16.gmra.mrb[0].mxu0 %v1858
        %v1953 = vpop.f32.mrb[0].mxu0
        %v1954 = vadd.f32 0.0, %v1953
        %v1955 = vpop.f32.mrb[0].mxu0
        %v1956 = vpop.f32.mrb[0].mxu0
        %v1957 = vadd.f32 0.0, %v1956
        %v1958 = vpop.f32.mrb[0].mxu0
        %1959 = vdwg.mxu0
        %v1960 = vadd.f32 %v1760, %v1898
        %v1961 = vadd.f32 %v1761, %v1901
        %v1962 = vadd.f32 %v1762, %v1906
        %v1963 = vadd.f32 %v1763, %v1909
        %v1964 = vadd.f32 %v1764, %v1914
        %v1965 = vadd.f32 %v1765, %v1917
        %v1966 = vadd.f32 %v1766, %v1922
        %v1967 = vadd.f32 %v1767, %v1925
        %v1968 = vadd.f32 %v1768, %v1930
        %v1969 = vadd.f32 %v1769, %v1933
        %v1970 = vadd.f32 %v1770, %v1938
        %v1971 = vadd.f32 %v1771, %v1941
        %v1972 = vadd.f32 %v1772, %v1946
        %v1973 = vadd.f32 %v1773, %v1949
        %v1974 = vadd.f32 %v1774, %v1954
        %v1975 = vadd.f32 %v1775, %v1957
        %v1976 = vld [vmem:[%s1779] sm:$0xf]
        %v1977 = vld [vmem:[%s1779 + $0x4] sm:$0xf]
        %v1978 = vld [vmem:[%s1779 + $0x8] sm:$0x1]
        %v1979 = vld [vmem:[%s1779 + $0xc] sm:$0xf]
        %v1980 = vld [vmem:[%s1779 + $0x10] sm:$0xf]
        %v1981 = vld [vmem:[%s1779 + $0x14] sm:$0x1]
        %v1982 = vld [vmem:[%s1779 + $0x18] sm:$0xf]
        %v1983 = vld [vmem:[%s1779 + $0x1c] sm:$0xf]
        %v1984 = vld [vmem:[%s1779 + $0x20] sm:$0x1]
        %v1985 = vld [vmem:[%s1779 + $0x24] sm:$0xf]
        %v1986 = vld [vmem:[%s1779 + $0x28] sm:$0xf]
        %v1987 = vld [vmem:[%s1779 + $0x2c] sm:$0x1]
        %v1988 = vld [vmem:[%s1779 + $0x30] sm:$0xf]
        %v1989 = vld [vmem:[%s1779 + $0x34] sm:$0xf]
        %v1990 = vld [vmem:[%s1779 + $0x38] sm:$0x1]
        %v1991 = vld [vmem:[%s1779 + $0x3c] sm:$0xf]
        %v1992 = vld [vmem:[%s1779 + $0x40] sm:$0xf]
        %v1993 = vld [vmem:[%s1779 + $0x44] sm:$0x1]
        %v1994 = vld [vmem:[%s1779 + $0x48] sm:$0xf]
        %v1995 = vld [vmem:[%s1779 + $0x4c] sm:$0xf]
        %v1996 = vld [vmem:[%s1779 + $0x50] sm:$0x1]
        %v1997 = vld [vmem:[%s1779 + $0x54] sm:$0xf]
        %v1998 = vld [vmem:[%s1779 + $0x58] sm:$0xf]
        %v1999 = vld [vmem:[%s1779 + $0x5c] sm:$0x1]
        %v2001 = vshrl.u32 %v1976, 16
        %v2003 = vrot.slane %v2001, 4
        %v2004 = vshll.u32 %v1976, 16
        %v2006 = vrot.slane %v2004, 5
        %v2007 = vor.u32 %v2003, %v2006
        %v2008 = vrot.slane %v2007, 4
        %v2010 = vshll.u32 %v1977, 16
        %v2012 = vrot.slane %v2010, 5
        %v2013 = vsel %vm187, %v2008, %v2012
        %v2014 = vshrl.u32 %v1977, 16
        %v2016 = vrot.slane %v2014, 4
        %v2017 = vor.u32 %v2016, %v2012
        %v2018 = vrot.slane %v2017, 4
        %v2020 = vshll.u32 %v1978, 16
        %v2022 = vrot.slane %v2020, 5
        %v2023 = vsel %vm187, %v2018, %v2022
        %v2025 = vshrl.u32 %v1979, 16
        %v2027 = vrot.slane %v2025, 4
        %v2028 = vshll.u32 %v1979, 16
        %v2030 = vrot.slane %v2028, 5
        %v2031 = vor.u32 %v2027, %v2030
        %v2032 = vrot.slane %v2031, 4
        %v2034 = vshll.u32 %v1980, 16
        %v2036 = vrot.slane %v2034, 5
        %v2037 = vsel %vm187, %v2032, %v2036
        %v2038 = vshrl.u32 %v1980, 16
        %v2040 = vrot.slane %v2038, 4
        %v2041 = vor.u32 %v2040, %v2036
        %v2042 = vrot.slane %v2041, 4
        %v2044 = vshll.u32 %v1981, 16
        %v2046 = vrot.slane %v2044, 5
        %v2047 = vsel %vm187, %v2042, %v2046
        %v2049 = vshrl.u32 %v1982, 16
        %v2051 = vrot.slane %v2049, 4
        %v2052 = vshll.u32 %v1982, 16
        %v2054 = vrot.slane %v2052, 5
        %v2055 = vor.u32 %v2051, %v2054
        %v2056 = vrot.slane %v2055, 4
        %v2058 = vshll.u32 %v1983, 16
        %v2060 = vrot.slane %v2058, 5
        %v2061 = vsel %vm187, %v2056, %v2060
        %v2062 = vshrl.u32 %v1983, 16
        %v2064 = vrot.slane %v2062, 4
        %v2065 = vor.u32 %v2064, %v2060
        %v2066 = vrot.slane %v2065, 4
        %v2068 = vshll.u32 %v1984, 16
        %v2070 = vrot.slane %v2068, 5
        %v2071 = vsel %vm187, %v2066, %v2070
        %v2073 = vshrl.u32 %v1985, 16
        %v2075 = vrot.slane %v2073, 4
        %v2076 = vshll.u32 %v1985, 16
        %v2078 = vrot.slane %v2076, 5
        %v2079 = vor.u32 %v2075, %v2078
        %v2080 = vrot.slane %v2079, 4
        %v2082 = vshll.u32 %v1986, 16
        %v2084 = vrot.slane %v2082, 5
        %v2085 = vsel %vm187, %v2080, %v2084
        %v2086 = vshrl.u32 %v1986, 16
        %v2088 = vrot.slane %v2086, 4
        %v2089 = vor.u32 %v2088, %v2084
        %v2090 = vrot.slane %v2089, 4
        %v2092 = vshll.u32 %v1987, 16
        %v2094 = vrot.slane %v2092, 5
        %v2095 = vsel %vm187, %v2090, %v2094
        %v2097 = vshrl.u32 %v1988, 16
        %v2099 = vrot.slane %v2097, 4
        %v2100 = vshll.u32 %v1988, 16
        %v2102 = vrot.slane %v2100, 5
        %v2103 = vor.u32 %v2099, %v2102
        %v2104 = vrot.slane %v2103, 4
        %v2106 = vshll.u32 %v1989, 16
        %v2108 = vrot.slane %v2106, 5
        %v2109 = vsel %vm187, %v2104, %v2108
        %v2110 = vshrl.u32 %v1989, 16
        %v2112 = vrot.slane %v2110, 4
        %v2113 = vor.u32 %v2112, %v2108
        %v2114 = vrot.slane %v2113, 4
        %v2116 = vshll.u32 %v1990, 16
        %v2118 = vrot.slane %v2116, 5
        %v2119 = vsel %vm187, %v2114, %v2118
        %v2121 = vshrl.u32 %v1991, 16
        %v2123 = vrot.slane %v2121, 4
        %v2124 = vshll.u32 %v1991, 16
        %v2126 = vrot.slane %v2124, 5
        %v2127 = vor.u32 %v2123, %v2126
        %v2128 = vrot.slane %v2127, 4
        %v2130 = vshll.u32 %v1992, 16
        %v2132 = vrot.slane %v2130, 5
        %v2133 = vsel %vm187, %v2128, %v2132
        %v2134 = vshrl.u32 %v1992, 16
        %v2136 = vrot.slane %v2134, 4
        %v2137 = vor.u32 %v2136, %v2132
        %v2138 = vrot.slane %v2137, 4
        %v2140 = vshll.u32 %v1993, 16
        %v2142 = vrot.slane %v2140, 5
        %v2143 = vsel %vm187, %v2138, %v2142
        %v2145 = vshrl.u32 %v1994, 16
        %v2147 = vrot.slane %v2145, 4
        %v2148 = vshll.u32 %v1994, 16
        %v2150 = vrot.slane %v2148, 5
        %v2151 = vor.u32 %v2147, %v2150
        %v2152 = vrot.slane %v2151, 4
        %v2154 = vshll.u32 %v1995, 16
        %v2156 = vrot.slane %v2154, 5
        %v2157 = vsel %vm187, %v2152, %v2156
        %v2158 = vshrl.u32 %v1995, 16
        %v2160 = vrot.slane %v2158, 4
        %v2161 = vor.u32 %v2160, %v2156
        %v2162 = vrot.slane %v2161, 4
        %v2164 = vshll.u32 %v1996, 16
        %v2166 = vrot.slane %v2164, 5
        %v2167 = vsel %vm187, %v2162, %v2166
        %v2169 = vshrl.u32 %v1997, 16
        %v2171 = vrot.slane %v2169, 4
        %v2172 = vshll.u32 %v1997, 16
        %v2174 = vrot.slane %v2172, 5
        %v2175 = vor.u32 %v2171, %v2174
        %v2176 = vrot.slane %v2175, 4
        %v2178 = vshll.u32 %v1998, 16
        %v2180 = vrot.slane %v2178, 5
        %v2181 = vsel %vm187, %v2176, %v2180
        %v2182 = vshrl.u32 %v1998, 16
        %v2184 = vrot.slane %v2182, 4
        %v2185 = vor.u32 %v2184, %v2180
        %v2186 = vrot.slane %v2185, 4
        %v2188 = vshll.u32 %v1999, 16
        %v2190 = vrot.slane %v2188, 5
        %v2191 = vsel %vm187, %v2186, %v2190
        %v2192 = vunpack.c.l.b16 %v2013
        %v2193 = vunpack.c.l.b16 %v2023
        %v2194 = vunpack.c.l.b16 %v2037
        %v2195 = vunpack.c.l.b16 %v2047
        %v2196 = vunpack.c.l.b16 %v2061
        %v2197 = vunpack.c.l.b16 %v2071
        %v2198 = vunpack.c.l.b16 %v2085
        %v2199 = vunpack.c.l.b16 %v2095
        %v2200 = vunpack.c.l.b16 %v2109
        %v2201 = vunpack.c.l.b16 %v2119
        %v2202 = vunpack.c.l.b16 %v2133
        %v2203 = vunpack.c.l.b16 %v2143
        %v2204 = vunpack.c.l.b16 %v2157
        %v2205 = vunpack.c.l.b16 %v2167
        %v2206 = vunpack.c.l.b16 %v2181
        %v2207 = vunpack.c.l.b16 %v2191
        %v2208 = vpack.c.b16 %v2193, %v2192
        %v2209 = vpack.c.b16 %v2195, %v2194
        %v2210 = vpack.c.b16 %v2197, %v2196
        %v2211 = vpack.c.b16 %v2199, %v2198
        %v2212 = vpack.c.b16 %v2201, %v2200
        %v2213 = vpack.c.b16 %v2203, %v2202
        %v2214 = vpack.c.b16 %v2205, %v2204
        %v2215 = vpack.c.b16 %v2207, %v2206
        %v2217 = vsel %vm404, %v2208, 0
        %v2220 = vsel %vm404, %v2209, 0
        %v2223 = vsel %vm404, %v2210, 0
        %v2226 = vsel %vm404, %v2211, 0
        %v2229 = vsel %vm404, %v2212, 0
        %v2232 = vsel %vm404, %v2213, 0
        %v2235 = vsel %vm404, %v2214, 0
        %v2238 = vsel %vm404, %v2215, 0
        %v2241 = vand.u32 %v148, %v432
        %2243 = vmatprep.subr.bf16.mxu0 0
        %2244 = vmatpush1.bf16.msra.mxu0 %v2241
        %2245 = vmatprep.subr.bf16.mxu0 0
        %2246 = vmatpush1.bf16.msra.mxu0 0
        %2247 = vmatprep.subr.bf16.mxu0 0
        %2248 = vmatpush1.bf16.msra.mxu0 0
        %2249 = vmatprep.subr.bf16.mxu0 0
        %2250 = vmatpush1.bf16.msra.mxu0 0
        %2251 = vmatprep.subr.bf16.mxu0 0
        %2252 = vmatpush1.bf16.msra.mxu0 0
        %2253 = vmatprep.subr.bf16.mxu0 0
        %2254 = vmatpush1.bf16.msra.mxu0 0
        %2255 = vmatprep.subr.bf16.mxu0 0
        %2256 = vmatpush1.bf16.msra.mxu0 0
        %2257 = vmatprep.subr.bf16.mxu0 0
        %2258 = vmatpush1.bf16.msra.mxu0 0
        %2259 = vmatprep.subr.bf16.mxu0 0
        %2260 = vmatpush1.bf16.msra.mxu0 0
        %2261 = vmatprep.subr.bf16.mxu0 0
        %2262 = vmatpush1.bf16.msra.mxu0 0
        %2263 = vmatprep.subr.bf16.mxu0 0
        %2264 = vmatpush1.bf16.msra.mxu0 0
        %2265 = vmatprep.subr.bf16.mxu0 0
        %2266 = vmatpush1.bf16.msra.mxu0 0
        %2267 = vmatprep.subr.bf16.mxu0 0
        %2268 = vmatpush1.bf16.msra.mxu0 0
        %2269 = vmatprep.subr.bf16.mxu0 0
        %2270 = vmatpush1.bf16.msra.mxu0 0
        %2271 = vmatprep.subr.bf16.mxu0 0
        %2272 = vmatpush1.bf16.msra.mxu0 0
        %2273 = vmatprep.subr.bf16.mxu0 0
        %2274 = vmatpush1.bf16.msra.mxu0 0
        %2275 = vmatprep.mubr.bf16.mxu0 0
        %2276 = vmatmul.mubr.bf16.gmra.mrb[0].mxu0 %v2217
        %v2277 = vpop.f32.mrb[0].mxu0
        %v2278 = vadd.f32 0.0, %v2277
        %v2279 = vpop.f32.mrb[0].mxu0
        %v2280 = vpop.f32.mrb[0].mxu0
        %v2281 = vadd.f32 0.0, %v2280
        %v2282 = vpop.f32.mrb[0].mxu0
        %2283 = vmatprep.mubr.bf16.mxu0 0
        %2284 = vmatmul.mubr.bf16.gmra.mrb[0].mxu0 %v2220
        %v2285 = vpop.f32.mrb[0].mxu0
        %v2286 = vadd.f32 0.0, %v2285
        %v2287 = vpop.f32.mrb[0].mxu0
        %v2288 = vpop.f32.mrb[0].mxu0
        %v2289 = vadd.f32 0.0, %v2288
        %v2290 = vpop.f32.mrb[0].mxu0
        %2291 = vmatprep.mubr.bf16.mxu0 0
        %2292 = vmatmul.mubr.bf16.gmra.mrb[0].mxu0 %v2223
        %v2293 = vpop.f32.mrb[0].mxu0
        %v2294 = vadd.f32 0.0, %v2293
        %v2295 = vpop.f32.mrb[0].mxu0
        %v2296 = vpop.f32.mrb[0].mxu0
        %v2297 = vadd.f32 0.0, %v2296
        %v2298 = vpop.f32.mrb[0].mxu0
        %2299 = vmatprep.mubr.bf16.mxu0 0
        %2300 = vmatmul.mubr.bf16.gmra.mrb[0].mxu0 %v2226
        %v2301 = vpop.f32.mrb[0].mxu0
        %v2302 = vadd.f32 0.0, %v2301
        %v2303 = vpop.f32.mrb[0].mxu0
        %v2304 = vpop.f32.mrb[0].mxu0
        %v2305 = vadd.f32 0.0, %v2304
        %v2306 = vpop.f32.mrb[0].mxu0
        %2307 = vmatprep.mubr.bf16.mxu0 0
        %2308 = vmatmul.mubr.bf16.gmra.mrb[0].mxu0 %v2229
        %v2309 = vpop.f32.mrb[0].mxu0
        %v2310 = vadd.f32 0.0, %v2309
        %v2311 = vpop.f32.mrb[0].mxu0
        %v2312 = vpop.f32.mrb[0].mxu0
        %v2313 = vadd.f32 0.0, %v2312
        %v2314 = vpop.f32.mrb[0].mxu0
        %2315 = vmatprep.mubr.bf16.mxu0 0
        %2316 = vmatmul.mubr.bf16.gmra.mrb[0].mxu0 %v2232
        %v2317 = vpop.f32.mrb[0].mxu0
        %v2318 = vadd.f32 0.0, %v2317
        %v2319 = vpop.f32.mrb[0].mxu0
        %v2320 = vpop.f32.mrb[0].mxu0
        %v2321 = vadd.f32 0.0, %v2320
        %v2322 = vpop.f32.mrb[0].mxu0
        %2323 = vmatprep.mubr.bf16.mxu0 0
        %2324 = vmatmul.mubr.bf16.gmra.mrb[0].mxu0 %v2235
        %v2325 = vpop.f32.mrb[0].mxu0
        %v2326 = vadd.f32 0.0, %v2325
        %v2327 = vpop.f32.mrb[0].mxu0
        %v2328 = vpop.f32.mrb[0].mxu0
        %v2329 = vadd.f32 0.0, %v2328
        %v2330 = vpop.f32.mrb[0].mxu0
        %2331 = vmatprep.mubr.bf16.mxu0 0
        %2332 = vmatmul.mubr.bf16.gmra.mrb[0].mxu0 %v2238
        %v2333 = vpop.f32.mrb[0].mxu0
        %v2334 = vadd.f32 0.0, %v2333
        %v2335 = vpop.f32.mrb[0].mxu0
        %v2336 = vpop.f32.mrb[0].mxu0
        %v2337 = vadd.f32 0.0, %v2336
        %v2338 = vpop.f32.mrb[0].mxu0
        %2339 = vdwg.mxu0
        %v2340 = vadd.f32 %v1960, %v2278
        %v2341 = vadd.f32 %v1961, %v2281
        %v2342 = vadd.f32 %v1962, %v2286
        %v2343 = vadd.f32 %v1963, %v2289
        %v2344 = vadd.f32 %v1964, %v2294
        %v2345 = vadd.f32 %v1965, %v2297
        %v2346 = vadd.f32 %v1966, %v2302
        %v2347 = vadd.f32 %v1967, %v2305
        %v2348 = vadd.f32 %v1968, %v2310
        %v2349 = vadd.f32 %v1969, %v2313
        %v2350 = vadd.f32 %v1970, %v2318
        %v2351 = vadd.f32 %v1971, %v2321
        %v2352 = vadd.f32 %v1972, %v2326
        %v2353 = vadd.f32 %v1973, %v2329
        %v2354 = vadd.f32 %v1974, %v2334
        %v2355 = vadd.f32 %v1975, %v2337
        %v2356 = vld [vmem:[%s1779] sm:$0xe]
        %v2357 = vld [vmem:[%s1779 + $0xc] sm:$0xe]
        %v2358 = vld [vmem:[%s1779 + $0x18] sm:$0xe]
        %v2359 = vld [vmem:[%s1779 + $0x24] sm:$0xe]
        %v2360 = vld [vmem:[%s1779 + $0x30] sm:$0xe]
        %v2361 = vld [vmem:[%s1779 + $0x3c] sm:$0xe]
        %v2362 = vld [vmem:[%s1779 + $0x48] sm:$0xe]
        %v2363 = vld [vmem:[%s1779 + $0x54] sm:$0xe]
        %v2388 = vrot.slane %v2356, 5
        %v2389 = vrot.slane %v2388, 4
        %v2390 = vrot.slane %v1977, 5
        %v2391 = vsel %vm723, %v2389, %v2390
        %v2392 = vrot.slane %v2390, 4
        %v2393 = vrot.slane %v1978, 5
        %v2394 = vsel %vm723, %v2392, %v2393
        %v2395 = vrot.slane %v2357, 5
        %v2396 = vrot.slane %v2395, 4
        %v2397 = vrot.slane %v1980, 5
        %v2398 = vsel %vm723, %v2396, %v2397
        %v2399 = vrot.slane %v2397, 4
        %v2400 = vrot.slane %v1981, 5
        %v2401 = vsel %vm723, %v2399, %v2400
        %v2402 = vrot.slane %v2358, 5
        %v2403 = vrot.slane %v2402, 4
        %v2404 = vrot.slane %v1983, 5
        %v2405 = vsel %vm723, %v2403, %v2404
        %v2406 = vrot.slane %v2404, 4
        %v2407 = vrot.slane %v1984, 5
        %v2408 = vsel %vm723, %v2406, %v2407
        %v2409 = vrot.slane %v2359, 5
        %v2410 = vrot.slane %v2409, 4
        %v2411 = vrot.slane %v1986, 5
        %v2412 = vsel %vm723, %v2410, %v2411
        %v2413 = vrot.slane %v2411, 4
        %v2414 = vrot.slane %v1987, 5
        %v2415 = vsel %vm723, %v2413, %v2414
        %v2416 = vrot.slane %v2360, 5
        %v2417 = vrot.slane %v2416, 4
        %v2418 = vrot.slane %v1989, 5
        %v2419 = vsel %vm723, %v2417, %v2418
        %v2420 = vrot.slane %v2418, 4
        %v2421 = vrot.slane %v1990, 5
        %v2422 = vsel %vm723, %v2420, %v2421
        %v2423 = vrot.slane %v2361, 5
        %v2424 = vrot.slane %v2423, 4
        %v2425 = vrot.slane %v1992, 5
        %v2426 = vsel %vm723, %v2424, %v2425
        %v2427 = vrot.slane %v2425, 4
        %v2428 = vrot.slane %v1993, 5
        %v2429 = vsel %vm723, %v2427, %v2428
        %v2430 = vrot.slane %v2362, 5
        %v2431 = vrot.slane %v2430, 4
        %v2432 = vrot.slane %v1995, 5
        %v2433 = vsel %vm723, %v2431, %v2432
        %v2434 = vrot.slane %v2432, 4
        %v2435 = vrot.slane %v1996, 5
        %v2436 = vsel %vm723, %v2434, %v2435
        %v2437 = vrot.slane %v2363, 5
        %v2438 = vrot.slane %v2437, 4
        %v2439 = vrot.slane %v1998, 5
        %v2440 = vsel %vm723, %v2438, %v2439
        %v2441 = vrot.slane %v2439, 4
        %v2442 = vrot.slane %v1999, 5
        %v2443 = vsel %vm723, %v2441, %v2442
        %v2444 = vunpack.c.l.b16 %v2391
        %v2445 = vunpack.c.l.b16 %v2394
        %v2446 = vunpack.c.l.b16 %v2398
        %v2447 = vunpack.c.l.b16 %v2401
        %v2448 = vunpack.c.l.b16 %v2405
        %v2449 = vunpack.c.l.b16 %v2408
        %v2450 = vunpack.c.l.b16 %v2412
        %v2451 = vunpack.c.l.b16 %v2415
        %v2452 = vunpack.c.l.b16 %v2419
        %v2453 = vunpack.c.l.b16 %v2422
        %v2454 = vunpack.c.l.b16 %v2426
        %v2455 = vunpack.c.l.b16 %v2429
        %v2456 = vunpack.c.l.b16 %v2433
        %v2457 = vunpack.c.l.b16 %v2436
        %v2458 = vunpack.c.l.b16 %v2440
        %v2459 = vunpack.c.l.b16 %v2443
        %v2460 = vpack.c.b16 %v2445, %v2444
        %v2461 = vpack.c.b16 %v2447, %v2446
        %v2462 = vpack.c.b16 %v2449, %v2448
        %v2463 = vpack.c.b16 %v2451, %v2450
        %v2464 = vpack.c.b16 %v2453, %v2452
        %v2465 = vpack.c.b16 %v2455, %v2454
        %v2466 = vpack.c.b16 %v2457, %v2456
        %v2467 = vpack.c.b16 %v2459, %v2458
        %v2469 = vsel %vm404, %v2460, 0
        %v2472 = vsel %vm404, %v2461, 0
        %v2475 = vsel %vm404, %v2462, 0
        %v2478 = vsel %vm404, %v2463, 0
        %v2481 = vsel %vm404, %v2464, 0
        %v2484 = vsel %vm404, %v2465, 0
        %v2487 = vsel %vm404, %v2466, 0
        %v2490 = vsel %vm404, %v2467, 0
        %v2493 = vand.u32 %v149, %v432
        %2495 = vmatprep.subr.bf16.mxu0 0
        %2496 = vmatpush1.bf16.msra.mxu0 %v2493
        %2497 = vmatprep.subr.bf16.mxu0 0
        %2498 = vmatpush1.bf16.msra.mxu0 0
        %2499 = vmatprep.subr.bf16.mxu0 0
        %2500 = vmatpush1.bf16.msra.mxu0 0
        %2501 = vmatprep.subr.bf16.mxu0 0
        %2502 = vmatpush1.bf16.msra.mxu0 0
        %2503 = vmatprep.subr.bf16.mxu0 0
        %2504 = vmatpush1.bf16.msra.mxu0 0
        %2505 = vmatprep.subr.bf16.mxu0 0
        %2506 = vmatpush1.bf16.msra.mxu0 0
        %2507 = vmatprep.subr.bf16.mxu0 0
        %2508 = vmatpush1.bf16.msra.mxu0 0
        %2509 = vmatprep.subr.bf16.mxu0 0
        %2510 = vmatpush1.bf16.msra.mxu0 0
        %2511 = vmatprep.subr.bf16.mxu0 0
        %2512 = vmatpush1.bf16.msra.mxu0 0
        %2513 = vmatprep.subr.bf16.mxu0 0
        %2514 = vmatpush1.bf16.msra.mxu0 0
        %2515 = vmatprep.subr.bf16.mxu0 0
        %2516 = vmatpush1.bf16.msra.mxu0 0
        %2517 = vmatprep.subr.bf16.mxu0 0
        %2518 = vmatpush1.bf16.msra.mxu0 0
        %2519 = vmatprep.subr.bf16.mxu0 0
        %2520 = vmatpush1.bf16.msra.mxu0 0
        %2521 = vmatprep.subr.bf16.mxu0 0
        %2522 = vmatpush1.bf16.msra.mxu0 0
        %2523 = vmatprep.subr.bf16.mxu0 0
        %2524 = vmatpush1.bf16.msra.mxu0 0
        %2525 = vmatprep.subr.bf16.mxu0 0
        %2526 = vmatpush1.bf16.msra.mxu0 0
        %2527 = vmatprep.mubr.bf16.mxu0 0
        %2528 = vmatmul.mubr.bf16.gmra.mrb[0].mxu0 %v2469
        %v2529 = vpop.f32.mrb[0].mxu0
        %v2530 = vadd.f32 0.0, %v2529
        %v2531 = vpop.f32.mrb[0].mxu0
        %v2532 = vpop.f32.mrb[0].mxu0
        %v2533 = vadd.f32 0.0, %v2532
        %v2534 = vpop.f32.mrb[0].mxu0
        %2535 = vmatprep.mubr.bf16.mxu0 0
        %2536 = vmatmul.mubr.bf16.gmra.mrb[0].mxu0 %v2472
        %v2537 = vpop.f32.mrb[0].mxu0
        %v2538 = vadd.f32 0.0, %v2537
        %v2539 = vpop.f32.mrb[0].mxu0
        %v2540 = vpop.f32.mrb[0].mxu0
        %v2541 = vadd.f32 0.0, %v2540
        %v2542 = vpop.f32.mrb[0].mxu0
        %2543 = vmatprep.mubr.bf16.mxu0 0
        %2544 = vmatmul.mubr.bf16.gmra.mrb[0].mxu0 %v2475
        %v2545 = vpop.f32.mrb[0].mxu0
        %v2546 = vadd.f32 0.0, %v2545
        %v2547 = vpop.f32.mrb[0].mxu0
        %v2548 = vpop.f32.mrb[0].mxu0
        %v2549 = vadd.f32 0.0, %v2548
        %v2550 = vpop.f32.mrb[0].mxu0
        %2551 = vmatprep.mubr.bf16.mxu0 0
        %2552 = vmatmul.mubr.bf16.gmra.mrb[0].mxu0 %v2478
        %v2553 = vpop.f32.mrb[0].mxu0
        %v2554 = vadd.f32 0.0, %v2553
        %v2555 = vpop.f32.mrb[0].mxu0
        %v2556 = vpop.f32.mrb[0].mxu0
        %v2557 = vadd.f32 0.0, %v2556
        %v2558 = vpop.f32.mrb[0].mxu0
        %2559 = vmatprep.mubr.bf16.mxu0 0
        %2560 = vmatmul.mubr.bf16.gmra.mrb[0].mxu0 %v2481
        %v2561 = vpop.f32.mrb[0].mxu0
        %v2562 = vadd.f32 0.0, %v2561
        %v2563 = vpop.f32.mrb[0].mxu0
        %v2564 = vpop.f32.mrb[0].mxu0
        %v2565 = vadd.f32 0.0, %v2564
        %v2566 = vpop.f32.mrb[0].mxu0
        %2567 = vmatprep.mubr.bf16.mxu0 0
        %2568 = vmatmul.mubr.bf16.gmra.mrb[0].mxu0 %v2484
        %v2569 = vpop.f32.mrb[0].mxu0
        %v2570 = vadd.f32 0.0, %v2569
        %v2571 = vpop.f32.mrb[0].mxu0
        %v2572 = vpop.f32.mrb[0].mxu0
        %v2573 = vadd.f32 0.0, %v2572
        %v2574 = vpop.f32.mrb[0].mxu0
        %2575 = vmatprep.mubr.bf16.mxu0 0
        %2576 = vmatmul.mubr.bf16.gmra.mrb[0].mxu0 %v2487
        %v2577 = vpop.f32.mrb[0].mxu0
        %v2578 = vadd.f32 0.0, %v2577
        %v2579 = vpop.f32.mrb[0].mxu0
        %v2580 = vpop.f32.mrb[0].mxu0
        %v2581 = vadd.f32 0.0, %v2580
        %v2582 = vpop.f32.mrb[0].mxu0
        %2583 = vmatprep.mubr.bf16.mxu0 0
        %2584 = vmatmul.mubr.bf16.gmra.mrb[0].mxu0 %v2490
        %v2585 = vpop.f32.mrb[0].mxu0
        %v2586 = vadd.f32 0.0, %v2585
        %v2587 = vpop.f32.mrb[0].mxu0
        %v2588 = vpop.f32.mrb[0].mxu0
        %v2589 = vadd.f32 0.0, %v2588
        %v2590 = vpop.f32.mrb[0].mxu0
        %2591 = vdwg.mxu0
        %v2592 = vadd.f32 %v2340, %v2530
        %v2593 = vadd.f32 %v2341, %v2533
        %v2594 = vadd.f32 %v2342, %v2538
        %v2595 = vadd.f32 %v2343, %v2541
        %v2596 = vadd.f32 %v2344, %v2546
        %v2597 = vadd.f32 %v2345, %v2549
        %v2598 = vadd.f32 %v2346, %v2554
        %v2599 = vadd.f32 %v2347, %v2557
        %v2600 = vadd.f32 %v2348, %v2562
        %v2601 = vadd.f32 %v2349, %v2565
        %v2602 = vadd.f32 %v2350, %v2570
        %v2603 = vadd.f32 %v2351, %v2573
        %v2604 = vadd.f32 %v2352, %v2578
        %v2605 = vadd.f32 %v2353, %v2581
        %v2606 = vadd.f32 %v2354, %v2586
        %v2607 = vadd.f32 %v2355, %v2589
        %v2608 = vmax.f32 %v2592, 0.0
        %v2609 = vmax.f32 %v2593, 0.0
        %v2610 = vmax.f32 %v2594, 0.0
        %v2611 = vmax.f32 %v2595, 0.0
        %v2612 = vmax.f32 %v2596, 0.0
        %v2613 = vmax.f32 %v2597, 0.0
        %v2614 = vmax.f32 %v2598, 0.0
        %v2615 = vmax.f32 %v2599, 0.0
        %v2616 = vmax.f32 %v2600, 0.0
        %v2617 = vmax.f32 %v2601, 0.0
        %v2618 = vmax.f32 %v2602, 0.0
        %v2619 = vmax.f32 %v2603, 0.0
        %v2620 = vmax.f32 %v2604, 0.0
        %v2621 = vmax.f32 %v2605, 0.0
        %v2622 = vmax.f32 %v2606, 0.0
        %v2623 = vmax.f32 %v2607, 0.0
        %v2624 = vadd.f32 %v2608, %v2609
        %v2625 = vadd.f32 %v2624, %v2610
        %v2626 = vadd.f32 %v2625, %v2611
        %v2627 = vadd.f32 %v2626, %v2612
        %v2628 = vadd.f32 %v2627, %v2613
        %v2629 = vadd.f32 %v2628, %v2614
        %v2630 = vadd.f32 %v2629, %v2615
        %v2631 = vadd.f32 %v2630, %v2616
        %v2632 = vadd.f32 %v2631, %v2617
        %v2633 = vadd.f32 %v2632, %v2618
        %v2634 = vadd.f32 %v2633, %v2619
        %v2635 = vadd.f32 %v2634, %v2620
        %v2636 = vadd.f32 %v2635, %v2621
        %v2637 = vadd.f32 %v2636, %v2622
        %v2638 = vadd.f32 %v2637, %v2623
        %v2639 = vrot.slane %v2638, 4
        %v2640 = vadd.f32 %v2638, %v2639
        %v2641 = vrot.slane %v2640, 2
        %v2642 = vadd.f32 %v2640, %v2641
        %v2643 = vrot.slane %v2642, 1
        %v2644 = vadd.f32 %v2642, %v2643
        %v2645 = vadd.f32 %v156, %v2644
      $region33: #{simsiam_forward.2} parent=27 // loop_footer
        %s155 = sadd.s32 1, %s151
      $region34: #{simsiam_forward.2} parent=27 // loop_footer_branch
        %150 = sbr.rel target = $region30
      $region35: #{simsiam_forward.2} parent=27 // loop_exit
        _
      %v2646 = vmul.f32 %v156, 0.00390625
      %2647 = vst [vmem:[%s139] sm:$0x1] %v2646
      %p2648 = scmp.lt.s32.totalorder %s13, 3
      %s2649 = scalar_select %p2648, %s13, 3
      %s2650 = scalar_lea.vmem %s2, %s2649
      // Predicated region
      $region36: #{simsiam_forward.2} parent=27 // pred_check
        %p2651 = pneg %p78
      $region37: #{simsiam_forward.2} parent=27 // pred_check_branch
        %2653 = sbr.rel (%p2651) target = $region39
      $region38: #{simsiam_forward.2} parent=27 // pred_region
        _
      $region39: #{simsiam_forward.2} parent=27 // pred_fallthru
        _
    $region28: #{simsiam_forward.2} parent=5 // pred_fallthru
      _
    %p2654 = scmp.le.s32.totalorder 2, %s8
    // Predicated region
    $region40: #{simsiam_forward.2} parent=5 // pred_check
      %p2655 = pneg %p2654
    $region41: #{simsiam_forward.2} parent=5 // pred_check_branch
      %2657 = sbr.rel (%p2655) target = $region43
    $region42: #{simsiam_forward.2} parent=5 // pred_region
      %s2658 = ssub.s32 %s8, 2
      // Predicated region
      $region44: #{simsiam_forward.2} parent=42 // pred_check
        %p2659 = pneg %p84
      $region45: #{simsiam_forward.2} parent=42 // pred_check_branch
        %2661 = sbr.rel (%p2659) target = $region47
      $region46: #{simsiam_forward.2} parent=42 // pred_region
        %p2662 = scmp.lt.s32.totalorder %s14, 3
        %s2663 = scalar_select %p2662, %s14, 3
        %s2664 = scalar_lea.vmem %s2, %s2663
      $region47: #{simsiam_forward.2} parent=42 // pred_fallthru
        _
    $region43: #{simsiam_forward.2} parent=5 // pred_fallthru
      _
  $region6: #{simsiam_forward.2} parent=0 // loop_footer
    %s12 = sadd.s32 1, %s8
  $region7: #{simsiam_forward.2} parent=0 // loop_footer_branch
    %7 = sbr.rel target = $region3
  $region8: #{simsiam_forward.2} parent=0 // loop_exit
    _

</llo_original>
